<compile_context>
chip_gen: v7x
topology: tpu7x:2x2x1
jax: 0.10.0
libtpu: 0.0.40
codegen_flags: <defaults>
</compile_context>

<pallas_src>
import numpy as np
import jax
import jax.numpy as jnp
from jax import lax
from jax.experimental import pallas as pl
from jax.experimental.pallas import tpu as pltpu

_VMEM_LIMIT = 32 * 1024 * 1024  # explicit scoped-VMEM limit (v5e default is only 16 MiB)


# ----------------------------------------------------------------------------
# Static bilinear x2 (align_corners=True) interpolation matrices
# ----------------------------------------------------------------------------
def upsample_matrix(in_size: int, out_size: int) -> np.ndarray:
    """A (out_size, in_size) with y = A @ x, bilinear, align_corners=True."""
    if out_size == 1:
        src = np.zeros((1,), dtype=np.float64)
    else:
        src = np.arange(out_size, dtype=np.float64) * (in_size - 1) / (out_size - 1)
    lo = np.clip(np.floor(src).astype(np.int64), 0, in_size - 1)
    hi = np.minimum(lo + 1, in_size - 1)
    frac = src - lo
    A = np.zeros((out_size, in_size), dtype=np.float32)
    A[np.arange(out_size), lo] += (1.0 - frac).astype(np.float32)
    A[np.arange(out_size), hi] += frac.astype(np.float32)
    return A


def upsample_pad_matrix(H: int, W: int, Hp: int, Wp: int) -> np.ndarray:
    """Single matrix M (Hp*Wp, H*W): flatten(F.pad(upsample2x(x))) = M @ flatten(x).

    Folds both separable interpolation matrices (via a Kronecker product) and the UNet
    F.pad offsets into one static operator, so the in-kernel upsample is one 2-D matmul
    acting on an NHWC (H*W, C) view with no in-kernel transposes.
    TODO(synk): for large spatial sizes switch to the separable (batched) formulation.
    """
    Hu, Wu = 2 * H, 2 * W
    dy, dx = Hp - Hu, Wp - Wu
    assert dy >= 0 and dx >= 0, "skip connection must be at least as large as the upsample"
    A2 = np.kron(upsample_matrix(H, Hu), upsample_matrix(W, Wu))   # (Hu*Wu, H*W)
    M = np.zeros((Hp * Wp, H * W), dtype=np.float32)
    oy, ox = dy // 2, dx // 2
    for o in range(Hu):
        r0 = (oy + o) * Wp + ox
        M[r0:r0 + Wu, :] = A2[o * Wu:(o + 1) * Wu, :]
    return M


# ----------------------------------------------------------------------------
# Fused: bilinear upsample x2 + F.pad + concat([x2, x1up]) + conv halo, emitted as NHWC
# ----------------------------------------------------------------------------
def _make_upsample_concat_kernel(H, W, C1, Hp, Wp, C2):
    def kernel(x1_ref, x2_ref, a2_ref, o_ref):
        # x1_ref: (1, H, W, C1) decoder feature (NHWC)
        # x2_ref: (1, Hp, Wp, C2) skip connection (NHWC)
        # a2_ref: (Hp*Wp, H*W)   static upsample+pad operator
        # o_ref : (1, Hp+2, Wp+2, C2+C1)  zero-haloed conv1 input
        o_ref[...] = jnp.zeros_like(o_ref)                    # halo ring (conv "same" padding)
        xf = x1_ref[0].reshape(H * W, C1)                     # NHWC flatten (channels stay minor)
        up = jnp.dot(a2_ref[...], xf,
                     preferred_element_type=jnp.float32)      # (Hp*Wp, C1)
        interior = jnp.concatenate(
            [x2_ref[0], up.reshape(Hp, Wp, C1)], axis=-1)     # torch.cat([x2, x1up], dim=C)
        o_ref[0, 1:Hp + 1, 1:Wp + 1, :] = interior
    return kernel


def upsample_concat_pad(x1_nhwc, x2_nhwc, a2):
    N, H, W, C1 = x1_nhwc.shape
    _, Hp, Wp, C2 = x2_nhwc.shape
    Ct = C1 + C2
    kern = _make_upsample_concat_kernel(H, W, C1, Hp, Wp, C2)
    return pl.pallas_call(
        kern,
        out_shape=jax.ShapeDtypeStruct((N, Hp + 2, Wp + 2, Ct), jnp.float32),
        grid=(N,),
        in_specs=[
            pl.BlockSpec((1, H, W, C1), lambda n: (n, 0, 0, 0)),
            pl.BlockSpec((1, Hp, Wp, C2), lambda n: (n, 0, 0, 0)),
            pl.BlockSpec((Hp * Wp, H * W), lambda n: (0, 0)),
        ],
        out_specs=pl.BlockSpec((1, Hp + 2, Wp + 2, Ct), lambda n: (n, 0, 0, 0)),
        compiler_params=pltpu.CompilerParams(
            dimension_semantics=("parallel",), vmem_limit_bytes=_VMEM_LIMIT),
    )(x1_nhwc, x2_nhwc, a2)


# ----------------------------------------------------------------------------
# 3x3 same-conv as a single im2col matmul, optional fused BN+ReLU prologue,
# per-grid-step partial batch statistics (sum / sum-of-squares).
# ----------------------------------------------------------------------------
def _make_conv_kernel(Hc, Wc, Ci, Co, prologue, prepadded):
    def kernel(*refs):
        if prologue:
            x_ref, w_ref, b_ref, scale_ref, shift_ref = refs[:5]
            o_ref, sum_ref, sq_ref = refs[5:8]
            scratch = refs[8:]
        else:
            x_ref, w_ref, b_ref = refs[:3]
            o_ref, sum_ref, sq_ref = refs[3:6]
            scratch = refs[6:]

        if prepadded:
            # input block already carries a zero halo: (1, Hc+2, Wc+2, Ci)
            def tap(ky, kx):
                return x_ref[0, ky:ky + Hc, kx:kx + Wc, :].reshape(Hc * Wc, Ci)
        else:
            # synthesize the 1-px halo in VMEM (no jnp.pad HBM round trip);
            # BN+ReLU prologue is applied to the interior only (halo stays exactly zero).
            pad_ref = scratch[0]
            y = x_ref[0]
            if prologue:
                y = jnp.maximum(y * scale_ref[...] + shift_ref[...], 0.0)
            pad_ref[...] = jnp.zeros_like(pad_ref)
            pad_ref[1:Hc + 1, 1:Wc + 1, :] = y

            def tap(ky, kx):
                return pad_ref[ky:ky + Hc, kx:kx + Wc, :].reshape(Hc * Wc, Ci)

        # im2col: one (Hc*Wc, 9*Ci) @ (9*Ci, Co) matmul instead of 9 K=Ci matmuls.
        patches = jnp.concatenate(
            [tap(ky, kx) for ky in range(3) for kx in range(3)], axis=1)
        out2d = jnp.dot(patches, w_ref[...],
                        preferred_element_type=jnp.float32) + b_ref[...]   # (Hc*Wc, Co)

        o_ref[0] = out2d.reshape(Hc, Wc, Co)
        # per-grid-step partial BN statistics from the 2-D result (single reduction).
        sum_ref[0] = jnp.sum(out2d, axis=0, keepdims=True)
        sq_ref[0] = jnp.sum(out2d * out2d, axis=0, keepdims=True)
    return kernel


def conv3x3_im2col(x, wmat, b, *, prepadded, scale=None, shift=None):
    # x: (N, Hc+2, Wc+2, Ci) if prepadded else (N, Hc, Wc, Ci); wmat: (9*Ci, Co); b: (Co,)
    N = x.shape[0]
    Ci = x.shape[3]
    if prepadded:
        Hc, Wc = x.shape[1] - 2, x.shape[2] - 2
    else:
        Hc, Wc = x.shape[1], x.shape[2]
    Co = wmat.shape[1]
    prologue = scale is not None

    kern = _make_conv_kernel(Hc, Wc, Ci, Co, prologue=prologue, prepadded=prepadded)

    in_specs = [
        pl.BlockSpec((1,) + tuple(x.shape[1:]), lambda n: (n, 0, 0, 0)),
        pl.BlockSpec((9 * Ci, Co), lambda n: (0, 0)),
        pl.BlockSpec((1, Co), lambda n: (0, 0)),
    ]
    inputs = [x, wmat, b.reshape(1, Co)]
    if prologue:
        in_specs += [pl.BlockSpec((1, Ci), lambda n: (0, 0)),
                     pl.BlockSpec((1, Ci), lambda n: (0, 0))]
        inputs += [scale.reshape(1, Ci), shift.reshape(1, Ci)]

    scratch = []
    if not prepadded:
        scratch.append(pltpu.VMEM((Hc + 2, Wc + 2, Ci), jnp.float32))

    conv, s, sq = pl.pallas_call(
        kern,
        out_shape=(
            jax.ShapeDtypeStruct((N, Hc, Wc, Co), jnp.float32),
            jax.ShapeDtypeStruct((N, 1, Co), jnp.float32),
            jax.ShapeDtypeStruct((N, 1, Co), jnp.float32),
        ),
        grid=(N,),
        in_specs=in_specs,
        out_specs=(
            pl.BlockSpec((1, Hc, Wc, Co), lambda n: (n, 0, 0, 0)),
            pl.BlockSpec((1, 1, Co), lambda n: (n, 0, 0)),
            pl.BlockSpec((1, 1, Co), lambda n: (n, 0, 0)),
        ),
        scratch_shapes=scratch,
        compiler_params=pltpu.CompilerParams(
            dimension_semantics=("parallel",), vmem_limit_bytes=_VMEM_LIMIT),
    )(*inputs)
    # reduce the per-grid partial sums in XLA (keeps the grid axis race-free / megacore-safe)
    return conv, jnp.sum(s, axis=0).reshape(Co), jnp.sum(sq, axis=0).reshape(Co)


def bn_affine(s, sq, gamma, beta, count, eps):
    """Fold training-mode batch statistics + BN affine into per-channel scale/shift."""
    mean = s / count
    var = jnp.maximum(sq / count - mean * mean, 0.0)   # biased variance (torch training BN)
    scale = gamma / jnp.sqrt(var + eps)
    shift = beta - mean * scale
    return scale, shift


# ----------------------------------------------------------------------------
# Final BatchNorm + ReLU on a lane-dense (N*H, W*C) 2-D view
# ----------------------------------------------------------------------------
def bn_relu_kernel(x_ref, scale_ref, shift_ref, o_ref):
    o_ref[...] = jnp.maximum(x_ref[...] * scale_ref[...] + shift_ref[...], 0.0)


def bn_relu_lane_dense(x, scale, shift):
    N, Hc, Wc, Co = x.shape
    x2d = x.reshape(N * Hc, Wc * Co)                      # widen the minor dim: Co -> Wc*Co lanes
    scale_t = jnp.tile(scale.reshape(1, Co), (1, Wc))     # pattern matches col index w*Co + c
    shift_t = jnp.tile(shift.reshape(1, Co), (1, Wc))
    y = pl.pallas_call(
        bn_relu_kernel,
        out_shape=jax.ShapeDtypeStruct((N * Hc, Wc * Co), jnp.float32),
        grid=(N,),
        in_specs=[
            pl.BlockSpec((Hc, Wc * Co), lambda n: (n, 0)),
            pl.BlockSpec((1, Wc * Co), lambda n: (0, 0)),
            pl.BlockSpec((1, Wc * Co), lambda n: (0, 0)),
        ],
        out_specs=pl.BlockSpec((Hc, Wc * Co), lambda n: (n, 0)),
        compiler_params=pltpu.CompilerParams(
            dimension_semantics=("parallel",), vmem_limit_bytes=_VMEM_LIMIT),
    )(x2d, scale_t, shift_t)
    return y.reshape(N, Hc, Wc, Co)


# ----------------------------------------------------------------------------
# UpBlock forward (bilinear=True): upsample -> pad -> concat(x2, x1) -> ConvBlock
# ----------------------------------------------------------------------------
def up_block_forward(x1, x2, params, eps=1e-5):
    # x1: (N, C1, H, W) ; x2: (N, C2, Hp, Wp) ; NCHW like PyTorch.
    if x2 is None:
        # TODO(synk): x2=None path (no skip connection) not implemented in the fused kernel.
        raise NotImplementedError("x2=None path not implemented")
    N, C1, H, W = x1.shape
    _, C2, Hp, Wp = x2.shape
    Ct = C1 + C2

    # small-input layout plumbing in XLA (channels -> minor); the big concatenated activation
    # is only ever materialized once, already padded and NHWC, by the fused kernel below.
    x1_nhwc = jnp.transpose(x1, (0, 2, 3, 1))
    x2_nhwc = jnp.transpose(x2, (0, 2, 3, 1))
    a2 = jnp.asarray(upsample_pad_matrix(H, W, Hp, Wp))

    xcat = upsample_concat_pad(x1_nhwc, x2_nhwc, a2)       # (N, Hp+2, Wp+2, Ct), zero halo

    w1 = params["w1"].reshape(9 * Ct, -1)                  # HWIO (3,3,Ci,Co) -> (9*Ci, Co)
    cmid = w1.shape[1]
    c1, s1, q1 = conv3x3_im2col(xcat, w1, params["b1"], prepadded=True)
    sc1, sh1 = bn_affine(s1, q1, params["g1"], params["bt1"], N * Hp * Wp, eps)

    w2 = params["w2"].reshape(9 * cmid, -1)
    c2, s2, q2 = conv3x3_im2col(c1, w2, params["b2"], prepadded=False, scale=sc1, shift=sh1)
    sc2, sh2 = bn_affine(s2, q2, params["g2"], params["bt2"], N * Hp * Wp, eps)

    out_nhwc = bn_relu_lane_dense(c2, sc2, sh2)
    return jnp.transpose(out_nhwc, (0, 3, 1, 2))           # back to NCHW


# ----------------------------------------------------------------------------
# Pure-JAX reference (same math) for a sanity check
# ----------------------------------------------------------------------------
def reference_forward(x1, x2, params, eps=1e-5):
    N, C1, H, W = x1.shape
    Ah = jnp.asarray(upsample_matrix(H, 2 * H))
    Aw = jnp.asarray(upsample_matrix(W, 2 * W))
    x1u = jnp.einsum("oh,nchw,pw->ncop", Ah, x1, Aw)
    dy = x2.shape[2] - x1u.shape[2]
    dx = x2.shape[3] - x1u.shape[3]
    x1u = jnp.pad(x1u, ((0, 0), (0, 0), (dy // 2, dy - dy // 2), (dx // 2, dx - dx // 2)))
    x = jnp.concatenate([x2, x1u], axis=1)
    xh = jnp.transpose(x, (0, 2, 3, 1))

    def conv(z, w, b):
        return lax.conv_general_dilated(
            z, w, (1, 1), "SAME", dimension_numbers=("NHWC", "HWIO", "NHWC")) + b

    def bn_relu(z, g, bt):
        m = z.mean(axis=(0, 1, 2))
        v = z.var(axis=(0, 1, 2))
        return jnp.maximum(g * (z - m) / jnp.sqrt(v + eps) + bt, 0.0)

    h = bn_relu(conv(xh, params["w1"], params["b1"]), params["g1"], params["bt1"])
    h = bn_relu(conv(h, params["w2"], params["b2"]), params["g2"], params["bt2"])
    return jnp.transpose(h, (0, 3, 1, 2))


if __name__ == "__main__":
    key = jax.random.PRNGKey(0)
    in_channels, out_channels = 8, 4
    mid_channels = in_channels // 2          # ConvBlock mid = in_channels // 2 (bilinear branch)
    N, H, W = 2, 8, 8
    C1 = in_channels // 2                    # decoder feature channels (x1)
    C2 = in_channels - C1                    # skip-connection channels (x2)

    k1, k2, kw1, kb1, kw2, kb2 = jax.random.split(key, 6)
    x1 = jax.random.normal(k1, (N, C1, H, W), jnp.float32)
    x2 = jax.random.normal(k2, (N, C2, 2 * H, 2 * W), jnp.float32)

    # Deterministic synthetic parameters (HWIO conv weights; BN affine = torch default init).
    params = dict(
        w1=0.1 * jax.random.normal(kw1, (3, 3, in_channels, mid_channels), jnp.float32),
        b1=0.05 * jax.random.normal(kb1, (mid_channels,), jnp.float32),
        g1=jnp.ones((mid_channels,), jnp.float32),
        bt1=jnp.zeros((mid_channels,), jnp.float32),
        w2=0.1 * jax.random.normal(kw2, (3, 3, mid_channels, out_channels), jnp.float32),
        b2=0.05 * jax.random.normal(kb2, (out_channels,), jnp.float32),
        g2=jnp.ones((out_channels,), jnp.float32),
        bt2=jnp.zeros((out_channels,), jnp.float32),
    )

    fwd = jax.jit(up_block_forward)
    out = jax.block_until_ready(fwd(x1, x2, params))
    assert out.shape == (N, out_channels, 2 * H, 2 * W), out.shape

    ref = jax.block_until_ready(reference_forward(x1, x2, params))
    np.testing.assert_allclose(np.asarray(out), np.asarray(ref), rtol=2e-3, atol=2e-3)

    print("KERNEL_OK")
</pallas_src>

<mosaic_0001>
module attributes {stable_mosaic.version = 11 : i64} {
  func.func @kernel(%arg0: i32, %arg1: memref<1x8x8x4xf32, #tpu.memory_space<vmem>>, %arg2: memref<1x16x16x4xf32, #tpu.memory_space<vmem>>, %arg3: memref<256x64xf32, #tpu.memory_space<vmem>>, %arg4: memref<1x18x18x8xf32, #tpu.memory_space<vmem>>) attributes {dimension_semantics = [#tpu.dimension_semantics<parallel>], iteration_bounds = array<i64: 2>, scalar_prefetch = 0 : i64, scratch_operands = 0 : i64, tpu.core_type = #tpu.core_type<tc>, window_params = [{transform_indices = @transform_0, window_bounds = array<i64: 1, 8, 8, 4>}, {transform_indices = @transform_1, window_bounds = array<i64: 1, 16, 16, 4>}, {pipeline_mode = #tpu.pipeline_mode<synchronous>, transform_indices = @transform_2, window_bounds = array<i64: 256, 64>}, {transform_indices = @transform_3, window_bounds = array<i64: 1, 18, 18, 8>}]} {
    %cst = arith.constant 0.000000e+00 : f32
    %0 = vector.broadcast %cst : f32 to vector<1x18x18x8xf32>
    %c0 = arith.constant 0 : index
    %c0_0 = arith.constant 0 : index
    %c0_1 = arith.constant 0 : index
    %c0_2 = arith.constant 0 : index
    %1 = vector.load %arg4[%c0, %c0_0, %c0_1, %c0_2] : memref<1x18x18x8xf32, #tpu.memory_space<vmem>>, vector<1x18x18x8xf32>
    tpu.vector_store %arg4[%c0, %c0_0, %c0_1, %c0_2], %0 {strides = array<i32>} : memref<1x18x18x8xf32, #tpu.memory_space<vmem>>, vector<1x18x18x8xf32>,
    %c0_3 = arith.constant 0 : index
    %c0_4 = arith.constant 0 : index
    %c0_5 = arith.constant 0 : index
    %c0_6 = arith.constant 0 : index
    %2 = vector.load %arg1[%c0_3, %c0_4, %c0_5, %c0_6] : memref<1x8x8x4xf32, #tpu.memory_space<vmem>>, vector<1x8x8x4xf32>
    %3 = vector.shape_cast %2 : vector<1x8x8x4xf32> to vector<8x8x4xf32>
    %4 = vector.shape_cast %3 : vector<8x8x4xf32> to vector<64x4xf32>
    %c0_7 = arith.constant 0 : index
    %c0_8 = arith.constant 0 : index
    %5 = vector.load %arg3[%c0_7, %c0_8] : memref<256x64xf32, #tpu.memory_space<vmem>>, vector<256x64xf32>
    %cst_9 = arith.constant dense<0.000000e+00> : vector<256x4xf32>
    %6 = tpu.matmul %5, %4, %cst_9 {dimension_numbers = #tpu.dot_dimension_numbers<[1], [0], [0], [1], [0, 0, 1, 1], [], []>} : vector<256x64xf32>, vector<64x4xf32>, vector<256x4xf32> -> vector<256x4xf32>
    %c0_10 = arith.constant 0 : index
    %c0_11 = arith.constant 0 : index
    %c0_12 = arith.constant 0 : index
    %c0_13 = arith.constant 0 : index
    %7 = vector.load %arg2[%c0_10, %c0_11, %c0_12, %c0_13] : memref<1x16x16x4xf32, #tpu.memory_space<vmem>>, vector<1x16x16x4xf32>
    %8 = vector.shape_cast %7 : vector<1x16x16x4xf32> to vector<16x16x4xf32>
    %9 = vector.shape_cast %6 : vector<256x4xf32> to vector<16x16x4xf32>
    %10 = tpu.concatenate %8, %9 in 2 : vector<16x16x4xf32>, vector<16x16x4xf32> -> vector<16x16x8xf32>
    %c0_14 = arith.constant 0 : index
    %c1 = arith.constant 1 : index
    %c1_15 = arith.constant 1 : index
    %c0_16 = arith.constant 0 : index
    %11 = vector.load %arg4[%c0_14, %c1, %c1_15, %c0_16] : memref<1x18x18x8xf32, #tpu.memory_space<vmem>>, vector<1x16x16x8xf32>
    %12 = vector.shape_cast %11 : vector<1x16x16x8xf32> to vector<16x16x8xf32>
    %13 = vector.shape_cast %10 : vector<16x16x8xf32> to vector<1x16x16x8xf32>
    tpu.vector_store %arg4[%c0_14, %c1, %c1_15, %c0_16], %13 {strides = array<i32>} : memref<1x18x18x8xf32, #tpu.memory_space<vmem>>, vector<1x16x16x8xf32>,
    return
  }
  func.func @transform_0(%arg0: i32) -> (i32, i32, i32, i32) {
    %c0_i32 = arith.constant 0 : i32
    %c0_i32_0 = arith.constant 0 : i32
    %c0_i32_1 = arith.constant 0 : i32
    %c0_i32_2 = arith.constant 0 : i32
    return %arg0, %c0_i32, %c0_i32_0, %c0_i32_1 : i32, i32, i32, i32
  }
  func.func @transform_1(%arg0: i32) -> (i32, i32, i32, i32) {
    %c0_i32 = arith.constant 0 : i32
    %c0_i32_0 = arith.constant 0 : i32
    %c0_i32_1 = arith.constant 0 : i32
    %c0_i32_2 = arith.constant 0 : i32
    return %arg0, %c0_i32, %c0_i32_0, %c0_i32_1 : i32, i32, i32, i32
  }
  func.func @transform_2(%arg0: i32) -> (i32, i32) {
    %c0_i32 = arith.constant 0 : i32
    %c0_i32_0 = arith.constant 0 : i32
    %c0_i32_1 = arith.constant 0 : i32
    return %c0_i32, %c0_i32_0 : i32, i32
  }
  func.func @transform_3(%arg0: i32) -> (i32, i32, i32, i32) {
    %c0_i32 = arith.constant 0 : i32
    %c0_i32_0 = arith.constant 0 : i32
    %c0_i32_1 = arith.constant 0 : i32
    %c0_i32_2 = arith.constant 0 : i32
    return %arg0, %c0_i32, %c0_i32_0, %c0_i32_1 : i32, i32, i32, i32
  }
}

module attributes {stable_mosaic.version = 11 : i64} {
  func.func @kernel(%arg0: i32, %arg1: memref<1x18x18x8xf32, #tpu.memory_space<vmem>>, %arg2: memref<72x4xf32, #tpu.memory_space<vmem>>, %arg3: memref<1x4xf32, #tpu.memory_space<vmem>>, %arg4: memref<1x16x16x4xf32, #tpu.memory_space<vmem>>, %arg5: memref<1x1x4xf32, #tpu.memory_space<vmem>>, %arg6: memref<1x1x4xf32, #tpu.memory_space<vmem>>) attributes {dimension_semantics = [#tpu.dimension_semantics<parallel>], iteration_bounds = array<i64: 2>, scalar_prefetch = 0 : i64, scratch_operands = 0 : i64, tpu.core_type = #tpu.core_type<tc>, window_params = [{transform_indices = @transform_0, window_bounds = array<i64: 1, 18, 18, 8>}, {pipeline_mode = #tpu.pipeline_mode<synchronous>, transform_indices = @transform_1, window_bounds = array<i64: 72, 4>}, {pipeline_mode = #tpu.pipeline_mode<synchronous>, transform_indices = @transform_2, window_bounds = array<i64: 1, 4>}, {transform_indices = @transform_3, window_bounds = array<i64: 1, 16, 16, 4>}, {transform_indices = @transform_4, window_bounds = array<i64: 1, 1, 4>}, {transform_indices = @transform_5, window_bounds = array<i64: 1, 1, 4>}]} {
    %c0 = arith.constant 0 : index
    %c0_0 = arith.constant 0 : index
    %c0_1 = arith.constant 0 : index
    %c0_2 = arith.constant 0 : index
    %0 = vector.load %arg1[%c0, %c0_0, %c0_1, %c0_2] : memref<1x18x18x8xf32, #tpu.memory_space<vmem>>, vector<1x16x16x8xf32>
    %1 = vector.shape_cast %0 : vector<1x16x16x8xf32> to vector<16x16x8xf32>
    %2 = vector.shape_cast %1 : vector<16x16x8xf32> to vector<256x8xf32>
    %c0_3 = arith.constant 0 : index
    %c0_4 = arith.constant 0 : index
    %c1 = arith.constant 1 : index
    %c0_5 = arith.constant 0 : index
    %3 = vector.load %arg1[%c0_3, %c0_4, %c1, %c0_5] : memref<1x18x18x8xf32, #tpu.memory_space<vmem>>, vector<1x16x16x8xf32>
    %4 = vector.shape_cast %3 : vector<1x16x16x8xf32> to vector<16x16x8xf32>
    %5 = vector.shape_cast %4 : vector<16x16x8xf32> to vector<256x8xf32>
    %c0_6 = arith.constant 0 : index
    %c0_7 = arith.constant 0 : index
    %c2 = arith.constant 2 : index
    %c0_8 = arith.constant 0 : index
    %6 = vector.load %arg1[%c0_6, %c0_7, %c2, %c0_8] : memref<1x18x18x8xf32, #tpu.memory_space<vmem>>, vector<1x16x16x8xf32>
    %7 = vector.shape_cast %6 : vector<1x16x16x8xf32> to vector<16x16x8xf32>
    %8 = vector.shape_cast %7 : vector<16x16x8xf32> to vector<256x8xf32>
    %c0_9 = arith.constant 0 : index
    %c1_10 = arith.constant 1 : index
    %c0_11 = arith.constant 0 : index
    %c0_12 = arith.constant 0 : index
    %9 = vector.load %arg1[%c0_9, %c1_10, %c0_11, %c0_12] : memref<1x18x18x8xf32, #tpu.memory_space<vmem>>, vector<1x16x16x8xf32>
    %10 = vector.shape_cast %9 : vector<1x16x16x8xf32> to vector<16x16x8xf32>
    %11 = vector.shape_cast %10 : vector<16x16x8xf32> to vector<256x8xf32>
    %c0_13 = arith.constant 0 : index
    %c1_14 = arith.constant 1 : index
    %c1_15 = arith.constant 1 : index
    %c0_16 = arith.constant 0 : index
    %12 = vector.load %arg1[%c0_13, %c1_14, %c1_15, %c0_16] : memref<1x18x18x8xf32, #tpu.memory_space<vmem>>, vector<1x16x16x8xf32>
    %13 = vector.shape_cast %12 : vector<1x16x16x8xf32> to vector<16x16x8xf32>
    %14 = vector.shape_cast %13 : vector<16x16x8xf32> to vector<256x8xf32>
    %c0_17 = arith.constant 0 : index
    %c1_18 = arith.constant 1 : index
    %c2_19 = arith.constant 2 : index
    %c0_20 = arith.constant 0 : index
    %15 = vector.load %arg1[%c0_17, %c1_18, %c2_19, %c0_20] : memref<1x18x18x8xf32, #tpu.memory_space<vmem>>, vector<1x16x16x8xf32>
    %16 = vector.shape_cast %15 : vector<1x16x16x8xf32> to vector<16x16x8xf32>
    %17 = vector.shape_cast %16 : vector<16x16x8xf32> to vector<256x8xf32>
    %c0_21 = arith.constant 0 : index
    %c2_22 = arith.constant 2 : index
    %c0_23 = arith.constant 0 : index
    %c0_24 = arith.constant 0 : index
    %18 = vector.load %arg1[%c0_21, %c2_22, %c0_23, %c0_24] : memref<1x18x18x8xf32, #tpu.memory_space<vmem>>, vector<1x16x16x8xf32>
    %19 = vector.shape_cast %18 : vector<1x16x16x8xf32> to vector<16x16x8xf32>
    %20 = vector.shape_cast %19 : vector<16x16x8xf32> to vector<256x8xf32>
    %c0_25 = arith.constant 0 : index
    %c2_26 = arith.constant 2 : index
    %c1_27 = arith.constant 1 : index
    %c0_28 = arith.constant 0 : index
    %21 = vector.load %arg1[%c0_25, %c2_26, %c1_27, %c0_28] : memref<1x18x18x8xf32, #tpu.memory_space<vmem>>, vector<1x16x16x8xf32>
    %22 = vector.shape_cast %21 : vector<1x16x16x8xf32> to vector<16x16x8xf32>
    %23 = vector.shape_cast %22 : vector<16x16x8xf32> to vector<256x8xf32>
    %c0_29 = arith.constant 0 : index
    %c2_30 = arith.constant 2 : index
    %c2_31 = arith.constant 2 : index
    %c0_32 = arith.constant 0 : index
    %24 = vector.load %arg1[%c0_29, %c2_30, %c2_31, %c0_32] : memref<1x18x18x8xf32, #tpu.memory_space<vmem>>, vector<1x16x16x8xf32>
    %25 = vector.shape_cast %24 : vector<1x16x16x8xf32> to vector<16x16x8xf32>
    %26 = vector.shape_cast %25 : vector<16x16x8xf32> to vector<256x8xf32>
    %27 = tpu.concatenate %2, %5, %8, %11, %14, %17, %20, %23, %26 in 1 : vector<256x8xf32>, vector<256x8xf32>, vector<256x8xf32>, vector<256x8xf32>, vector<256x8xf32>, vector<256x8xf32>, vector<256x8xf32>, vector<256x8xf32>, vector<256x8xf32> -> vector<256x72xf32>
    %c0_33 = arith.constant 0 : index
    %c0_34 = arith.constant 0 : index
    %28 = vector.load %arg2[%c0_33, %c0_34] : memref<72x4xf32, #tpu.memory_space<vmem>>, vector<72x4xf32>
    %cst = arith.constant dense<0.000000e+00> : vector<256x4xf32>
    %29 = tpu.matmul %27, %28, %cst {dimension_numbers = #tpu.dot_dimension_numbers<[1], [0], [0], [1], [0, 0, 1, 1], [], []>} : vector<256x72xf32>, vector<72x4xf32>, vector<256x4xf32> -> vector<256x4xf32>
    %c0_35 = arith.constant 0 : index
    %c0_36 = arith.constant 0 : index
    %30 = vector.load %arg3[%c0_35, %c0_36] : memref<1x4xf32, #tpu.memory_space<vmem>>, vector<1x4xf32>
    %31 = vector.broadcast %30 : vector<1x4xf32> to vector<256x4xf32>
    %32 = arith.addf %29, %31 : vector<256x4xf32>
    %33 = vector.shape_cast %32 : vector<256x4xf32> to vector<16x16x4xf32>
    %c0_37 = arith.constant 0 : index
    %c0_38 = arith.constant 0 : index
    %c0_39 = arith.constant 0 : index
    %c0_40 = arith.constant 0 : index
    %34 = vector.load %arg4[%c0_37, %c0_38, %c0_39, %c0_40] : memref<1x16x16x4xf32, #tpu.memory_space<vmem>>, vector<1x16x16x4xf32>
    %35 = vector.shape_cast %34 : vector<1x16x16x4xf32> to vector<16x16x4xf32>
    %36 = vector.shape_cast %33 : vector<16x16x4xf32> to vector<1x16x16x4xf32>
    tpu.vector_store %arg4[%c0_37, %c0_38, %c0_39, %c0_40], %36 {strides = array<i32>} : memref<1x16x16x4xf32, #tpu.memory_space<vmem>>, vector<1x16x16x4xf32>,
    %cst_41 = arith.constant dense<0.000000e+00> : vector<4xf32>
    %37 = vector.multi_reduction <add>, %32, %cst_41 [0] : vector<256x4xf32> to vector<4xf32>
    %38 = vector.shape_cast %37 : vector<4xf32> to vector<1x4xf32>
    %c0_42 = arith.constant 0 : index
    %c0_43 = arith.constant 0 : index
    %c0_44 = arith.constant 0 : index
    %39 = vector.load %arg5[%c0_42, %c0_43, %c0_44] : memref<1x1x4xf32, #tpu.memory_space<vmem>>, vector<1x1x4xf32>
    %40 = vector.shape_cast %39 : vector<1x1x4xf32> to vector<1x4xf32>
    %41 = vector.shape_cast %38 : vector<1x4xf32> to vector<1x1x4xf32>
    tpu.vector_store %arg5[%c0_42, %c0_43, %c0_44], %41 {strides = array<i32>} : memref<1x1x4xf32, #tpu.memory_space<vmem>>, vector<1x1x4xf32>,
    %42 = arith.mulf %32, %32 : vector<256x4xf32>
    %cst_45 = arith.constant dense<0.000000e+00> : vector<4xf32>
    %43 = vector.multi_reduction <add>, %42, %cst_45 [0] : vector<256x4xf32> to vector<4xf32>
    %44 = vector.shape_cast %43 : vector<4xf32> to vector<1x4xf32>
    %c0_46 = arith.constant 0 : index
    %c0_47 = arith.constant 0 : index
    %c0_48 = arith.constant 0 : index
    %45 = vector.load %arg6[%c0_46, %c0_47, %c0_48] : memref<1x1x4xf32, #tpu.memory_space<vmem>>, vector<1x1x4xf32>
    %46 = vector.shape_cast %45 : vector<1x1x4xf32> to vector<1x4xf32>
    %47 = vector.shape_cast %44 : vector<1x4xf32> to vector<1x1x4xf32>
    tpu.vector_store %arg6[%c0_46, %c0_47, %c0_48], %47 {strides = array<i32>} : memref<1x1x4xf32, #tpu.memory_space<vmem>>, vector<1x1x4xf32>,
    return
  }
  func.func @transform_0(%arg0: i32) -> (i32, i32, i32, i32) {
    %c0_i32 = arith.constant 0 : i32
    %c0_i32_0 = arith.constant 0 : i32
    %c0_i32_1 = arith.constant 0 : i32
    %c0_i32_2 = arith.constant 0 : i32
    return %arg0, %c0_i32, %c0_i32_0, %c0_i32_1 : i32, i32, i32, i32
  }
  func.func @transform_1(%arg0: i32) -> (i32, i32) {
    %c0_i32 = arith.constant 0 : i32
    %c0_i32_0 = arith.constant 0 : i32
    %c0_i32_1 = arith.constant 0 : i32
    return %c0_i32, %c0_i32_0 : i32, i32
  }
  func.func @transform_2(%arg0: i32) -> (i32, i32) {
    %c0_i32 = arith.constant 0 : i32
    %c0_i32_0 = arith.constant 0 : i32
    %c0_i32_1 = arith.constant 0 : i32
    return %c0_i32, %c0_i32_0 : i32, i32
  }
  func.func @transform_3(%arg0: i32) -> (i32, i32, i32, i32) {
    %c0_i32 = arith.constant 0 : i32
    %c0_i32_0 = arith.constant 0 : i32
    %c0_i32_1 = arith.constant 0 : i32
    %c0_i32_2 = arith.constant 0 : i32
    return %arg0, %c0_i32, %c0_i32_0, %c0_i32_1 : i32, i32, i32, i32
  }
  func.func @transform_4(%arg0: i32) -> (i32, i32, i32) {
    %c0_i32 = arith.constant 0 : i32
    %c0_i32_0 = arith.constant 0 : i32
    %c0_i32_1 = arith.constant 0 : i32
    return %arg0, %c0_i32, %c0_i32_0 : i32, i32, i32
  }
  func.func @transform_5(%arg0: i32) -> (i32, i32, i32) {
    %c0_i32 = arith.constant 0 : i32
    %c0_i32_0 = arith.constant 0 : i32
    %c0_i32_1 = arith.constant 0 : i32
    return %arg0, %c0_i32, %c0_i32_0 : i32, i32, i32
  }
}

module attributes {stable_mosaic.version = 11 : i64} {
  func.func @kernel(%arg0: i32, %arg1: memref<1x16x16x4xf32, #tpu.memory_space<vmem>>, %arg2: memref<36x4xf32, #tpu.memory_space<vmem>>, %arg3: memref<1x4xf32, #tpu.memory_space<vmem>>, %arg4: memref<1x4xf32, #tpu.memory_space<vmem>>, %arg5: memref<1x4xf32, #tpu.memory_space<vmem>>, %arg6: memref<1x16x16x4xf32, #tpu.memory_space<vmem>>, %arg7: memref<1x1x4xf32, #tpu.memory_space<vmem>>, %arg8: memref<1x1x4xf32, #tpu.memory_space<vmem>>, %arg9: memref<18x18x4xf32, #tpu.memory_space<vmem>>) attributes {dimension_semantics = [#tpu.dimension_semantics<parallel>], iteration_bounds = array<i64: 2>, scalar_prefetch = 0 : i64, scratch_operands = 1 : i64, tpu.core_type = #tpu.core_type<tc>, window_params = [{transform_indices = @transform_0, window_bounds = array<i64: 1, 16, 16, 4>}, {pipeline_mode = #tpu.pipeline_mode<synchronous>, transform_indices = @transform_1, window_bounds = array<i64: 36, 4>}, {pipeline_mode = #tpu.pipeline_mode<synchronous>, transform_indices = @transform_2, window_bounds = array<i64: 1, 4>}, {pipeline_mode = #tpu.pipeline_mode<synchronous>, transform_indices = @transform_3, window_bounds = array<i64: 1, 4>}, {pipeline_mode = #tpu.pipeline_mode<synchronous>, transform_indices = @transform_4, window_bounds = array<i64: 1, 4>}, {transform_indices = @transform_5, window_bounds = array<i64: 1, 16, 16, 4>}, {transform_indices = @transform_6, window_bounds = array<i64: 1, 1, 4>}, {transform_indices = @transform_7, window_bounds = array<i64: 1, 1, 4>}]} {
    %c0 = arith.constant 0 : index
    %c0_0 = arith.constant 0 : index
    %c0_1 = arith.constant 0 : index
    %c0_2 = arith.constant 0 : index
    %0 = vector.load %arg1[%c0, %c0_0, %c0_1, %c0_2] : memref<1x16x16x4xf32, #tpu.memory_space<vmem>>, vector<1x16x16x4xf32>
    %1 = vector.shape_cast %0 : vector<1x16x16x4xf32> to vector<16x16x4xf32>
    %c0_3 = arith.constant 0 : index
    %c0_4 = arith.constant 0 : index
    %2 = vector.load %arg4[%c0_3, %c0_4] : memref<1x4xf32, #tpu.memory_space<vmem>>, vector<1x4xf32>
    %3 = vector.shape_cast %2 : vector<1x4xf32> to vector<1x1x4xf32>
    %4 = vector.broadcast %3 : vector<1x1x4xf32> to vector<16x16x4xf32>
    %5 = arith.mulf %1, %4 : vector<16x16x4xf32>
    %c0_5 = arith.constant 0 : index
    %c0_6 = arith.constant 0 : index
    %6 = vector.load %arg5[%c0_5, %c0_6] : memref<1x4xf32, #tpu.memory_space<vmem>>, vector<1x4xf32>
    %7 = vector.shape_cast %6 : vector<1x4xf32> to vector<1x1x4xf32>
    %8 = vector.broadcast %7 : vector<1x1x4xf32> to vector<16x16x4xf32>
    %9 = arith.addf %5, %8 : vector<16x16x4xf32>
    %cst = arith.constant 0.000000e+00 : f32
    %10 = vector.broadcast %cst : f32 to vector<16x16x4xf32>
    %11 = arith.maximumf %9, %10 : vector<16x16x4xf32>
    %cst_7 = arith.constant 0.000000e+00 : f32
    %12 = vector.broadcast %cst_7 : f32 to vector<18x18x4xf32>
    %c0_8 = arith.constant 0 : index
    %c0_9 = arith.constant 0 : index
    %c0_10 = arith.constant 0 : index
    %13 = vector.load %arg9[%c0_8, %c0_9, %c0_10] : memref<18x18x4xf32, #tpu.memory_space<vmem>>, vector<18x18x4xf32>
    tpu.vector_store %arg9[%c0_8, %c0_9, %c0_10], %12 {strides = array<i32>} : memref<18x18x4xf32, #tpu.memory_space<vmem>>, vector<18x18x4xf32>,
    %c1 = arith.constant 1 : index
    %c1_11 = arith.constant 1 : index
    %c0_12 = arith.constant 0 : index
    %14 = vector.load %arg9[%c1, %c1_11, %c0_12] : memref<18x18x4xf32, #tpu.memory_space<vmem>>, vector<16x16x4xf32>
    tpu.vector_store %arg9[%c1, %c1_11, %c0_12], %11 {strides = array<i32>} : memref<18x18x4xf32, #tpu.memory_space<vmem>>, vector<16x16x4xf32>,
    %c0_13 = arith.constant 0 : index
    %c0_14 = arith.constant 0 : index
    %c0_15 = arith.constant 0 : index
    %15 = vector.load %arg9[%c0_13, %c0_14, %c0_15] : memref<18x18x4xf32, #tpu.memory_space<vmem>>, vector<16x16x4xf32>
    %16 = vector.shape_cast %15 : vector<16x16x4xf32> to vector<256x4xf32>
    %c0_16 = arith.constant 0 : index
    %c1_17 = arith.constant 1 : index
    %c0_18 = arith.constant 0 : index
    %17 = vector.load %arg9[%c0_16, %c1_17, %c0_18] : memref<18x18x4xf32, #tpu.memory_space<vmem>>, vector<16x16x4xf32>
    %18 = vector.shape_cast %17 : vector<16x16x4xf32> to vector<256x4xf32>
    %c0_19 = arith.constant 0 : index
    %c2 = arith.constant 2 : index
    %c0_20 = arith.constant 0 : index
    %19 = vector.load %arg9[%c0_19, %c2, %c0_20] : memref<18x18x4xf32, #tpu.memory_space<vmem>>, vector<16x16x4xf32>
    %20 = vector.shape_cast %19 : vector<16x16x4xf32> to vector<256x4xf32>
    %c1_21 = arith.constant 1 : index
    %c0_22 = arith.constant 0 : index
    %c0_23 = arith.constant 0 : index
    %21 = vector.load %arg9[%c1_21, %c0_22, %c0_23] : memref<18x18x4xf32, #tpu.memory_space<vmem>>, vector<16x16x4xf32>
    %22 = vector.shape_cast %21 : vector<16x16x4xf32> to vector<256x4xf32>
    %c1_24 = arith.constant 1 : index
    %c1_25 = arith.constant 1 : index
    %c0_26 = arith.constant 0 : index
    %23 = vector.load %arg9[%c1_24, %c1_25, %c0_26] : memref<18x18x4xf32, #tpu.memory_space<vmem>>, vector<16x16x4xf32>
    %24 = vector.shape_cast %23 : vector<16x16x4xf32> to vector<256x4xf32>
    %c1_27 = arith.constant 1 : index
    %c2_28 = arith.constant 2 : index
    %c0_29 = arith.constant 0 : index
    %25 = vector.load %arg9[%c1_27, %c2_28, %c0_29] : memref<18x18x4xf32, #tpu.memory_space<vmem>>, vector<16x16x4xf32>
    %26 = vector.shape_cast %25 : vector<16x16x4xf32> to vector<256x4xf32>
    %c2_30 = arith.constant 2 : index
    %c0_31 = arith.constant 0 : index
    %c0_32 = arith.constant 0 : index
    %27 = vector.load %arg9[%c2_30, %c0_31, %c0_32] : memref<18x18x4xf32, #tpu.memory_space<vmem>>, vector<16x16x4xf32>
    %28 = vector.shape_cast %27 : vector<16x16x4xf32> to vector<256x4xf32>
    %c2_33 = arith.constant 2 : index
    %c1_34 = arith.constant 1 : index
    %c0_35 = arith.constant 0 : index
    %29 = vector.load %arg9[%c2_33, %c1_34, %c0_35] : memref<18x18x4xf32, #tpu.memory_space<vmem>>, vector<16x16x4xf32>
    %30 = vector.shape_cast %29 : vector<16x16x4xf32> to vector<256x4xf32>
    %c2_36 = arith.constant 2 : index
    %c2_37 = arith.constant 2 : index
    %c0_38 = arith.constant 0 : index
    %31 = vector.load %arg9[%c2_36, %c2_37, %c0_38] : memref<18x18x4xf32, #tpu.memory_space<vmem>>, vector<16x16x4xf32>
    %32 = vector.shape_cast %31 : vector<16x16x4xf32> to vector<256x4xf32>
    %33 = tpu.concatenate %16, %18, %20, %22, %24, %26, %28, %30, %32 in 1 : vector<256x4xf32>, vector<256x4xf32>, vector<256x4xf32>, vector<256x4xf32>, vector<256x4xf32>, vector<256x4xf32>, vector<256x4xf32>, vector<256x4xf32>, vector<256x4xf32> -> vector<256x36xf32>
    %c0_39 = arith.constant 0 : index
    %c0_40 = arith.constant 0 : index
    %34 = vector.load %arg2[%c0_39, %c0_40] : memref<36x4xf32, #tpu.memory_space<vmem>>, vector<36x4xf32>
    %cst_41 = arith.constant dense<0.000000e+00> : vector<256x4xf32>
    %35 = tpu.matmul %33, %34, %cst_41 {dimension_numbers = #tpu.dot_dimension_numbers<[1], [0], [0], [1], [0, 0, 1, 1], [], []>} : vector<256x36xf32>, vector<36x4xf32>, vector<256x4xf32> -> vector<256x4xf32>
    %c0_42 = arith.constant 0 : index
    %c0_43 = arith.constant 0 : index
    %36 = vector.load %arg3[%c0_42, %c0_43] : memref<1x4xf32, #tpu.memory_space<vmem>>, vector<1x4xf32>
    %37 = vector.broadcast %36 : vector<1x4xf32> to vector<256x4xf32>
    %38 = arith.addf %35, %37 : vector<256x4xf32>
    %39 = vector.shape_cast %38 : vector<256x4xf32> to vector<16x16x4xf32>
    %c0_44 = arith.constant 0 : index
    %c0_45 = arith.constant 0 : index
    %c0_46 = arith.constant 0 : index
    %c0_47 = arith.constant 0 : index
    %40 = vector.load %arg6[%c0_44, %c0_45, %c0_46, %c0_47] : memref<1x16x16x4xf32, #tpu.memory_space<vmem>>, vector<1x16x16x4xf32>
    %41 = vector.shape_cast %40 : vector<1x16x16x4xf32> to vector<16x16x4xf32>
    %42 = vector.shape_cast %39 : vector<16x16x4xf32> to vector<1x16x16x4xf32>
    tpu.vector_store %arg6[%c0_44, %c0_45, %c0_46, %c0_47], %42 {strides = array<i32>} : memref<1x16x16x4xf32, #tpu.memory_space<vmem>>, vector<1x16x16x4xf32>,
    %cst_48 = arith.constant dense<0.000000e+00> : vector<4xf32>
    %43 = vector.multi_reduction <add>, %38, %cst_48 [0] : vector<256x4xf32> to vector<4xf32>
    %44 = vector.shape_cast %43 : vector<4xf32> to vector<1x4xf32>
    %c0_49 = arith.constant 0 : index
    %c0_50 = arith.constant 0 : index
    %c0_51 = arith.constant 0 : index
    %45 = vector.load %arg7[%c0_49, %c0_50, %c0_51] : memref<1x1x4xf32, #tpu.memory_space<vmem>>, vector<1x1x4xf32>
    %46 = vector.shape_cast %45 : vector<1x1x4xf32> to vector<1x4xf32>
    %47 = vector.shape_cast %44 : vector<1x4xf32> to vector<1x1x4xf32>
    tpu.vector_store %arg7[%c0_49, %c0_50, %c0_51], %47 {strides = array<i32>} : memref<1x1x4xf32, #tpu.memory_space<vmem>>, vector<1x1x4xf32>,
    %48 = arith.mulf %38, %38 : vector<256x4xf32>
    %cst_52 = arith.constant dense<0.000000e+00> : vector<4xf32>
    %49 = vector.multi_reduction <add>, %48, %cst_52 [0] : vector<256x4xf32> to vector<4xf32>
    %50 = vector.shape_cast %49 : vector<4xf32> to vector<1x4xf32>
    %c0_53 = arith.constant 0 : index
    %c0_54 = arith.constant 0 : index
    %c0_55 = arith.constant 0 : index
    %51 = vector.load %arg8[%c0_53, %c0_54, %c0_55] : memref<1x1x4xf32, #tpu.memory_space<vmem>>, vector<1x1x4xf32>
    %52 = vector.shape_cast %51 : vector<1x1x4xf32> to vector<1x4xf32>
    %53 = vector.shape_cast %50 : vector<1x4xf32> to vector<1x1x4xf32>
    tpu.vector_store %arg8[%c0_53, %c0_54, %c0_55], %53 {strides = array<i32>} : memref<1x1x4xf32, #tpu.memory_space<vmem>>, vector<1x1x4xf32>,
    return
  }
  func.func @transform_0(%arg0: i32) -> (i32, i32, i32, i32) {
    %c0_i32 = arith.constant 0 : i32
    %c0_i32_0 = arith.constant 0 : i32
    %c0_i32_1 = arith.constant 0 : i32
    %c0_i32_2 = arith.constant 0 : i32
    return %arg0, %c0_i32, %c0_i32_0, %c0_i32_1 : i32, i32, i32, i32
  }
  func.func @transform_1(%arg0: i32) -> (i32, i32) {
    %c0_i32 = arith.constant 0 : i32
    %c0_i32_0 = arith.constant 0 : i32
    %c0_i32_1 = arith.constant 0 : i32
    return %c0_i32, %c0_i32_0 : i32, i32
  }
  func.func @transform_2(%arg0: i32) -> (i32, i32) {
    %c0_i32 = arith.constant 0 : i32
    %c0_i32_0 = arith.constant 0 : i32
    %c0_i32_1 = arith.constant 0 : i32
    return %c0_i32, %c0_i32_0 : i32, i32
  }
  func.func @transform_3(%arg0: i32) -> (i32, i32) {
    %c0_i32 = arith.constant 0 : i32
    %c0_i32_0 = arith.constant 0 : i32
    %c0_i32_1 = arith.constant 0 : i32
    return %c0_i32, %c0_i32_0 : i32, i32
  }
  func.func @transform_4(%arg0: i32) -> (i32, i32) {
    %c0_i32 = arith.constant 0 : i32
    %c0_i32_0 = arith.constant 0 : i32
    %c0_i32_1 = arith.constant 0 : i32
    return %c0_i32, %c0_i32_0 : i32, i32
  }
  func.func @transform_5(%arg0: i32) -> (i32, i32, i32, i32) {
    %c0_i32 = arith.constant 0 : i32
    %c0_i32_0 = arith.constant 0 : i32
    %c0_i32_1 = arith.constant 0 : i32
    %c0_i32_2 = arith.constant 0 : i32
    return %arg0, %c0_i32, %c0_i32_0, %c0_i32_1 : i32, i32, i32, i32
  }
  func.func @transform_6(%arg0: i32) -> (i32, i32, i32) {
    %c0_i32 = arith.constant 0 : i32
    %c0_i32_0 = arith.constant 0 : i32
    %c0_i32_1 = arith.constant 0 : i32
    return %arg0, %c0_i32, %c0_i32_0 : i32, i32, i32
  }
  func.func @transform_7(%arg0: i32) -> (i32, i32, i32) {
    %c0_i32 = arith.constant 0 : i32
    %c0_i32_0 = arith.constant 0 : i32
    %c0_i32_1 = arith.constant 0 : i32
    return %arg0, %c0_i32, %c0_i32_0 : i32, i32, i32
  }
}

module attributes {stable_mosaic.version = 11 : i64} {
  func.func @bn_relu_kernel(%arg0: i32, %arg1: memref<16x64xf32, #tpu.memory_space<vmem>>, %arg2: memref<1x64xf32, #tpu.memory_space<vmem>>, %arg3: memref<1x64xf32, #tpu.memory_space<vmem>>, %arg4: memref<16x64xf32, #tpu.memory_space<vmem>>) attributes {dimension_semantics = [#tpu.dimension_semantics<parallel>], iteration_bounds = array<i64: 2>, scalar_prefetch = 0 : i64, scratch_operands = 0 : i64, tpu.core_type = #tpu.core_type<tc>, window_params = [{transform_indices = @transform_0, window_bounds = array<i64: 16, 64>}, {pipeline_mode = #tpu.pipeline_mode<synchronous>, transform_indices = @transform_1, window_bounds = array<i64: 1, 64>}, {pipeline_mode = #tpu.pipeline_mode<synchronous>, transform_indices = @transform_2, window_bounds = array<i64: 1, 64>}, {transform_indices = @transform_3, window_bounds = array<i64: 16, 64>}]} {
    %c0 = arith.constant 0 : index
    %c0_0 = arith.constant 0 : index
    %0 = vector.load %arg1[%c0, %c0_0] : memref<16x64xf32, #tpu.memory_space<vmem>>, vector<16x64xf32>
    %c0_1 = arith.constant 0 : index
    %c0_2 = arith.constant 0 : index
    %1 = vector.load %arg2[%c0_1, %c0_2] : memref<1x64xf32, #tpu.memory_space<vmem>>, vector<1x64xf32>
    %2 = vector.broadcast %1 : vector<1x64xf32> to vector<16x64xf32>
    %3 = arith.mulf %0, %2 : vector<16x64xf32>
    %c0_3 = arith.constant 0 : index
    %c0_4 = arith.constant 0 : index
    %4 = vector.load %arg3[%c0_3, %c0_4] : memref<1x64xf32, #tpu.memory_space<vmem>>, vector<1x64xf32>
    %5 = vector.broadcast %4 : vector<1x64xf32> to vector<16x64xf32>
    %6 = arith.addf %3, %5 : vector<16x64xf32>
    %cst = arith.constant 0.000000e+00 : f32
    %7 = vector.broadcast %cst : f32 to vector<16x64xf32>
    %8 = arith.maximumf %6, %7 : vector<16x64xf32>
    %c0_5 = arith.constant 0 : index
    %c0_6 = arith.constant 0 : index
    %9 = vector.load %arg4[%c0_5, %c0_6] : memref<16x64xf32, #tpu.memory_space<vmem>>, vector<16x64xf32>
    tpu.vector_store %arg4[%c0_5, %c0_6], %8 {strides = array<i32>} : memref<16x64xf32, #tpu.memory_space<vmem>>, vector<16x64xf32>,
    return
  }
  func.func @transform_0(%arg0: i32) -> (i32, i32) {
    %c0_i32 = arith.constant 0 : i32
    %c0_i32_0 = arith.constant 0 : i32
    return %arg0, %c0_i32 : i32, i32
  }
  func.func @transform_1(%arg0: i32) -> (i32, i32) {
    %c0_i32 = arith.constant 0 : i32
    %c0_i32_0 = arith.constant 0 : i32
    %c0_i32_1 = arith.constant 0 : i32
    return %c0_i32, %c0_i32_0 : i32, i32
  }
  func.func @transform_2(%arg0: i32) -> (i32, i32) {
    %c0_i32 = arith.constant 0 : i32
    %c0_i32_0 = arith.constant 0 : i32
    %c0_i32_1 = arith.constant 0 : i32
    return %c0_i32, %c0_i32_0 : i32, i32
  }
  func.func @transform_3(%arg0: i32) -> (i32, i32) {
    %c0_i32 = arith.constant 0 : i32
    %c0_i32_0 = arith.constant 0 : i32
    return %arg0, %c0_i32 : i32, i32
  }
}

</mosaic_0001>

<llo_original>
// kernel: up_block_forward.4
$region0: #{up_block_forward.4}
  #allocation0 [shape = 'u32[]', space=smem, size = 0x4, offset = 0x4, fixed_abs, tag = 'smem constant byte address 0x4 - core index']
  #allocation1 [shape = 'u32[144,128]{1,0:T(1,128)}', space=vmem, size = 0x12000, scoped, tag = 'internal scratch']
  %s0 = inlined_call_operand.vmem [shape: f32[2,8,8,4], index: 0, kind: input, shape index: {}]
  %s1 = inlined_call_operand.vmem [shape: f32[2,16,16,4], index: 1, kind: input, shape index: {}]
  %s2 = inlined_call_operand.vmem [shape: f32[256,64], index: 2, kind: input, shape index: {}]
  %s3 = inlined_call_operand.vmem [shape: f32[2,18,18,8], index: 3, kind: output, shape index: {}]
  %s4 = sld [smem:[#allocation0]]
  $region45: #{up_block_forward.4} parent=0
    _
  %s6 = ssub.s32 1, %s4
  %s7 = scalar_select 0, %s6, %s4
  loop: start=0, step=1, limit=4
  $region2: #{up_block_forward.4} parent=0 // loop_pre_header
    _
  $region3: #{up_block_forward.4} parent=0 // loop_header
    %s9 = sphi 0, %s13
    %p10 = scmp.ge.s32.totalorder %s9, 4
    %s19 = sphi 0, %s21
    %s22 = sphi 0, %s19
    %s23 = sphi 0, %s22
    %s39 = sphi 0, %s23
    %s45 = sphi 0, %s47
    %s48 = sphi 0, %s45
    %s49 = sphi 0, %s48
    %s65 = sphi 0, %s49
    %s69 = sphi 0, %s69
    %s71 = sphi 0, %s69
    %s72 = sphi 0, %s71
    %s86 = sphi 0, %s72
    %s92 = sphi 0, %s94
    %s95 = sphi 0, %s92
    %s96 = sphi 0, %s95
    %s112 = sphi 0, %s96
  $region4: #{up_block_forward.4} parent=0 // loop_header_branch
    %12 = sbr.rel (%p10) target = $region8
  $region5: #{up_block_forward.4} parent=0 // loop_body
    %s14 = ssub.s32 %s9, 1
    %s15 = ssub.s32 %s9, 2
    %s16 = sadd.s32 %s9, 1
    %s17 = ssub.s32 %s9, %s16
    %p18 = scmp.eq.s32.totalorder %s17, 0
    %s20 = sadd.s32 %s19, 1
    %s21 = scalar_select %p18, %s19, %s20
    %p24 = pneg %p18
    %p25 = scmp.eq.s32.totalorder %s9, 1
    %p26 = por %p24, %p25
    %p27 = scmp.ne.s32.totalorder %s19, %s22
    %p28 = scmp.eq.s32.totalorder %s9, 0
    %p29 = por %p27, %p28
    %p30 = scmp.ne.s32.totalorder %s19, %s22
    %p31 = scmp.eq.s32.totalorder %s14, 1
    %p32 = por %p30, %p31
    %p33 = scmp.ne.s32.totalorder %s22, %s23
    %p34 = scmp.eq.s32.totalorder %s14, 0
    %p35 = por %p33, %p34
    %p36 = scmp.ne.s32.totalorder %s22, %s23
    %p37 = scmp.eq.s32.totalorder %s15, 1
    %p38 = por %p36, %p37
    %p40 = scmp.ne.s32.totalorder %s23, %s39
    %p41 = scmp.eq.s32.totalorder %s15, 0
    %p42 = por %p40, %p41
    %s43 = ssub.s32 %s9, %s16
    %p44 = scmp.eq.s32.totalorder %s43, 0
    %s46 = sadd.s32 %s45, 1
    %s47 = scalar_select %p44, %s45, %s46
    %p50 = pneg %p44
    %p51 = scmp.eq.s32.totalorder %s9, 1
    %p52 = por %p50, %p51
    %p53 = scmp.ne.s32.totalorder %s45, %s48
    %p54 = scmp.eq.s32.totalorder %s9, 0
    %p55 = por %p53, %p54
    %p56 = scmp.ne.s32.totalorder %s45, %s48
    %p57 = scmp.eq.s32.totalorder %s14, 1
    %p58 = por %p56, %p57
    %p59 = scmp.ne.s32.totalorder %s48, %s49
    %p60 = scmp.eq.s32.totalorder %s14, 0
    %p61 = por %p59, %p60
    %p62 = scmp.ne.s32.totalorder %s48, %s49
    %p63 = scmp.eq.s32.totalorder %s15, 1
    %p64 = por %p62, %p63
    %p66 = scmp.ne.s32.totalorder %s49, %s65
    %p67 = scmp.eq.s32.totalorder %s15, 0
    %p68 = por %p66, %p67
    %s70 = sadd.s32 %s69, 1
    %p73 = scmp.eq.s32.totalorder %s9, 1
    %p74 = scmp.ne.s32.totalorder %s69, %s71
    %p75 = scmp.eq.s32.totalorder %s9, 0
    %p76 = por %p74, %p75
    %p77 = scmp.ne.s32.totalorder %s69, %s71
    %p78 = scmp.eq.s32.totalorder %s14, 1
    %p79 = por %p77, %p78
    %p80 = scmp.ne.s32.totalorder %s71, %s72
    %p81 = scmp.eq.s32.totalorder %s14, 0
    %p82 = por %p80, %p81
    %p83 = scmp.ne.s32.totalorder %s71, %s72
    %p84 = scmp.eq.s32.totalorder %s15, 1
    %p85 = por %p83, %p84
    %p87 = scmp.ne.s32.totalorder %s72, %s86
    %p88 = scmp.eq.s32.totalorder %s15, 0
    %p89 = por %p87, %p88
    %s90 = ssub.s32 %s9, %s16
    %p91 = scmp.eq.s32.totalorder %s90, 0
    %s93 = sadd.s32 %s92, 1
    %s94 = scalar_select %p91, %s92, %s93
    %p97 = pneg %p91
    %p98 = scmp.eq.s32.totalorder %s9, 1
    %p99 = por %p97, %p98
    %p100 = scmp.ne.s32.totalorder %s92, %s95
    %p101 = scmp.eq.s32.totalorder %s9, 0
    %p102 = por %p100, %p101
    %p103 = scmp.ne.s32.totalorder %s92, %s95
    %p104 = scmp.eq.s32.totalorder %s14, 1
    %p105 = por %p103, %p104
    %p106 = scmp.ne.s32.totalorder %s95, %s96
    %p107 = scmp.eq.s32.totalorder %s14, 0
    %p108 = por %p106, %p107
    %p109 = scmp.ne.s32.totalorder %s95, %s96
    %p110 = scmp.eq.s32.totalorder %s15, 1
    %p111 = por %p109, %p110
    %p113 = scmp.ne.s32.totalorder %s96, %s112
    %p114 = scmp.eq.s32.totalorder %s15, 0
    %p115 = por %p113, %p114
    %p116 = scmp.le.s32.totalorder 1, %s9
    %p117 = scmp.lt.s32.totalorder %s9, 3
    %p118 = pnand %p116, %p117
    %p119 = pneg %p118
    // Predicated region
    $region9: #{up_block_forward.4} parent=5 // pred_check
      _
    $region10: #{up_block_forward.4} parent=5 // pred_check_branch
      %121 = sbr.rel (%p118) target = $region12
    $region11: #{up_block_forward.4} parent=5 // pred_region
      %s122 = ssub.s32 %s9, 1
      // Predicated region
      $region13: #{up_block_forward.4} parent=11 // pred_check
        %p123 = pneg %p82
      $region14: #{up_block_forward.4} parent=11 // pred_check_branch
        %125 = sbr.rel (%p123) target = $region16
      $region15: #{up_block_forward.4} parent=11 // pred_region
        _
      $region16: #{up_block_forward.4} parent=11 // pred_fallthru
        _
    $region12: #{up_block_forward.4} parent=5 // pred_fallthru
      _
    %p126 = scmp.lt.s32.totalorder %s9, 2
    // Predicated region
    $region17: #{up_block_forward.4} parent=5 // pred_check
      %p127 = pneg %p126
    $region18: #{up_block_forward.4} parent=5 // pred_check_branch
      %129 = sbr.rel (%p127) target = $region20
    $region19: #{up_block_forward.4} parent=5 // pred_region
      // Predicated region
      $region21: #{up_block_forward.4} parent=19 // pred_check
        %p130 = pneg %p29
      $region22: #{up_block_forward.4} parent=19 // pred_check_branch
        %132 = sbr.rel (%p130) target = $region24
      $region23: #{up_block_forward.4} parent=19 // pred_region
        %p133 = scmp.lt.s32.totalorder %s9, 1
        %s134 = scalar_select %p133, %s9, 1
        %s135 = smul.addr %s134, 8
        %s136 = smul.addr %s135, 8
        %s137 = scalar_lea.vmem %s0, %s136
      $region24: #{up_block_forward.4} parent=19 // pred_fallthru
        _
      // Predicated region
      $region25: #{up_block_forward.4} parent=19 // pred_check
        %p138 = pneg %p55
      $region26: #{up_block_forward.4} parent=19 // pred_check_branch
        %140 = sbr.rel (%p138) target = $region28
      $region27: #{up_block_forward.4} parent=19 // pred_region
        %p141 = scmp.lt.s32.totalorder %s9, 1
        %s142 = scalar_select %p141, %s9, 1
        %s143 = smul.addr %s142, 32
        %s144 = smul.addr %s143, 8
        %s145 = scalar_lea.vmem %s1, %s144
      $region28: #{up_block_forward.4} parent=19 // pred_fallthru
        _
    $region20: #{up_block_forward.4} parent=5 // pred_fallthru
      _
    %p146 = scmp.le.s32.totalorder 1, %s9
    %p147 = scmp.lt.s32.totalorder %s9, 3
    %p148 = pnand %p146, %p147
    %p149 = pneg %p148
    // Predicated region
    $region29: #{up_block_forward.4} parent=5 // pred_check
      _
    $region30: #{up_block_forward.4} parent=5 // pred_check_branch
      %151 = sbr.rel (%p148) target = $region32
    $region31: #{up_block_forward.4} parent=5 // pred_region
      %s152 = ssub.s32 %s9, 1
      %p153 = scmp.lt.s32.totalorder %s14, 1
      %s154 = scalar_select %p153, %s14, 1
      %s155 = smul.addr %s154, 8
      %s156 = smul.addr %s155, 8
      %s157 = scalar_lea.vmem %s0, %s156
      %p158 = pneg %p35
      %p159 = pneg %p32
      %p160 = scmp.lt.s32.totalorder %s14, 1
      %s161 = scalar_select %p160, %s14, 1
      %s162 = smul.addr %s161, 32
      %s163 = smul.addr %s162, 8
      %s164 = scalar_lea.vmem %s1, %s163
      %p165 = pneg %p61
      %p166 = pneg %p58
      %p167 = pneg %p82
      %p168 = pneg %p79
      %p169 = pneg %p108
      %p170 = pneg %p105
      %p171 = scmp.lt.s32.totalorder %s14, 1
      %s172 = scalar_select %p171, %s14, 1
      %s173 = smul.addr %s172, 54
      %s174 = smul.addr %s173, 8
      %s175 = scalar_lea.vmem %s3, %s174
      %p176 = scmp.lt.s32.totalorder %s14, 1
      %s177 = scalar_select %p176, %s14, 1
      %s178 = smul.addr %s177, 8
      %s179 = smul.addr %s178, 8
      %s180 = scalar_lea.vmem %s0, %s179
      %p181 = scmp.lt.s32.totalorder %s14, 1
      %s182 = scalar_select %p181, %s14, 1
      %s183 = smul.addr %s182, 32
      %s184 = smul.addr %s183, 8
      %s185 = scalar_lea.vmem %s1, %s184
      %p186 = scmp.lt.s32.totalorder %s14, 1
      %s187 = scalar_select %p186, %s14, 1
      %s188 = smul.addr %s187, 54
      %s189 = smul.addr %s188, 8
      %s190 = scalar_lea.vmem %s3, %s189
      %vm191 = vcmask 64512
      %192 = vst.msk [vmem:[%s190] sm:$0xff] %vm191, 0.0
      %193 = vst.msk [vmem:[%s190 + $0x8] sm:$0xff] %vm191, 0.0
      %vm194 = vcmask 58368
      %195 = vst.msk [vmem:[%s190 + $0x10] sm:$0x3] %vm194, 0.0
      %196 = vst.msk [vmem:[%s190 + $0x18] sm:$0xff] %vm191, 0.0
      %197 = vst.msk [vmem:[%s190 + $0x20] sm:$0xff] %vm191, 0.0
      %198 = vst.msk [vmem:[%s190 + $0x28] sm:$0x3] %vm194, 0.0
      %199 = vst.msk [vmem:[%s190 + $0x30] sm:$0xff] %vm191, 0.0
      %200 = vst.msk [vmem:[%s190 + $0x38] sm:$0xff] %vm191, 0.0
      %201 = vst.msk [vmem:[%s190 + $0x40] sm:$0x3] %vm194, 0.0
      %202 = vst.msk [vmem:[%s190 + $0x48] sm:$0xff] %vm191, 0.0
      %203 = vst.msk [vmem:[%s190 + $0x50] sm:$0xff] %vm191, 0.0
      %204 = vst.msk [vmem:[%s190 + $0x58] sm:$0x3] %vm194, 0.0
      %205 = vst.msk [vmem:[%s190 + $0x60] sm:$0xff] %vm191, 0.0
      %206 = vst.msk [vmem:[%s190 + $0x68] sm:$0xff] %vm191, 0.0
      %207 = vst.msk [vmem:[%s190 + $0x70] sm:$0x3] %vm194, 0.0
      %208 = vst.msk [vmem:[%s190 + $0x78] sm:$0xff] %vm191, 0.0
      %209 = vst.msk [vmem:[%s190 + $0x80] sm:$0xff] %vm191, 0.0
      %210 = vst.msk [vmem:[%s190 + $0x88] sm:$0x3] %vm194, 0.0
      %211 = vst.msk [vmem:[%s190 + $0x90] sm:$0xff] %vm191, 0.0
      %212 = vst.msk [vmem:[%s190 + $0x98] sm:$0xff] %vm191, 0.0
      %213 = vst.msk [vmem:[%s190 + $0xa0] sm:$0x3] %vm194, 0.0
      %214 = vst.msk [vmem:[%s190 + $0xa8] sm:$0xff] %vm191, 0.0
      %215 = vst.msk [vmem:[%s190 + $0xb0] sm:$0xff] %vm191, 0.0
      %216 = vst.msk [vmem:[%s190 + $0xb8] sm:$0x3] %vm194, 0.0
      %217 = vst.msk [vmem:[%s190 + $0xc0] sm:$0xff] %vm191, 0.0
      %218 = vst.msk [vmem:[%s190 + $0xc8] sm:$0xff] %vm191, 0.0
      %219 = vst.msk [vmem:[%s190 + $0xd0] sm:$0x3] %vm194, 0.0
      %220 = vst.msk [vmem:[%s190 + $0xd8] sm:$0xff] %vm191, 0.0
      %221 = vst.msk [vmem:[%s190 + $0xe0] sm:$0xff] %vm191, 0.0
      %222 = vst.msk [vmem:[%s190 + $0xe8] sm:$0x3] %vm194, 0.0
      %223 = vst.msk [vmem:[%s190 + $0xf0] sm:$0xff] %vm191, 0.0
      %224 = vst.msk [vmem:[%s190 + $0xf8] sm:$0xff] %vm191, 0.0
      %225 = vst.msk [vmem:[%s190 + $0x100] sm:$0x3] %vm194, 0.0
      %226 = vst.msk [vmem:[%s190 + $0x108] sm:$0xff] %vm191, 0.0
      %227 = vst.msk [vmem:[%s190 + $0x110] sm:$0xff] %vm191, 0.0
      %228 = vst.msk [vmem:[%s190 + $0x118] sm:$0x3] %vm194, 0.0
      %229 = vst.msk [vmem:[%s190 + $0x120] sm:$0xff] %vm191, 0.0
      %230 = vst.msk [vmem:[%s190 + $0x128] sm:$0xff] %vm191, 0.0
      %231 = vst.msk [vmem:[%s190 + $0x130] sm:$0x3] %vm194, 0.0
      %232 = vst.msk [vmem:[%s190 + $0x138] sm:$0xff] %vm191, 0.0
      %233 = vst.msk [vmem:[%s190 + $0x140] sm:$0xff] %vm191, 0.0
      %234 = vst.msk [vmem:[%s190 + $0x148] sm:$0x3] %vm194, 0.0
      %235 = vst.msk [vmem:[%s190 + $0x150] sm:$0xff] %vm191, 0.0
      %236 = vst.msk [vmem:[%s190 + $0x158] sm:$0xff] %vm191, 0.0
      %237 = vst.msk [vmem:[%s190 + $0x160] sm:$0x3] %vm194, 0.0
      %238 = vst.msk [vmem:[%s190 + $0x168] sm:$0xff] %vm191, 0.0
      %239 = vst.msk [vmem:[%s190 + $0x170] sm:$0xff] %vm191, 0.0
      %240 = vst.msk [vmem:[%s190 + $0x178] sm:$0x3] %vm194, 0.0
      %241 = vst.msk [vmem:[%s190 + $0x180] sm:$0xff] %vm191, 0.0
      %242 = vst.msk [vmem:[%s190 + $0x188] sm:$0xff] %vm191, 0.0
      %243 = vst.msk [vmem:[%s190 + $0x190] sm:$0x3] %vm194, 0.0
      %244 = vst.msk [vmem:[%s190 + $0x198] sm:$0xff] %vm191, 0.0
      %245 = vst.msk [vmem:[%s190 + $0x1a0] sm:$0xff] %vm191, 0.0
      %246 = vst.msk [vmem:[%s190 + $0x1a8] sm:$0x3] %vm194, 0.0
      %v247 = vld [vmem:[%s180] sm:$0xff]
      %v248 = vld [vmem:[%s180 + $0x8] sm:$0xff]
      %v249 = vld [vmem:[%s180 + $0x10] sm:$0xff]
      %v250 = vld [vmem:[%s180 + $0x18] sm:$0xff]
      %v251 = vld [vmem:[%s180 + $0x20] sm:$0xff]
      %v252 = vld [vmem:[%s180 + $0x28] sm:$0xff]
      %v253 = vld [vmem:[%s180 + $0x30] sm:$0xff]
      %v254 = vld [vmem:[%s180 + $0x38] sm:$0xff]
      %v255 = vld [vmem:[%s2] sm:$0xff]
      %v256 = vld [vmem:[%s2 + $0x8] sm:$0xff]
      %v257 = vld [vmem:[%s2 + $0x10] sm:$0xff]
      %v258 = vld [vmem:[%s2 + $0x18] sm:$0xff]
      %v259 = vld [vmem:[%s2 + $0x20] sm:$0xff]
      %v260 = vld [vmem:[%s2 + $0x28] sm:$0xff]
      %v261 = vld [vmem:[%s2 + $0x30] sm:$0xff]
      %v262 = vld [vmem:[%s2 + $0x38] sm:$0xff]
      %v263 = vld [vmem:[%s2 + $0x40] sm:$0xff]
      %v264 = vld [vmem:[%s2 + $0x48] sm:$0xff]
      %v265 = vld [vmem:[%s2 + $0x50] sm:$0xff]
      %v266 = vld [vmem:[%s2 + $0x58] sm:$0xff]
      %v267 = vld [vmem:[%s2 + $0x60] sm:$0xff]
      %v268 = vld [vmem:[%s2 + $0x68] sm:$0xff]
      %v269 = vld [vmem:[%s2 + $0x70] sm:$0xff]
      %v270 = vld [vmem:[%s2 + $0x78] sm:$0xff]
      %v271 = vld [vmem:[%s2 + $0x80] sm:$0xff]
      %v272 = vld [vmem:[%s2 + $0x88] sm:$0xff]
      %v273 = vld [vmem:[%s2 + $0x90] sm:$0xff]
      %v274 = vld [vmem:[%s2 + $0x98] sm:$0xff]
      %v275 = vld [vmem:[%s2 + $0xa0] sm:$0xff]
      %v276 = vld [vmem:[%s2 + $0xa8] sm:$0xff]
      %v277 = vld [vmem:[%s2 + $0xb0] sm:$0xff]
      %v278 = vld [vmem:[%s2 + $0xb8] sm:$0xff]
      %v279 = vld [vmem:[%s2 + $0xc0] sm:$0xff]
      %v280 = vld [vmem:[%s2 + $0xc8] sm:$0xff]
      %v281 = vld [vmem:[%s2 + $0xd0] sm:$0xff]
      %v282 = vld [vmem:[%s2 + $0xd8] sm:$0xff]
      %v283 = vld [vmem:[%s2 + $0xe0] sm:$0xff]
      %v284 = vld [vmem:[%s2 + $0xe8] sm:$0xff]
      %v285 = vld [vmem:[%s2 + $0xf0] sm:$0xff]
      %v286 = vld [vmem:[%s2 + $0xf8] sm:$0xff]
      %vm287 = vcmask 523264
      %v289 = vsel %vm287, %v255, 0
      %v292 = vsel %vm287, %v256, 0
      %v295 = vsel %vm287, %v257, 0
      %v298 = vsel %vm287, %v258, 0
      %v301 = vsel %vm287, %v259, 0
      %v304 = vsel %vm287, %v260, 0
      %v307 = vsel %vm287, %v261, 0
      %v310 = vsel %vm287, %v262, 0
      %v313 = vsel %vm287, %v263, 0
      %v316 = vsel %vm287, %v264, 0
      %v319 = vsel %vm287, %v265, 0
      %v322 = vsel %vm287, %v266, 0
      %v325 = vsel %vm287, %v267, 0
      %v328 = vsel %vm287, %v268, 0
      %v331 = vsel %vm287, %v269, 0
      %v334 = vsel %vm287, %v270, 0
      %v337 = vsel %vm287, %v271, 0
      %v340 = vsel %vm287, %v272, 0
      %v343 = vsel %vm287, %v273, 0
      %v346 = vsel %vm287, %v274, 0
      %v349 = vsel %vm287, %v275, 0
      %v352 = vsel %vm287, %v276, 0
      %v355 = vsel %vm287, %v277, 0
      %v358 = vsel %vm287, %v278, 0
      %v361 = vsel %vm287, %v279, 0
      %v364 = vsel %vm287, %v280, 0
      %v367 = vsel %vm287, %v281, 0
      %v370 = vsel %vm287, %v282, 0
      %v373 = vsel %vm287, %v283, 0
      %v376 = vsel %vm287, %v284, 0
      %v379 = vsel %vm287, %v285, 0
      %v382 = vsel %vm287, %v286, 0
      %384 = vmatprep.subr.mxu0 0.0
      %385 = vmatpush1.msra.mxu0 %v247
      %386 = vmatprep.subr.mxu0 0.0
      %387 = vmatpush1.msra.mxu0 %v248
      %388 = vmatprep.subr.mxu0 0.0
      %389 = vmatpush1.msra.mxu0 %v249
      %390 = vmatprep.subr.mxu0 0.0
      %391 = vmatpush1.msra.mxu0 %v250
      %392 = vmatprep.subr.mxu0 0.0
      %393 = vmatpush1.msra.mxu0 %v251
      %394 = vmatprep.subr.mxu0 0.0
      %395 = vmatpush1.msra.mxu0 %v252
      %396 = vmatprep.subr.mxu0 0.0
      %397 = vmatpush1.msra.mxu0 %v253
      %398 = vmatprep.subr.mxu0 0.0
      %399 = vmatpush1.msra.mxu0 %v254
      %400 = vmatprep.subr.mxu0 0.0
      %401 = vmatpush1.msra.mxu0 0.0
      %402 = vmatprep.subr.mxu0 0.0
      %403 = vmatpush1.msra.mxu0 0.0
      %404 = vmatprep.subr.mxu0 0.0
      %405 = vmatpush1.msra.mxu0 0.0
      %406 = vmatprep.subr.mxu0 0.0
      %407 = vmatpush1.msra.mxu0 0.0
      %408 = vmatprep.subr.mxu0 0.0
      %409 = vmatpush1.msra.mxu0 0.0
      %410 = vmatprep.subr.mxu0 0.0
      %411 = vmatpush1.msra.mxu0 0.0
      %412 = vmatprep.subr.mxu0 0.0
      %413 = vmatpush1.msra.mxu0 0.0
      %414 = vmatprep.subr.mxu0 0.0
      %415 = vmatpush1.msra.mxu0 0.0
      %416 = vmatprep.subr.mxu0 0.0
      %417 = vmatpush1.msra.mxu0 0.0
      %418 = vmatprep.subr.mxu0 0.0
      %419 = vmatpush1.msra.mxu0 0.0
      %420 = vmatprep.subr.mxu0 0.0
      %421 = vmatpush1.msra.mxu0 0.0
      %422 = vmatprep.subr.mxu0 0.0
      %423 = vmatpush1.msra.mxu0 0.0
      %424 = vmatprep.subr.mxu0 0.0
      %425 = vmatpush1.msra.mxu0 0.0
      %426 = vmatprep.subr.mxu0 0.0
      %427 = vmatpush1.msra.mxu0 0.0
      %428 = vmatprep.subr.mxu0 0.0
      %429 = vmatpush1.msra.mxu0 0.0
      %430 = vmatprep.subr.mxu0 0.0
      %431 = vmatpush1.msra.mxu0 0.0
      %432 = vmatprep.subr.mxu0 0.0
      %433 = vmatpush1.msra.mxu0 0.0
      %434 = vmatprep.subr.mxu0 0.0
      %435 = vmatpush1.msra.mxu0 0.0
      %436 = vmatprep.subr.mxu0 0.0
      %437 = vmatpush1.msra.mxu0 0.0
      %438 = vmatprep.subr.mxu0 0.0
      %439 = vmatpush1.msra.mxu0 0.0
      %440 = vmatprep.subr.mxu0 0.0
      %441 = vmatpush1.msra.mxu0 0.0
      %442 = vmatprep.subr.mxu0 0.0
      %443 = vmatpush1.msra.mxu0 0.0
      %444 = vmatprep.subr.mxu0 0.0
      %445 = vmatpush1.msra.mxu0 0.0
      %446 = vmatprep.subr.mxu0 0.0
      %447 = vmatpush1.msra.mxu0 0.0
      %448 = vmatprep.mubr.f32.mxu0 0.0
      %449 = vmatmul.mubr.f32.gmra.mrb[0].mxu0 %v289
      %v450 = vpop.f32.mrb[0].mxu0
      %v451 = vadd.f32 0.0, %v450
      %v452 = vpop.f32.mrb[0].mxu0
      %453 = vmatprep.mubr.f32.mxu0 0.0
      %454 = vmatmul.mubr.f32.gmra.mrb[0].mxu0 %v292
      %v455 = vpop.f32.mrb[0].mxu0
      %v456 = vadd.f32 0.0, %v455
      %v457 = vpop.f32.mrb[0].mxu0
      %458 = vmatprep.mubr.f32.mxu0 0.0
      %459 = vmatmul.mubr.f32.gmra.mrb[0].mxu0 %v295
      %v460 = vpop.f32.mrb[0].mxu0
      %v461 = vadd.f32 0.0, %v460
      %v462 = vpop.f32.mrb[0].mxu0
      %463 = vmatprep.mubr.f32.mxu0 0.0
      %464 = vmatmul.mubr.f32.gmra.mrb[0].mxu0 %v298
      %v465 = vpop.f32.mrb[0].mxu0
      %v466 = vadd.f32 0.0, %v465
      %v467 = vpop.f32.mrb[0].mxu0
      %468 = vmatprep.mubr.f32.mxu0 0.0
      %469 = vmatmul.mubr.f32.gmra.mrb[0].mxu0 %v301
      %v470 = vpop.f32.mrb[0].mxu0
      %v471 = vadd.f32 0.0, %v470
      %v472 = vpop.f32.mrb[0].mxu0
      %473 = vmatprep.mubr.f32.mxu0 0.0
      %474 = vmatmul.mubr.f32.gmra.mrb[0].mxu0 %v304
      %v475 = vpop.f32.mrb[0].mxu0
      %v476 = vadd.f32 0.0, %v475
      %v477 = vpop.f32.mrb[0].mxu0
      %478 = vmatprep.mubr.f32.mxu0 0.0
      %479 = vmatmul.mubr.f32.gmra.mrb[0].mxu0 %v307
      %v480 = vpop.f32.mrb[0].mxu0
      %v481 = vadd.f32 0.0, %v480
      %v482 = vpop.f32.mrb[0].mxu0
      %483 = vmatprep.mubr.f32.mxu0 0.0
      %484 = vmatmul.mubr.f32.gmra.mrb[0].mxu0 %v310
      %v485 = vpop.f32.mrb[0].mxu0
      %v486 = vadd.f32 0.0, %v485
      %v487 = vpop.f32.mrb[0].mxu0
      %488 = vmatprep.mubr.f32.mxu0 0.0
      %489 = vmatmul.mubr.f32.gmra.mrb[0].mxu0 %v313
      %v490 = vpop.f32.mrb[0].mxu0
      %v491 = vadd.f32 0.0, %v490
      %v492 = vpop.f32.mrb[0].mxu0
      %493 = vmatprep.mubr.f32.mxu0 0.0
      %494 = vmatmul.mubr.f32.gmra.mrb[0].mxu0 %v316
      %v495 = vpop.f32.mrb[0].mxu0
      %v496 = vadd.f32 0.0, %v495
      %v497 = vpop.f32.mrb[0].mxu0
      %498 = vmatprep.mubr.f32.mxu0 0.0
      %499 = vmatmul.mubr.f32.gmra.mrb[0].mxu0 %v319
      %v500 = vpop.f32.mrb[0].mxu0
      %v501 = vadd.f32 0.0, %v500
      %v502 = vpop.f32.mrb[0].mxu0
      %503 = vmatprep.mubr.f32.mxu0 0.0
      %504 = vmatmul.mubr.f32.gmra.mrb[0].mxu0 %v322
      %v505 = vpop.f32.mrb[0].mxu0
      %v506 = vadd.f32 0.0, %v505
      %v507 = vpop.f32.mrb[0].mxu0
      %508 = vmatprep.mubr.f32.mxu0 0.0
      %509 = vmatmul.mubr.f32.gmra.mrb[0].mxu0 %v325
      %v510 = vpop.f32.mrb[0].mxu0
      %v511 = vadd.f32 0.0, %v510
      %v512 = vpop.f32.mrb[0].mxu0
      %513 = vmatprep.mubr.f32.mxu0 0.0
      %514 = vmatmul.mubr.f32.gmra.mrb[0].mxu0 %v328
      %v515 = vpop.f32.mrb[0].mxu0
      %v516 = vadd.f32 0.0, %v515
      %v517 = vpop.f32.mrb[0].mxu0
      %518 = vmatprep.mubr.f32.mxu0 0.0
      %519 = vmatmul.mubr.f32.gmra.mrb[0].mxu0 %v331
      %v520 = vpop.f32.mrb[0].mxu0
      %v521 = vadd.f32 0.0, %v520
      %v522 = vpop.f32.mrb[0].mxu0
      %523 = vmatprep.mubr.f32.mxu0 0.0
      %524 = vmatmul.mubr.f32.gmra.mrb[0].mxu0 %v334
      %v525 = vpop.f32.mrb[0].mxu0
      %v526 = vadd.f32 0.0, %v525
      %v527 = vpop.f32.mrb[0].mxu0
      %528 = vmatprep.mubr.f32.mxu0 0.0
      %529 = vmatmul.mubr.f32.gmra.mrb[0].mxu0 %v337
      %v530 = vpop.f32.mrb[0].mxu0
      %v531 = vadd.f32 0.0, %v530
      %v532 = vpop.f32.mrb[0].mxu0
      %533 = vmatprep.mubr.f32.mxu0 0.0
      %534 = vmatmul.mubr.f32.gmra.mrb[0].mxu0 %v340
      %v535 = vpop.f32.mrb[0].mxu0
      %v536 = vadd.f32 0.0, %v535
      %v537 = vpop.f32.mrb[0].mxu0
      %538 = vmatprep.mubr.f32.mxu0 0.0
      %539 = vmatmul.mubr.f32.gmra.mrb[0].mxu0 %v343
      %v540 = vpop.f32.mrb[0].mxu0
      %v541 = vadd.f32 0.0, %v540
      %v542 = vpop.f32.mrb[0].mxu0
      %543 = vmatprep.mubr.f32.mxu0 0.0
      %544 = vmatmul.mubr.f32.gmra.mrb[0].mxu0 %v346
      %v545 = vpop.f32.mrb[0].mxu0
      %v546 = vadd.f32 0.0, %v545
      %v547 = vpop.f32.mrb[0].mxu0
      %548 = vmatprep.mubr.f32.mxu0 0.0
      %549 = vmatmul.mubr.f32.gmra.mrb[0].mxu0 %v349
      %v550 = vpop.f32.mrb[0].mxu0
      %v551 = vadd.f32 0.0, %v550
      %v552 = vpop.f32.mrb[0].mxu0
      %553 = vmatprep.mubr.f32.mxu0 0.0
      %554 = vmatmul.mubr.f32.gmra.mrb[0].mxu0 %v352
      %v555 = vpop.f32.mrb[0].mxu0
      %v556 = vadd.f32 0.0, %v555
      %v557 = vpop.f32.mrb[0].mxu0
      %558 = vmatprep.mubr.f32.mxu0 0.0
      %559 = vmatmul.mubr.f32.gmra.mrb[0].mxu0 %v355
      %v560 = vpop.f32.mrb[0].mxu0
      %v561 = vadd.f32 0.0, %v560
      %v562 = vpop.f32.mrb[0].mxu0
      %563 = vmatprep.mubr.f32.mxu0 0.0
      %564 = vmatmul.mubr.f32.gmra.mrb[0].mxu0 %v358
      %v565 = vpop.f32.mrb[0].mxu0
      %v566 = vadd.f32 0.0, %v565
      %v567 = vpop.f32.mrb[0].mxu0
      %568 = vmatprep.mubr.f32.mxu0 0.0
      %569 = vmatmul.mubr.f32.gmra.mrb[0].mxu0 %v361
      %v570 = vpop.f32.mrb[0].mxu0
      %v571 = vadd.f32 0.0, %v570
      %v572 = vpop.f32.mrb[0].mxu0
      %573 = vmatprep.mubr.f32.mxu0 0.0
      %574 = vmatmul.mubr.f32.gmra.mrb[0].mxu0 %v364
      %v575 = vpop.f32.mrb[0].mxu0
      %v576 = vadd.f32 0.0, %v575
      %v577 = vpop.f32.mrb[0].mxu0
      %578 = vmatprep.mubr.f32.mxu0 0.0
      %579 = vmatmul.mubr.f32.gmra.mrb[0].mxu0 %v367
      %v580 = vpop.f32.mrb[0].mxu0
      %v581 = vadd.f32 0.0, %v580
      %v582 = vpop.f32.mrb[0].mxu0
      %583 = vmatprep.mubr.f32.mxu0 0.0
      %584 = vmatmul.mubr.f32.gmra.mrb[0].mxu0 %v370
      %v585 = vpop.f32.mrb[0].mxu0
      %v586 = vadd.f32 0.0, %v585
      %v587 = vpop.f32.mrb[0].mxu0
      %588 = vmatprep.mubr.f32.mxu0 0.0
      %589 = vmatmul.mubr.f32.gmra.mrb[0].mxu0 %v373
      %v590 = vpop.f32.mrb[0].mxu0
      %v591 = vadd.f32 0.0, %v590
      %v592 = vpop.f32.mrb[0].mxu0
      %593 = vmatprep.mubr.f32.mxu0 0.0
      %594 = vmatmul.mubr.f32.gmra.mrb[0].mxu0 %v376
      %v595 = vpop.f32.mrb[0].mxu0
      %v596 = vadd.f32 0.0, %v595
      %v597 = vpop.f32.mrb[0].mxu0
      %598 = vmatprep.mubr.f32.mxu0 0.0
      %599 = vmatmul.mubr.f32.gmra.mrb[0].mxu0 %v379
      %v600 = vpop.f32.mrb[0].mxu0
      %v601 = vadd.f32 0.0, %v600
      %v602 = vpop.f32.mrb[0].mxu0
      %603 = vmatprep.mubr.f32.mxu0 0.0
      %604 = vmatmul.mubr.f32.gmra.mrb[0].mxu0 %v382
      %v605 = vpop.f32.mrb[0].mxu0
      %v606 = vadd.f32 0.0, %v605
      %v607 = vpop.f32.mrb[0].mxu0
      %608 = vdwg.mxu0
      %v609 = vld [vmem:[%s185] sm:$0xff]
      %v610 = vld [vmem:[%s185 + $0x8] sm:$0xff]
      %v611 = vld [vmem:[%s185 + $0x10] sm:$0xff]
      %v612 = vld [vmem:[%s185 + $0x18] sm:$0xff]
      %v613 = vld [vmem:[%s185 + $0x20] sm:$0xff]
      %v614 = vld [vmem:[%s185 + $0x28] sm:$0xff]
      %v615 = vld [vmem:[%s185 + $0x30] sm:$0xff]
      %v616 = vld [vmem:[%s185 + $0x38] sm:$0xff]
      %v617 = vld [vmem:[%s185 + $0x40] sm:$0xff]
      %v618 = vld [vmem:[%s185 + $0x48] sm:$0xff]
      %v619 = vld [vmem:[%s185 + $0x50] sm:$0xff]
      %v620 = vld [vmem:[%s185 + $0x58] sm:$0xff]
      %v621 = vld [vmem:[%s185 + $0x60] sm:$0xff]
      %v622 = vld [vmem:[%s185 + $0x68] sm:$0xff]
      %v623 = vld [vmem:[%s185 + $0x70] sm:$0xff]
      %v624 = vld [vmem:[%s185 + $0x78] sm:$0xff]
      %v625 = vld [vmem:[%s185 + $0x80] sm:$0xff]
      %v626 = vld [vmem:[%s185 + $0x88] sm:$0xff]
      %v627 = vld [vmem:[%s185 + $0x90] sm:$0xff]
      %v628 = vld [vmem:[%s185 + $0x98] sm:$0xff]
      %v629 = vld [vmem:[%s185 + $0xa0] sm:$0xff]
      %v630 = vld [vmem:[%s185 + $0xa8] sm:$0xff]
      %v631 = vld [vmem:[%s185 + $0xb0] sm:$0xff]
      %v632 = vld [vmem:[%s185 + $0xb8] sm:$0xff]
      %v633 = vld [vmem:[%s185 + $0xc0] sm:$0xff]
      %v634 = vld [vmem:[%s185 + $0xc8] sm:$0xff]
      %v635 = vld [vmem:[%s185 + $0xd0] sm:$0xff]
      %v636 = vld [vmem:[%s185 + $0xd8] sm:$0xff]
      %v637 = vld [vmem:[%s185 + $0xe0] sm:$0xff]
      %v638 = vld [vmem:[%s185 + $0xe8] sm:$0xff]
      %v639 = vld [vmem:[%s185 + $0xf0] sm:$0xff]
      %v640 = vld [vmem:[%s185 + $0xf8] sm:$0xff]
      %673 = vrot.lane.b32.xlu0 %v451, 4
      %v674 = vpop.permute.xlu0 %673
      %675 = vrot.lane.b32.xlu0 %v456, 4
      %v676 = vpop.permute.xlu0 %675
      %677 = vrot.lane.b32.xlu0 %v461, 4
      %v678 = vpop.permute.xlu0 %677
      %679 = vrot.lane.b32.xlu0 %v466, 4
      %v680 = vpop.permute.xlu0 %679
      %681 = vrot.lane.b32.xlu0 %v471, 4
      %v682 = vpop.permute.xlu0 %681
      %683 = vrot.lane.b32.xlu0 %v476, 4
      %v684 = vpop.permute.xlu0 %683
      %685 = vrot.lane.b32.xlu0 %v481, 4
      %v686 = vpop.permute.xlu0 %685
      %687 = vrot.lane.b32.xlu0 %v486, 4
      %v688 = vpop.permute.xlu0 %687
      %689 = vrot.lane.b32.xlu0 %v491, 4
      %v690 = vpop.permute.xlu0 %689
      %691 = vrot.lane.b32.xlu0 %v496, 4
      %v692 = vpop.permute.xlu0 %691
      %693 = vrot.lane.b32.xlu0 %v501, 4
      %v694 = vpop.permute.xlu0 %693
      %695 = vrot.lane.b32.xlu0 %v506, 4
      %v696 = vpop.permute.xlu0 %695
      %697 = vrot.lane.b32.xlu0 %v511, 4
      %v698 = vpop.permute.xlu0 %697
      %699 = vrot.lane.b32.xlu0 %v516, 4
      %v700 = vpop.permute.xlu0 %699
      %701 = vrot.lane.b32.xlu0 %v521, 4
      %v702 = vpop.permute.xlu0 %701
      %703 = vrot.lane.b32.xlu0 %v526, 4
      %v704 = vpop.permute.xlu0 %703
      %705 = vrot.lane.b32.xlu0 %v531, 4
      %v706 = vpop.permute.xlu0 %705
      %707 = vrot.lane.b32.xlu0 %v536, 4
      %v708 = vpop.permute.xlu0 %707
      %709 = vrot.lane.b32.xlu0 %v541, 4
      %v710 = vpop.permute.xlu0 %709
      %711 = vrot.lane.b32.xlu0 %v546, 4
      %v712 = vpop.permute.xlu0 %711
      %713 = vrot.lane.b32.xlu0 %v551, 4
      %v714 = vpop.permute.xlu0 %713
      %715 = vrot.lane.b32.xlu0 %v556, 4
      %v716 = vpop.permute.xlu0 %715
      %717 = vrot.lane.b32.xlu0 %v561, 4
      %v718 = vpop.permute.xlu0 %717
      %719 = vrot.lane.b32.xlu0 %v566, 4
      %v720 = vpop.permute.xlu0 %719
      %721 = vrot.lane.b32.xlu0 %v571, 4
      %v722 = vpop.permute.xlu0 %721
      %723 = vrot.lane.b32.xlu0 %v576, 4
      %v724 = vpop.permute.xlu0 %723
      %725 = vrot.lane.b32.xlu0 %v581, 4
      %v726 = vpop.permute.xlu0 %725
      %727 = vrot.lane.b32.xlu0 %v586, 4
      %v728 = vpop.permute.xlu0 %727
      %729 = vrot.lane.b32.xlu0 %v591, 4
      %v730 = vpop.permute.xlu0 %729
      %731 = vrot.lane.b32.xlu0 %v596, 4
      %v732 = vpop.permute.xlu0 %731
      %733 = vrot.lane.b32.xlu0 %v601, 4
      %v734 = vpop.permute.xlu0 %733
      %735 = vrot.lane.b32.xlu0 %v606, 4
      %v736 = vpop.permute.xlu0 %735
      %vm769 = vcmask 31744
      %v770 = vsel %vm769, %v609, %v674
      %v771 = vsel %vm769, %v610, %v676
      %v772 = vsel %vm769, %v611, %v678
      %v773 = vsel %vm769, %v612, %v680
      %v774 = vsel %vm769, %v613, %v682
      %v775 = vsel %vm769, %v614, %v684
      %v776 = vsel %vm769, %v615, %v686
      %v777 = vsel %vm769, %v616, %v688
      %v778 = vsel %vm769, %v617, %v690
      %v779 = vsel %vm769, %v618, %v692
      %v780 = vsel %vm769, %v619, %v694
      %v781 = vsel %vm769, %v620, %v696
      %v782 = vsel %vm769, %v621, %v698
      %v783 = vsel %vm769, %v622, %v700
      %v784 = vsel %vm769, %v623, %v702
      %v785 = vsel %vm769, %v624, %v704
      %v786 = vsel %vm769, %v625, %v706
      %v787 = vsel %vm769, %v626, %v708
      %v788 = vsel %vm769, %v627, %v710
      %v789 = vsel %vm769, %v628, %v712
      %v790 = vsel %vm769, %v629, %v714
      %v791 = vsel %vm769, %v630, %v716
      %v792 = vsel %vm769, %v631, %v718
      %v793 = vsel %vm769, %v632, %v720
      %v794 = vsel %vm769, %v633, %v722
      %v795 = vsel %vm769, %v634, %v724
      %v796 = vsel %vm769, %v635, %v726
      %v797 = vsel %vm769, %v636, %v728
      %v798 = vsel %vm769, %v637, %v730
      %v799 = vsel %vm769, %v638, %v732
      %v800 = vsel %vm769, %v639, %v734
      %v801 = vsel %vm769, %v640, %v736
      %s802 = scalar_lea.vmem %s190, 24
      %803 = vst.msk [vmem:[%s802 + $0x1] sm:$0xff] %vm191, %v770
      %804 = vst.msk [vmem:[%s802 + $0x9] sm:$0xff] %vm191, %v771
      %805 = vst.msk [vmem:[%s802 + $0x19] sm:$0xff] %vm191, %v772
      %806 = vst.msk [vmem:[%s802 + $0x21] sm:$0xff] %vm191, %v773
      %807 = vst.msk [vmem:[%s802 + $0x31] sm:$0xff] %vm191, %v774
      %808 = vst.msk [vmem:[%s802 + $0x39] sm:$0xff] %vm191, %v775
      %809 = vst.msk [vmem:[%s802 + $0x49] sm:$0xff] %vm191, %v776
      %810 = vst.msk [vmem:[%s802 + $0x51] sm:$0xff] %vm191, %v777
      %811 = vst.msk [vmem:[%s802 + $0x61] sm:$0xff] %vm191, %v778
      %812 = vst.msk [vmem:[%s802 + $0x69] sm:$0xff] %vm191, %v779
      %813 = vst.msk [vmem:[%s802 + $0x79] sm:$0xff] %vm191, %v780
      %814 = vst.msk [vmem:[%s802 + $0x81] sm:$0xff] %vm191, %v781
      %815 = vst.msk [vmem:[%s802 + $0x91] sm:$0xff] %vm191, %v782
      %816 = vst.msk [vmem:[%s802 + $0x99] sm:$0xff] %vm191, %v783
      %817 = vst.msk [vmem:[%s802 + $0xa9] sm:$0xff] %vm191, %v784
      %818 = vst.msk [vmem:[%s802 + $0xb1] sm:$0xff] %vm191, %v785
      %819 = vst.msk [vmem:[%s802 + $0xc1] sm:$0xff] %vm191, %v786
      %820 = vst.msk [vmem:[%s802 + $0xc9] sm:$0xff] %vm191, %v787
      %821 = vst.msk [vmem:[%s802 + $0xd9] sm:$0xff] %vm191, %v788
      %822 = vst.msk [vmem:[%s802 + $0xe1] sm:$0xff] %vm191, %v789
      %823 = vst.msk [vmem:[%s802 + $0xf1] sm:$0xff] %vm191, %v790
      %824 = vst.msk [vmem:[%s802 + $0xf9] sm:$0xff] %vm191, %v791
      %825 = vst.msk [vmem:[%s802 + $0x109] sm:$0xff] %vm191, %v792
      %826 = vst.msk [vmem:[%s802 + $0x111] sm:$0xff] %vm191, %v793
      %827 = vst.msk [vmem:[%s802 + $0x121] sm:$0xff] %vm191, %v794
      %828 = vst.msk [vmem:[%s802 + $0x129] sm:$0xff] %vm191, %v795
      %829 = vst.msk [vmem:[%s802 + $0x139] sm:$0xff] %vm191, %v796
      %830 = vst.msk [vmem:[%s802 + $0x141] sm:$0xff] %vm191, %v797
      %831 = vst.msk [vmem:[%s802 + $0x151] sm:$0xff] %vm191, %v798
      %832 = vst.msk [vmem:[%s802 + $0x159] sm:$0xff] %vm191, %v799
      %833 = vst.msk [vmem:[%s802 + $0x169] sm:$0xff] %vm191, %v800
      %834 = vst.msk [vmem:[%s802 + $0x171] sm:$0xff] %vm191, %v801
      %p835 = scmp.lt.s32.totalorder %s14, 1
      %s836 = scalar_select %p835, %s14, 1
      %s837 = smul.addr %s836, 54
      %s838 = smul.addr %s837, 8
      %s839 = scalar_lea.vmem %s3, %s838
      // Predicated region
      $region33: #{up_block_forward.4} parent=31 // pred_check
        %p840 = pneg %p105
      $region34: #{up_block_forward.4} parent=31 // pred_check_branch
        %842 = sbr.rel (%p840) target = $region36
      $region35: #{up_block_forward.4} parent=31 // pred_region
        _
      $region36: #{up_block_forward.4} parent=31 // pred_fallthru
        _
    $region32: #{up_block_forward.4} parent=5 // pred_fallthru
      _
    %p843 = scmp.le.s32.totalorder 2, %s9
    // Predicated region
    $region37: #{up_block_forward.4} parent=5 // pred_check
      %p844 = pneg %p843
    $region38: #{up_block_forward.4} parent=5 // pred_check_branch
      %846 = sbr.rel (%p844) target = $region40
    $region39: #{up_block_forward.4} parent=5 // pred_region
      %s847 = ssub.s32 %s9, 2
      // Predicated region
      $region41: #{up_block_forward.4} parent=39 // pred_check
        %p848 = pneg %p111
      $region42: #{up_block_forward.4} parent=39 // pred_check_branch
        %850 = sbr.rel (%p848) target = $region44
      $region43: #{up_block_forward.4} parent=39 // pred_region
        %p851 = scmp.lt.s32.totalorder %s15, 1
        %s852 = scalar_select %p851, %s15, 1
        %s853 = smul.addr %s852, 54
        %s854 = smul.addr %s853, 8
        %s855 = scalar_lea.vmem %s3, %s854
      $region44: #{up_block_forward.4} parent=39 // pred_fallthru
        _
    $region40: #{up_block_forward.4} parent=5 // pred_fallthru
      _
  $region6: #{up_block_forward.4} parent=0 // loop_footer
    %s13 = sadd.s32 1, %s9
  $region7: #{up_block_forward.4} parent=0 // loop_footer_branch
    %8 = sbr.rel target = $region3
  $region8: #{up_block_forward.4} parent=0 // loop_exit
    _

// kernel: up_block_forward.7
$region0: #{up_block_forward.7}
  #allocation0 [shape = 'u32[]', space=smem, size = 0x4, offset = 0x4, fixed_abs, tag = 'smem constant byte address 0x4 - core index']
  #allocation1 [shape = 'u32[144,128]{1,0:T(1,128)}', space=vmem, size = 0x12000, scoped, tag = 'internal scratch']
  %s0 = inlined_call_operand.vmem [shape: f32[32,64], index: 0, kind: input, shape index: {}]
  %s1 = inlined_call_operand.vmem [shape: f32[1,64], index: 1, kind: input, shape index: {}]
  %s2 = inlined_call_operand.vmem [shape: f32[1,64], index: 2, kind: input, shape index: {}]
  %s3 = inlined_call_operand.vmem [shape: f32[32,64], index: 3, kind: output, shape index: {}]
  %s4 = sld [smem:[#allocation0]]
  $region45: #{up_block_forward.7} parent=0
    _
  %s6 = ssub.s32 1, %s4
  %s7 = scalar_select 0, %s6, %s4
  loop: start=0, step=1, limit=4
  $region2: #{up_block_forward.7} parent=0 // loop_pre_header
    _
  $region3: #{up_block_forward.7} parent=0 // loop_header
    %s9 = sphi 0, %s13
    %p10 = scmp.ge.s32.totalorder %s9, 4
    %s19 = sphi 0, %s21
    %s22 = sphi 0, %s19
    %s23 = sphi 0, %s22
    %s39 = sphi 0, %s23
    %s43 = sphi 0, %s43
    %s45 = sphi 0, %s43
    %s46 = sphi 0, %s45
    %s60 = sphi 0, %s46
    %s64 = sphi 0, %s64
    %s66 = sphi 0, %s64
    %s67 = sphi 0, %s66
    %s81 = sphi 0, %s67
    %s87 = sphi 0, %s89
    %s90 = sphi 0, %s87
    %s91 = sphi 0, %s90
    %s107 = sphi 0, %s91
  $region4: #{up_block_forward.7} parent=0 // loop_header_branch
    %12 = sbr.rel (%p10) target = $region8
  $region5: #{up_block_forward.7} parent=0 // loop_body
    %s14 = ssub.s32 %s9, 1
    %s15 = ssub.s32 %s9, 2
    %s16 = sadd.s32 %s9, 1
    %s17 = ssub.s32 %s9, %s16
    %p18 = scmp.eq.s32.totalorder %s17, 0
    %s20 = sadd.s32 %s19, 1
    %s21 = scalar_select %p18, %s19, %s20
    %p24 = pneg %p18
    %p25 = scmp.eq.s32.totalorder %s9, 1
    %p26 = por %p24, %p25
    %p27 = scmp.ne.s32.totalorder %s19, %s22
    %p28 = scmp.eq.s32.totalorder %s9, 0
    %p29 = por %p27, %p28
    %p30 = scmp.ne.s32.totalorder %s19, %s22
    %p31 = scmp.eq.s32.totalorder %s14, 1
    %p32 = por %p30, %p31
    %p33 = scmp.ne.s32.totalorder %s22, %s23
    %p34 = scmp.eq.s32.totalorder %s14, 0
    %p35 = por %p33, %p34
    %p36 = scmp.ne.s32.totalorder %s22, %s23
    %p37 = scmp.eq.s32.totalorder %s15, 1
    %p38 = por %p36, %p37
    %p40 = scmp.ne.s32.totalorder %s23, %s39
    %p41 = scmp.eq.s32.totalorder %s15, 0
    %p42 = por %p40, %p41
    %s44 = sadd.s32 %s43, 1
    %p47 = scmp.eq.s32.totalorder %s9, 1
    %p48 = scmp.ne.s32.totalorder %s43, %s45
    %p49 = scmp.eq.s32.totalorder %s9, 0
    %p50 = por %p48, %p49
    %p51 = scmp.ne.s32.totalorder %s43, %s45
    %p52 = scmp.eq.s32.totalorder %s14, 1
    %p53 = por %p51, %p52
    %p54 = scmp.ne.s32.totalorder %s45, %s46
    %p55 = scmp.eq.s32.totalorder %s14, 0
    %p56 = por %p54, %p55
    %p57 = scmp.ne.s32.totalorder %s45, %s46
    %p58 = scmp.eq.s32.totalorder %s15, 1
    %p59 = por %p57, %p58
    %p61 = scmp.ne.s32.totalorder %s46, %s60
    %p62 = scmp.eq.s32.totalorder %s15, 0
    %p63 = por %p61, %p62
    %s65 = sadd.s32 %s64, 1
    %p68 = scmp.eq.s32.totalorder %s9, 1
    %p69 = scmp.ne.s32.totalorder %s64, %s66
    %p70 = scmp.eq.s32.totalorder %s9, 0
    %p71 = por %p69, %p70
    %p72 = scmp.ne.s32.totalorder %s64, %s66
    %p73 = scmp.eq.s32.totalorder %s14, 1
    %p74 = por %p72, %p73
    %p75 = scmp.ne.s32.totalorder %s66, %s67
    %p76 = scmp.eq.s32.totalorder %s14, 0
    %p77 = por %p75, %p76
    %p78 = scmp.ne.s32.totalorder %s66, %s67
    %p79 = scmp.eq.s32.totalorder %s15, 1
    %p80 = por %p78, %p79
    %p82 = scmp.ne.s32.totalorder %s67, %s81
    %p83 = scmp.eq.s32.totalorder %s15, 0
    %p84 = por %p82, %p83
    %s85 = ssub.s32 %s9, %s16
    %p86 = scmp.eq.s32.totalorder %s85, 0
    %s88 = sadd.s32 %s87, 1
    %s89 = scalar_select %p86, %s87, %s88
    %p92 = pneg %p86
    %p93 = scmp.eq.s32.totalorder %s9, 1
    %p94 = por %p92, %p93
    %p95 = scmp.ne.s32.totalorder %s87, %s90
    %p96 = scmp.eq.s32.totalorder %s9, 0
    %p97 = por %p95, %p96
    %p98 = scmp.ne.s32.totalorder %s87, %s90
    %p99 = scmp.eq.s32.totalorder %s14, 1
    %p100 = por %p98, %p99
    %p101 = scmp.ne.s32.totalorder %s90, %s91
    %p102 = scmp.eq.s32.totalorder %s14, 0
    %p103 = por %p101, %p102
    %p104 = scmp.ne.s32.totalorder %s90, %s91
    %p105 = scmp.eq.s32.totalorder %s15, 1
    %p106 = por %p104, %p105
    %p108 = scmp.ne.s32.totalorder %s91, %s107
    %p109 = scmp.eq.s32.totalorder %s15, 0
    %p110 = por %p108, %p109
    %p111 = scmp.le.s32.totalorder 1, %s9
    %p112 = scmp.lt.s32.totalorder %s9, 3
    %p113 = pnand %p111, %p112
    %p114 = pneg %p113
    // Predicated region
    $region9: #{up_block_forward.7} parent=5 // pred_check
      _
    $region10: #{up_block_forward.7} parent=5 // pred_check_branch
      %116 = sbr.rel (%p113) target = $region12
    $region11: #{up_block_forward.7} parent=5 // pred_region
      %s117 = ssub.s32 %s9, 1
      // Predicated region
      $region13: #{up_block_forward.7} parent=11 // pred_check
        %p118 = pneg %p56
      $region14: #{up_block_forward.7} parent=11 // pred_check_branch
        %120 = sbr.rel (%p118) target = $region16
      $region15: #{up_block_forward.7} parent=11 // pred_region
        _
      $region16: #{up_block_forward.7} parent=11 // pred_fallthru
        _
      // Predicated region
      $region17: #{up_block_forward.7} parent=11 // pred_check
        %p121 = pneg %p77
      $region18: #{up_block_forward.7} parent=11 // pred_check_branch
        %123 = sbr.rel (%p121) target = $region20
      $region19: #{up_block_forward.7} parent=11 // pred_region
        _
      $region20: #{up_block_forward.7} parent=11 // pred_fallthru
        _
    $region12: #{up_block_forward.7} parent=5 // pred_fallthru
      _
    %p124 = scmp.lt.s32.totalorder %s9, 2
    // Predicated region
    $region21: #{up_block_forward.7} parent=5 // pred_check
      %p125 = pneg %p124
    $region22: #{up_block_forward.7} parent=5 // pred_check_branch
      %127 = sbr.rel (%p125) target = $region24
    $region23: #{up_block_forward.7} parent=5 // pred_region
      // Predicated region
      $region25: #{up_block_forward.7} parent=23 // pred_check
        %p128 = pneg %p29
      $region26: #{up_block_forward.7} parent=23 // pred_check_branch
        %130 = sbr.rel (%p128) target = $region28
      $region27: #{up_block_forward.7} parent=23 // pred_region
        %s131 = smul.u32 2, %s9
        %p132 = scmp.lt.s32.totalorder %s131, 3
        %s133 = scalar_select %p132, %s131, 3
        %s134 = smul.addr %s133, 8
        %s135 = scalar_lea.vmem %s0, %s134
        %s136 = smul.u32 2, %s9
      $region28: #{up_block_forward.7} parent=23 // pred_fallthru
        _
    $region24: #{up_block_forward.7} parent=5 // pred_fallthru
      _
    %p137 = scmp.le.s32.totalorder 1, %s9
    %p138 = scmp.lt.s32.totalorder %s9, 3
    %p139 = pnand %p137, %p138
    %p140 = pneg %p139
    // Predicated region
    $region29: #{up_block_forward.7} parent=5 // pred_check
      _
    $region30: #{up_block_forward.7} parent=5 // pred_check_branch
      %142 = sbr.rel (%p139) target = $region32
    $region31: #{up_block_forward.7} parent=5 // pred_region
      %s143 = ssub.s32 %s9, 1
      %s144 = smul.u32 2, %s14
      %p145 = scmp.lt.s32.totalorder %s144, 3
      %s146 = scalar_select %p145, %s144, 3
      %s147 = smul.addr %s146, 8
      %s148 = scalar_lea.vmem %s0, %s147
      %p149 = pneg %p35
      %p150 = pneg %p32
      %p151 = pneg %p56
      %p152 = pneg %p53
      %p153 = pneg %p77
      %p154 = pneg %p74
      %p155 = pneg %p103
      %p156 = pneg %p100
      %s157 = smul.u32 2, %s14
      %p158 = scmp.lt.s32.totalorder %s157, 3
      %s159 = scalar_select %p158, %s157, 3
      %s160 = smul.addr %s159, 8
      %s161 = scalar_lea.vmem %s3, %s160
      %s162 = smul.u32 2, %s14
      %p163 = scmp.lt.s32.totalorder %s162, 3
      %s164 = scalar_select %p163, %s162, 3
      %s165 = smul.addr %s164, 8
      %s166 = scalar_lea.vmem %s0, %s165
      %s167 = smul.u32 2, %s14
      %s168 = smul.u32 2, %s14
      %p169 = scmp.lt.s32.totalorder %s168, 3
      %s170 = scalar_select %p169, %s168, 3
      %s171 = smul.addr %s170, 8
      %s172 = scalar_lea.vmem %s3, %s171
      %s173 = smul.u32 2, %s14
      %v174 = vld [vmem:[%s166] sm:$0xff]
      %v175 = vld [vmem:[%s166 + $0x8] sm:$0xff]
      %v176 = vld [vmem:[%s1] sm:$0x1]
      %v178 = vlaneseq
      %v179 = vshrl.u32 %v178, 7
      %v180 = vsub.s32 0, %v179
      %v181 = vrot.slane %v176, %v180
      %v183 = vmul.f32 %v174, %v181
      %v184 = vmul.f32 %v175, %v181
      %v185 = vld [vmem:[%s2] sm:$0x1]
      %v187 = vlaneseq
      %v188 = vshrl.u32 %v187, 7
      %v189 = vsub.s32 0, %v188
      %v190 = vrot.slane %v185, %v189
      %v192 = vadd.f32 %v183, %v190
      %v193 = vadd.f32 %v184, %v190
      %v194 = vmax.f32 %v192, 0.0
      %v195 = vmax.f32 %v193, 0.0
      %vm196 = vcmask 523264
      %197 = vst.msk [vmem:[%s172] sm:$0xff] %vm196, %v194
      %198 = vst.msk [vmem:[%s172 + $0x8] sm:$0xff] %vm196, %v195
      %s199 = smul.u32 2, %s14
      %p200 = scmp.lt.s32.totalorder %s199, 3
      %s201 = scalar_select %p200, %s199, 3
      %s202 = smul.addr %s201, 8
      %s203 = scalar_lea.vmem %s3, %s202
      // Predicated region
      $region33: #{up_block_forward.7} parent=31 // pred_check
        %p204 = pneg %p100
      $region34: #{up_block_forward.7} parent=31 // pred_check_branch
        %206 = sbr.rel (%p204) target = $region36
      $region35: #{up_block_forward.7} parent=31 // pred_region
        %s207 = smul.u32 2, %s14
      $region36: #{up_block_forward.7} parent=31 // pred_fallthru
        _
    $region32: #{up_block_forward.7} parent=5 // pred_fallthru
      _
    %p208 = scmp.le.s32.totalorder 2, %s9
    // Predicated region
    $region37: #{up_block_forward.7} parent=5 // pred_check
      %p209 = pneg %p208
    $region38: #{up_block_forward.7} parent=5 // pred_check_branch
      %211 = sbr.rel (%p209) target = $region40
    $region39: #{up_block_forward.7} parent=5 // pred_region
      %s212 = ssub.s32 %s9, 2
      // Predicated region
      $region41: #{up_block_forward.7} parent=39 // pred_check
        %p213 = pneg %p106
      $region42: #{up_block_forward.7} parent=39 // pred_check_branch
        %215 = sbr.rel (%p213) target = $region44
      $region43: #{up_block_forward.7} parent=39 // pred_region
        %s216 = smul.u32 2, %s15
        %p217 = scmp.lt.s32.totalorder %s216, 3
        %s218 = scalar_select %p217, %s216, 3
        %s219 = smul.addr %s218, 8
        %s220 = scalar_lea.vmem %s3, %s219
      $region44: #{up_block_forward.7} parent=39 // pred_fallthru
        _
    $region40: #{up_block_forward.7} parent=5 // pred_fallthru
      _
  $region6: #{up_block_forward.7} parent=0 // loop_footer
    %s13 = sadd.s32 1, %s9
  $region7: #{up_block_forward.7} parent=0 // loop_footer_branch
    %8 = sbr.rel target = $region3
  $region8: #{up_block_forward.7} parent=0 // loop_exit
    _

// kernel: up_block_forward.5
$region0: #{up_block_forward.5}
  #allocation0 [shape = 'u32[]', space=smem, size = 0x4, offset = 0x4, fixed_abs, tag = 'smem constant byte address 0x4 - core index']
  #allocation1 [shape = 'u32[144,128]{1,0:T(1,128)}', space=vmem, size = 0x12000, scoped, tag = 'internal scratch']
  %s0 = inlined_call_operand.vmem [shape: f32[2,18,18,8], index: 0, kind: input, shape index: {}]
  %s1 = inlined_call_operand.vmem [shape: f32[72,4], index: 1, kind: input, shape index: {}]
  %s2 = inlined_call_operand.vmem [shape: f32[1,4], index: 2, kind: input, shape index: {}]
  %s3 = inlined_call_operand.vmem [shape: f32[2,16,16,4], index: 3, kind: output, shape index: {0}]
  %s4 = inlined_call_operand.vmem [shape: f32[2,1,4], index: 4, kind: output, shape index: {1}]
  %s5 = inlined_call_operand.vmem [shape: f32[2,1,4], index: 5, kind: output, shape index: {2}]
  %6 = xla_tuple %s3, %s4, %s5
  %s7 = sld [smem:[#allocation0]]
  $region61: #{up_block_forward.5} parent=0
    _
  %s9 = ssub.s32 1, %s7
  %s10 = scalar_select 0, %s9, %s7
  loop: start=0, step=1, limit=4
  $region2: #{up_block_forward.5} parent=0 // loop_pre_header
    _
  $region3: #{up_block_forward.5} parent=0 // loop_header
    %s12 = sphi 0, %s16
    %p13 = scmp.ge.s32.totalorder %s12, 4
    %s22 = sphi 0, %s24
    %s25 = sphi 0, %s22
    %s26 = sphi 0, %s25
    %s42 = sphi 0, %s26
    %s46 = sphi 0, %s46
    %s48 = sphi 0, %s46
    %s49 = sphi 0, %s48
    %s63 = sphi 0, %s49
    %s67 = sphi 0, %s67
    %s69 = sphi 0, %s67
    %s70 = sphi 0, %s69
    %s84 = sphi 0, %s70
    %s90 = sphi 0, %s92
    %s93 = sphi 0, %s90
    %s94 = sphi 0, %s93
    %s110 = sphi 0, %s94
    %s116 = sphi 0, %s118
    %s119 = sphi 0, %s116
    %s120 = sphi 0, %s119
    %s136 = sphi 0, %s120
    %s142 = sphi 0, %s144
    %s145 = sphi 0, %s142
    %s146 = sphi 0, %s145
    %s162 = sphi 0, %s146
  $region4: #{up_block_forward.5} parent=0 // loop_header_branch
    %15 = sbr.rel (%p13) target = $region8
  $region5: #{up_block_forward.5} parent=0 // loop_body
    %s17 = ssub.s32 %s12, 1
    %s18 = ssub.s32 %s12, 2
    %s19 = sadd.s32 %s12, 1
    %s20 = ssub.s32 %s12, %s19
    %p21 = scmp.eq.s32.totalorder %s20, 0
    %s23 = sadd.s32 %s22, 1
    %s24 = scalar_select %p21, %s22, %s23
    %p27 = pneg %p21
    %p28 = scmp.eq.s32.totalorder %s12, 1
    %p29 = por %p27, %p28
    %p30 = scmp.ne.s32.totalorder %s22, %s25
    %p31 = scmp.eq.s32.totalorder %s12, 0
    %p32 = por %p30, %p31
    %p33 = scmp.ne.s32.totalorder %s22, %s25
    %p34 = scmp.eq.s32.totalorder %s17, 1
    %p35 = por %p33, %p34
    %p36 = scmp.ne.s32.totalorder %s25, %s26
    %p37 = scmp.eq.s32.totalorder %s17, 0
    %p38 = por %p36, %p37
    %p39 = scmp.ne.s32.totalorder %s25, %s26
    %p40 = scmp.eq.s32.totalorder %s18, 1
    %p41 = por %p39, %p40
    %p43 = scmp.ne.s32.totalorder %s26, %s42
    %p44 = scmp.eq.s32.totalorder %s18, 0
    %p45 = por %p43, %p44
    %s47 = sadd.s32 %s46, 1
    %p50 = scmp.eq.s32.totalorder %s12, 1
    %p51 = scmp.ne.s32.totalorder %s46, %s48
    %p52 = scmp.eq.s32.totalorder %s12, 0
    %p53 = por %p51, %p52
    %p54 = scmp.ne.s32.totalorder %s46, %s48
    %p55 = scmp.eq.s32.totalorder %s17, 1
    %p56 = por %p54, %p55
    %p57 = scmp.ne.s32.totalorder %s48, %s49
    %p58 = scmp.eq.s32.totalorder %s17, 0
    %p59 = por %p57, %p58
    %p60 = scmp.ne.s32.totalorder %s48, %s49
    %p61 = scmp.eq.s32.totalorder %s18, 1
    %p62 = por %p60, %p61
    %p64 = scmp.ne.s32.totalorder %s49, %s63
    %p65 = scmp.eq.s32.totalorder %s18, 0
    %p66 = por %p64, %p65
    %s68 = sadd.s32 %s67, 1
    %p71 = scmp.eq.s32.totalorder %s12, 1
    %p72 = scmp.ne.s32.totalorder %s67, %s69
    %p73 = scmp.eq.s32.totalorder %s12, 0
    %p74 = por %p72, %p73
    %p75 = scmp.ne.s32.totalorder %s67, %s69
    %p76 = scmp.eq.s32.totalorder %s17, 1
    %p77 = por %p75, %p76
    %p78 = scmp.ne.s32.totalorder %s69, %s70
    %p79 = scmp.eq.s32.totalorder %s17, 0
    %p80 = por %p78, %p79
    %p81 = scmp.ne.s32.totalorder %s69, %s70
    %p82 = scmp.eq.s32.totalorder %s18, 1
    %p83 = por %p81, %p82
    %p85 = scmp.ne.s32.totalorder %s70, %s84
    %p86 = scmp.eq.s32.totalorder %s18, 0
    %p87 = por %p85, %p86
    %s88 = ssub.s32 %s12, %s19
    %p89 = scmp.eq.s32.totalorder %s88, 0
    %s91 = sadd.s32 %s90, 1
    %s92 = scalar_select %p89, %s90, %s91
    %p95 = pneg %p89
    %p96 = scmp.eq.s32.totalorder %s12, 1
    %p97 = por %p95, %p96
    %p98 = scmp.ne.s32.totalorder %s90, %s93
    %p99 = scmp.eq.s32.totalorder %s12, 0
    %p100 = por %p98, %p99
    %p101 = scmp.ne.s32.totalorder %s90, %s93
    %p102 = scmp.eq.s32.totalorder %s17, 1
    %p103 = por %p101, %p102
    %p104 = scmp.ne.s32.totalorder %s93, %s94
    %p105 = scmp.eq.s32.totalorder %s17, 0
    %p106 = por %p104, %p105
    %p107 = scmp.ne.s32.totalorder %s93, %s94
    %p108 = scmp.eq.s32.totalorder %s18, 1
    %p109 = por %p107, %p108
    %p111 = scmp.ne.s32.totalorder %s94, %s110
    %p112 = scmp.eq.s32.totalorder %s18, 0
    %p113 = por %p111, %p112
    %s114 = ssub.s32 %s12, %s19
    %p115 = scmp.eq.s32.totalorder %s114, 0
    %s117 = sadd.s32 %s116, 1
    %s118 = scalar_select %p115, %s116, %s117
    %p121 = pneg %p115
    %p122 = scmp.eq.s32.totalorder %s12, 1
    %p123 = por %p121, %p122
    %p124 = scmp.ne.s32.totalorder %s116, %s119
    %p125 = scmp.eq.s32.totalorder %s12, 0
    %p126 = por %p124, %p125
    %p127 = scmp.ne.s32.totalorder %s116, %s119
    %p128 = scmp.eq.s32.totalorder %s17, 1
    %p129 = por %p127, %p128
    %p130 = scmp.ne.s32.totalorder %s119, %s120
    %p131 = scmp.eq.s32.totalorder %s17, 0
    %p132 = por %p130, %p131
    %p133 = scmp.ne.s32.totalorder %s119, %s120
    %p134 = scmp.eq.s32.totalorder %s18, 1
    %p135 = por %p133, %p134
    %p137 = scmp.ne.s32.totalorder %s120, %s136
    %p138 = scmp.eq.s32.totalorder %s18, 0
    %p139 = por %p137, %p138
    %s140 = ssub.s32 %s12, %s19
    %p141 = scmp.eq.s32.totalorder %s140, 0
    %s143 = sadd.s32 %s142, 1
    %s144 = scalar_select %p141, %s142, %s143
    %p147 = pneg %p141
    %p148 = scmp.eq.s32.totalorder %s12, 1
    %p149 = por %p147, %p148
    %p150 = scmp.ne.s32.totalorder %s142, %s145
    %p151 = scmp.eq.s32.totalorder %s12, 0
    %p152 = por %p150, %p151
    %p153 = scmp.ne.s32.totalorder %s142, %s145
    %p154 = scmp.eq.s32.totalorder %s17, 1
    %p155 = por %p153, %p154
    %p156 = scmp.ne.s32.totalorder %s145, %s146
    %p157 = scmp.eq.s32.totalorder %s17, 0
    %p158 = por %p156, %p157
    %p159 = scmp.ne.s32.totalorder %s145, %s146
    %p160 = scmp.eq.s32.totalorder %s18, 1
    %p161 = por %p159, %p160
    %p163 = scmp.ne.s32.totalorder %s146, %s162
    %p164 = scmp.eq.s32.totalorder %s18, 0
    %p165 = por %p163, %p164
    %p166 = scmp.le.s32.totalorder 1, %s12
    %p167 = scmp.lt.s32.totalorder %s12, 3
    %p168 = pnand %p166, %p167
    %p169 = pneg %p168
    // Predicated region
    $region9: #{up_block_forward.5} parent=5 // pred_check
      _
    $region10: #{up_block_forward.5} parent=5 // pred_check_branch
      %171 = sbr.rel (%p168) target = $region12
    $region11: #{up_block_forward.5} parent=5 // pred_region
      %s172 = ssub.s32 %s12, 1
      // Predicated region
      $region13: #{up_block_forward.5} parent=11 // pred_check
        %p173 = pneg %p59
      $region14: #{up_block_forward.5} parent=11 // pred_check_branch
        %175 = sbr.rel (%p173) target = $region16
      $region15: #{up_block_forward.5} parent=11 // pred_region
        _
      $region16: #{up_block_forward.5} parent=11 // pred_fallthru
        _
      // Predicated region
      $region17: #{up_block_forward.5} parent=11 // pred_check
        %p176 = pneg %p80
      $region18: #{up_block_forward.5} parent=11 // pred_check_branch
        %178 = sbr.rel (%p176) target = $region20
      $region19: #{up_block_forward.5} parent=11 // pred_region
        _
      $region20: #{up_block_forward.5} parent=11 // pred_fallthru
        _
    $region12: #{up_block_forward.5} parent=5 // pred_fallthru
      _
    %p179 = scmp.lt.s32.totalorder %s12, 2
    // Predicated region
    $region21: #{up_block_forward.5} parent=5 // pred_check
      %p180 = pneg %p179
    $region22: #{up_block_forward.5} parent=5 // pred_check_branch
      %182 = sbr.rel (%p180) target = $region24
    $region23: #{up_block_forward.5} parent=5 // pred_region
      // Predicated region
      $region25: #{up_block_forward.5} parent=23 // pred_check
        %p183 = pneg %p32
      $region26: #{up_block_forward.5} parent=23 // pred_check_branch
        %185 = sbr.rel (%p183) target = $region28
      $region27: #{up_block_forward.5} parent=23 // pred_region
        %p186 = scmp.lt.s32.totalorder %s12, 1
        %s187 = scalar_select %p186, %s12, 1
        %s188 = smul.addr %s187, 54
        %s189 = smul.addr %s188, 8
        %s190 = scalar_lea.vmem %s0, %s189
      $region28: #{up_block_forward.5} parent=23 // pred_fallthru
        _
    $region24: #{up_block_forward.5} parent=5 // pred_fallthru
      _
    %p191 = scmp.le.s32.totalorder 1, %s12
    %p192 = scmp.lt.s32.totalorder %s12, 3
    %p193 = pnand %p191, %p192
    %p194 = pneg %p193
    // Predicated region
    $region29: #{up_block_forward.5} parent=5 // pred_check
      _
    $region30: #{up_block_forward.5} parent=5 // pred_check_branch
      %196 = sbr.rel (%p193) target = $region32
    $region31: #{up_block_forward.5} parent=5 // pred_region
      %s197 = ssub.s32 %s12, 1
      %p198 = scmp.lt.s32.totalorder %s17, 1
      %s199 = scalar_select %p198, %s17, 1
      %s200 = smul.addr %s199, 54
      %s201 = smul.addr %s200, 8
      %s202 = scalar_lea.vmem %s0, %s201
      %p203 = pneg %p38
      %p204 = pneg %p35
      %p205 = pneg %p59
      %p206 = pneg %p56
      %p207 = pneg %p80
      %p208 = pneg %p77
      %p209 = pneg %p106
      %p210 = pneg %p103
      %p211 = scmp.lt.s32.totalorder %s17, 1
      %s212 = scalar_select %p211, %s17, 1
      %s213 = smul.addr %s212, 32
      %s214 = smul.addr %s213, 8
      %s215 = scalar_lea.vmem %s3, %s214
      %p216 = pneg %p132
      %p217 = pneg %p129
      %p218 = scmp.lt.s32.totalorder %s17, 1
      %s219 = scalar_select %p218, %s17, 1
      %s220 = scalar_lea.vmem %s4, %s219
      %p221 = pneg %p158
      %p222 = pneg %p155
      %p223 = scmp.lt.s32.totalorder %s17, 1
      %s224 = scalar_select %p223, %s17, 1
      %s225 = scalar_lea.vmem %s5, %s224
      %p226 = scmp.lt.s32.totalorder %s17, 1
      %s227 = scalar_select %p226, %s17, 1
      %s228 = smul.addr %s227, 54
      %s229 = smul.addr %s228, 8
      %s230 = scalar_lea.vmem %s0, %s229
      %p231 = scmp.lt.s32.totalorder %s17, 1
      %s232 = scalar_select %p231, %s17, 1
      %s233 = smul.addr %s232, 32
      %s234 = smul.addr %s233, 8
      %s235 = scalar_lea.vmem %s3, %s234
      %p236 = scmp.lt.s32.totalorder %s17, 1
      %s237 = scalar_select %p236, %s17, 1
      %s238 = scalar_lea.vmem %s4, %s237
      %p239 = scmp.lt.s32.totalorder %s17, 1
      %s240 = scalar_select %p239, %s17, 1
      %s241 = scalar_lea.vmem %s5, %s240
      %v242 = vld [vmem:[%s230] sm:$0xff]
      %v243 = vld [vmem:[%s230 + $0x8] sm:$0xff]
      %v244 = vld [vmem:[%s230 + $0x18] sm:$0xff]
      %v245 = vld [vmem:[%s230 + $0x20] sm:$0xff]
      %v246 = vld [vmem:[%s230 + $0x30] sm:$0xff]
      %v247 = vld [vmem:[%s230 + $0x38] sm:$0xff]
      %v248 = vld [vmem:[%s230 + $0x48] sm:$0xff]
      %v249 = vld [vmem:[%s230 + $0x50] sm:$0xff]
      %v250 = vld [vmem:[%s230 + $0x60] sm:$0xff]
      %v251 = vld [vmem:[%s230 + $0x68] sm:$0xff]
      %v252 = vld [vmem:[%s230 + $0x78] sm:$0xff]
      %v253 = vld [vmem:[%s230 + $0x80] sm:$0xff]
      %v254 = vld [vmem:[%s230 + $0x90] sm:$0xff]
      %v255 = vld [vmem:[%s230 + $0x98] sm:$0xff]
      %v256 = vld [vmem:[%s230 + $0xa8] sm:$0xff]
      %v257 = vld [vmem:[%s230 + $0xb0] sm:$0xff]
      %v258 = vld [vmem:[%s230 + $0xc0] sm:$0xff]
      %v259 = vld [vmem:[%s230 + $0xc8] sm:$0xff]
      %v260 = vld [vmem:[%s230 + $0xd8] sm:$0xff]
      %v261 = vld [vmem:[%s230 + $0xe0] sm:$0xff]
      %v262 = vld [vmem:[%s230 + $0xf0] sm:$0xff]
      %v263 = vld [vmem:[%s230 + $0xf8] sm:$0xff]
      %v264 = vld [vmem:[%s230 + $0x108] sm:$0xff]
      %v265 = vld [vmem:[%s230 + $0x110] sm:$0xff]
      %v266 = vld [vmem:[%s230 + $0x120] sm:$0xff]
      %v267 = vld [vmem:[%s230 + $0x128] sm:$0xff]
      %v268 = vld [vmem:[%s230 + $0x138] sm:$0xff]
      %v269 = vld [vmem:[%s230 + $0x140] sm:$0xff]
      %v270 = vld [vmem:[%s230 + $0x150] sm:$0xff]
      %v271 = vld [vmem:[%s230 + $0x158] sm:$0xff]
      %v272 = vld [vmem:[%s230 + $0x168] sm:$0xff]
      %v273 = vld [vmem:[%s230 + $0x170] sm:$0xff]
      %v274 = vld [vmem:[%s230 + $0x1] sm:$0xff]
      %v275 = vld [vmem:[%s230 + $0x9] sm:$0xff]
      %v276 = vld [vmem:[%s230 + $0x19] sm:$0xff]
      %v277 = vld [vmem:[%s230 + $0x21] sm:$0xff]
      %v278 = vld [vmem:[%s230 + $0x31] sm:$0xff]
      %v279 = vld [vmem:[%s230 + $0x39] sm:$0xff]
      %v280 = vld [vmem:[%s230 + $0x49] sm:$0xff]
      %v281 = vld [vmem:[%s230 + $0x51] sm:$0xff]
      %v282 = vld [vmem:[%s230 + $0x61] sm:$0xff]
      %v283 = vld [vmem:[%s230 + $0x69] sm:$0xff]
      %v284 = vld [vmem:[%s230 + $0x79] sm:$0xff]
      %v285 = vld [vmem:[%s230 + $0x81] sm:$0xff]
      %v286 = vld [vmem:[%s230 + $0x91] sm:$0xff]
      %v287 = vld [vmem:[%s230 + $0x99] sm:$0xff]
      %v288 = vld [vmem:[%s230 + $0xa9] sm:$0xff]
      %v289 = vld [vmem:[%s230 + $0xb1] sm:$0xff]
      %v290 = vld [vmem:[%s230 + $0xc1] sm:$0xff]
      %v291 = vld [vmem:[%s230 + $0xc9] sm:$0xff]
      %v292 = vld [vmem:[%s230 + $0xd9] sm:$0xff]
      %v293 = vld [vmem:[%s230 + $0xe1] sm:$0xff]
      %v294 = vld [vmem:[%s230 + $0xf1] sm:$0xff]
      %v295 = vld [vmem:[%s230 + $0xf9] sm:$0xff]
      %v296 = vld [vmem:[%s230 + $0x109] sm:$0xff]
      %v297 = vld [vmem:[%s230 + $0x111] sm:$0xff]
      %v298 = vld [vmem:[%s230 + $0x121] sm:$0xff]
      %v299 = vld [vmem:[%s230 + $0x129] sm:$0xff]
      %v300 = vld [vmem:[%s230 + $0x139] sm:$0xff]
      %v301 = vld [vmem:[%s230 + $0x141] sm:$0xff]
      %v302 = vld [vmem:[%s230 + $0x151] sm:$0xff]
      %v303 = vld [vmem:[%s230 + $0x159] sm:$0xff]
      %v304 = vld [vmem:[%s230 + $0x169] sm:$0xff]
      %v305 = vld [vmem:[%s230 + $0x171] sm:$0xff]
      %v306 = vld [vmem:[%s230 + $0x2] sm:$0xff]
      %v307 = vld [vmem:[%s230 + $0xa] sm:$0xff]
      %v308 = vld [vmem:[%s230 + $0x1a] sm:$0xff]
      %v309 = vld [vmem:[%s230 + $0x22] sm:$0xff]
      %v310 = vld [vmem:[%s230 + $0x32] sm:$0xff]
      %v311 = vld [vmem:[%s230 + $0x3a] sm:$0xff]
      %v312 = vld [vmem:[%s230 + $0x4a] sm:$0xff]
      %v313 = vld [vmem:[%s230 + $0x52] sm:$0xff]
      %v314 = vld [vmem:[%s230 + $0x62] sm:$0xff]
      %v315 = vld [vmem:[%s230 + $0x6a] sm:$0xff]
      %v316 = vld [vmem:[%s230 + $0x7a] sm:$0xff]
      %v317 = vld [vmem:[%s230 + $0x82] sm:$0xff]
      %v318 = vld [vmem:[%s230 + $0x92] sm:$0xff]
      %v319 = vld [vmem:[%s230 + $0x9a] sm:$0xff]
      %v320 = vld [vmem:[%s230 + $0xaa] sm:$0xff]
      %v321 = vld [vmem:[%s230 + $0xb2] sm:$0xff]
      %v322 = vld [vmem:[%s230 + $0xc2] sm:$0xff]
      %v323 = vld [vmem:[%s230 + $0xca] sm:$0xff]
      %v324 = vld [vmem:[%s230 + $0xda] sm:$0xff]
      %v325 = vld [vmem:[%s230 + $0xe2] sm:$0xff]
      %v326 = vld [vmem:[%s230 + $0xf2] sm:$0xff]
      %v327 = vld [vmem:[%s230 + $0xfa] sm:$0xff]
      %v328 = vld [vmem:[%s230 + $0x10a] sm:$0xff]
      %v329 = vld [vmem:[%s230 + $0x112] sm:$0xff]
      %v330 = vld [vmem:[%s230 + $0x122] sm:$0xff]
      %v331 = vld [vmem:[%s230 + $0x12a] sm:$0xff]
      %v332 = vld [vmem:[%s230 + $0x13a] sm:$0xff]
      %v333 = vld [vmem:[%s230 + $0x142] sm:$0xff]
      %v334 = vld [vmem:[%s230 + $0x152] sm:$0xff]
      %v335 = vld [vmem:[%s230 + $0x15a] sm:$0xff]
      %v336 = vld [vmem:[%s230 + $0x16a] sm:$0xff]
      %v337 = vld [vmem:[%s230 + $0x172] sm:$0xff]
      %s338 = scalar_lea.vmem %s230, 24
      %v339 = vld [vmem:[%s338] sm:$0xff]
      %v340 = vld [vmem:[%s338 + $0x8] sm:$0xff]
      %v341 = vld [vmem:[%s338 + $0x18] sm:$0xff]
      %v342 = vld [vmem:[%s338 + $0x20] sm:$0xff]
      %v343 = vld [vmem:[%s338 + $0x30] sm:$0xff]
      %v344 = vld [vmem:[%s338 + $0x38] sm:$0xff]
      %v345 = vld [vmem:[%s338 + $0x48] sm:$0xff]
      %v346 = vld [vmem:[%s338 + $0x50] sm:$0xff]
      %v347 = vld [vmem:[%s338 + $0x60] sm:$0xff]
      %v348 = vld [vmem:[%s338 + $0x68] sm:$0xff]
      %v349 = vld [vmem:[%s338 + $0x78] sm:$0xff]
      %v350 = vld [vmem:[%s338 + $0x80] sm:$0xff]
      %v351 = vld [vmem:[%s338 + $0x90] sm:$0xff]
      %v352 = vld [vmem:[%s338 + $0x98] sm:$0xff]
      %v353 = vld [vmem:[%s338 + $0xa8] sm:$0xff]
      %v354 = vld [vmem:[%s338 + $0xb0] sm:$0xff]
      %v355 = vld [vmem:[%s338 + $0xc0] sm:$0xff]
      %v356 = vld [vmem:[%s338 + $0xc8] sm:$0xff]
      %v357 = vld [vmem:[%s338 + $0xd8] sm:$0xff]
      %v358 = vld [vmem:[%s338 + $0xe0] sm:$0xff]
      %v359 = vld [vmem:[%s338 + $0xf0] sm:$0xff]
      %v360 = vld [vmem:[%s338 + $0xf8] sm:$0xff]
      %v361 = vld [vmem:[%s338 + $0x108] sm:$0xff]
      %v362 = vld [vmem:[%s338 + $0x110] sm:$0xff]
      %v363 = vld [vmem:[%s338 + $0x120] sm:$0xff]
      %v364 = vld [vmem:[%s338 + $0x128] sm:$0xff]
      %v365 = vld [vmem:[%s338 + $0x138] sm:$0xff]
      %v366 = vld [vmem:[%s338 + $0x140] sm:$0xff]
      %v367 = vld [vmem:[%s338 + $0x150] sm:$0xff]
      %v368 = vld [vmem:[%s338 + $0x158] sm:$0xff]
      %v369 = vld [vmem:[%s338 + $0x168] sm:$0xff]
      %v370 = vld [vmem:[%s338 + $0x170] sm:$0xff]
      %v371 = vld [vmem:[%s338 + $0x1] sm:$0xff]
      %v372 = vld [vmem:[%s338 + $0x9] sm:$0xff]
      %v373 = vld [vmem:[%s338 + $0x19] sm:$0xff]
      %v374 = vld [vmem:[%s338 + $0x21] sm:$0xff]
      %v375 = vld [vmem:[%s338 + $0x31] sm:$0xff]
      %v376 = vld [vmem:[%s338 + $0x39] sm:$0xff]
      %v377 = vld [vmem:[%s338 + $0x49] sm:$0xff]
      %v378 = vld [vmem:[%s338 + $0x51] sm:$0xff]
      %v379 = vld [vmem:[%s338 + $0x61] sm:$0xff]
      %v380 = vld [vmem:[%s338 + $0x69] sm:$0xff]
      %v381 = vld [vmem:[%s338 + $0x79] sm:$0xff]
      %v382 = vld [vmem:[%s338 + $0x81] sm:$0xff]
      %v383 = vld [vmem:[%s338 + $0x91] sm:$0xff]
      %v384 = vld [vmem:[%s338 + $0x99] sm:$0xff]
      %v385 = vld [vmem:[%s338 + $0xa9] sm:$0xff]
      %v386 = vld [vmem:[%s338 + $0xb1] sm:$0xff]
      %v387 = vld [vmem:[%s338 + $0xc1] sm:$0xff]
      %v388 = vld [vmem:[%s338 + $0xc9] sm:$0xff]
      %v389 = vld [vmem:[%s338 + $0xd9] sm:$0xff]
      %v390 = vld [vmem:[%s338 + $0xe1] sm:$0xff]
      %v391 = vld [vmem:[%s338 + $0xf1] sm:$0xff]
      %v392 = vld [vmem:[%s338 + $0xf9] sm:$0xff]
      %v393 = vld [vmem:[%s338 + $0x109] sm:$0xff]
      %v394 = vld [vmem:[%s338 + $0x111] sm:$0xff]
      %v395 = vld [vmem:[%s338 + $0x121] sm:$0xff]
      %v396 = vld [vmem:[%s338 + $0x129] sm:$0xff]
      %v397 = vld [vmem:[%s338 + $0x139] sm:$0xff]
      %v398 = vld [vmem:[%s338 + $0x141] sm:$0xff]
      %v399 = vld [vmem:[%s338 + $0x151] sm:$0xff]
      %v400 = vld [vmem:[%s338 + $0x159] sm:$0xff]
      %v401 = vld [vmem:[%s338 + $0x169] sm:$0xff]
      %v402 = vld [vmem:[%s338 + $0x171] sm:$0xff]
      %v403 = vld [vmem:[%s338 + $0x2] sm:$0xff]
      %v404 = vld [vmem:[%s338 + $0xa] sm:$0xff]
      %v405 = vld [vmem:[%s338 + $0x1a] sm:$0xff]
      %v406 = vld [vmem:[%s338 + $0x22] sm:$0xff]
      %v407 = vld [vmem:[%s338 + $0x32] sm:$0xff]
      %v408 = vld [vmem:[%s338 + $0x3a] sm:$0xff]
      %v409 = vld [vmem:[%s338 + $0x4a] sm:$0xff]
      %v410 = vld [vmem:[%s338 + $0x52] sm:$0xff]
      %v411 = vld [vmem:[%s338 + $0x62] sm:$0xff]
      %v412 = vld [vmem:[%s338 + $0x6a] sm:$0xff]
      %v413 = vld [vmem:[%s338 + $0x7a] sm:$0xff]
      %v414 = vld [vmem:[%s338 + $0x82] sm:$0xff]
      %v415 = vld [vmem:[%s338 + $0x92] sm:$0xff]
      %v416 = vld [vmem:[%s338 + $0x9a] sm:$0xff]
      %v417 = vld [vmem:[%s338 + $0xaa] sm:$0xff]
      %v418 = vld [vmem:[%s338 + $0xb2] sm:$0xff]
      %v419 = vld [vmem:[%s338 + $0xc2] sm:$0xff]
      %v420 = vld [vmem:[%s338 + $0xca] sm:$0xff]
      %v421 = vld [vmem:[%s338 + $0xda] sm:$0xff]
      %v422 = vld [vmem:[%s338 + $0xe2] sm:$0xff]
      %v423 = vld [vmem:[%s338 + $0xf2] sm:$0xff]
      %v424 = vld [vmem:[%s338 + $0xfa] sm:$0xff]
      %v425 = vld [vmem:[%s338 + $0x10a] sm:$0xff]
      %v426 = vld [vmem:[%s338 + $0x112] sm:$0xff]
      %v427 = vld [vmem:[%s338 + $0x122] sm:$0xff]
      %v428 = vld [vmem:[%s338 + $0x12a] sm:$0xff]
      %v429 = vld [vmem:[%s338 + $0x13a] sm:$0xff]
      %v430 = vld [vmem:[%s338 + $0x142] sm:$0xff]
      %v431 = vld [vmem:[%s338 + $0x152] sm:$0xff]
      %v432 = vld [vmem:[%s338 + $0x15a] sm:$0xff]
      %v433 = vld [vmem:[%s338 + $0x16a] sm:$0xff]
      %v434 = vld [vmem:[%s338 + $0x172] sm:$0xff]
      %s435 = scalar_lea.vmem %s230, 48
      %v436 = vld [vmem:[%s435] sm:$0xff]
      %v437 = vld [vmem:[%s435 + $0x8] sm:$0xff]
      %v438 = vld [vmem:[%s435 + $0x18] sm:$0xff]
      %v439 = vld [vmem:[%s435 + $0x20] sm:$0xff]
      %v440 = vld [vmem:[%s435 + $0x30] sm:$0xff]
      %v441 = vld [vmem:[%s435 + $0x38] sm:$0xff]
      %v442 = vld [vmem:[%s435 + $0x48] sm:$0xff]
      %v443 = vld [vmem:[%s435 + $0x50] sm:$0xff]
      %v444 = vld [vmem:[%s435 + $0x60] sm:$0xff]
      %v445 = vld [vmem:[%s435 + $0x68] sm:$0xff]
      %v446 = vld [vmem:[%s435 + $0x78] sm:$0xff]
      %v447 = vld [vmem:[%s435 + $0x80] sm:$0xff]
      %v448 = vld [vmem:[%s435 + $0x90] sm:$0xff]
      %v449 = vld [vmem:[%s435 + $0x98] sm:$0xff]
      %v450 = vld [vmem:[%s435 + $0xa8] sm:$0xff]
      %v451 = vld [vmem:[%s435 + $0xb0] sm:$0xff]
      %v452 = vld [vmem:[%s435 + $0xc0] sm:$0xff]
      %v453 = vld [vmem:[%s435 + $0xc8] sm:$0xff]
      %v454 = vld [vmem:[%s435 + $0xd8] sm:$0xff]
      %v455 = vld [vmem:[%s435 + $0xe0] sm:$0xff]
      %v456 = vld [vmem:[%s435 + $0xf0] sm:$0xff]
      %v457 = vld [vmem:[%s435 + $0xf8] sm:$0xff]
      %v458 = vld [vmem:[%s435 + $0x108] sm:$0xff]
      %v459 = vld [vmem:[%s435 + $0x110] sm:$0xff]
      %v460 = vld [vmem:[%s435 + $0x120] sm:$0xff]
      %v461 = vld [vmem:[%s435 + $0x128] sm:$0xff]
      %v462 = vld [vmem:[%s435 + $0x138] sm:$0xff]
      %v463 = vld [vmem:[%s435 + $0x140] sm:$0xff]
      %v464 = vld [vmem:[%s435 + $0x150] sm:$0xff]
      %v465 = vld [vmem:[%s435 + $0x158] sm:$0xff]
      %v466 = vld [vmem:[%s435 + $0x168] sm:$0xff]
      %v467 = vld [vmem:[%s435 + $0x170] sm:$0xff]
      %v468 = vld [vmem:[%s435 + $0x1] sm:$0xff]
      %v469 = vld [vmem:[%s435 + $0x9] sm:$0xff]
      %v470 = vld [vmem:[%s435 + $0x19] sm:$0xff]
      %v471 = vld [vmem:[%s435 + $0x21] sm:$0xff]
      %v472 = vld [vmem:[%s435 + $0x31] sm:$0xff]
      %v473 = vld [vmem:[%s435 + $0x39] sm:$0xff]
      %v474 = vld [vmem:[%s435 + $0x49] sm:$0xff]
      %v475 = vld [vmem:[%s435 + $0x51] sm:$0xff]
      %v476 = vld [vmem:[%s435 + $0x61] sm:$0xff]
      %v477 = vld [vmem:[%s435 + $0x69] sm:$0xff]
      %v478 = vld [vmem:[%s435 + $0x79] sm:$0xff]
      %v479 = vld [vmem:[%s435 + $0x81] sm:$0xff]
      %v480 = vld [vmem:[%s435 + $0x91] sm:$0xff]
      %v481 = vld [vmem:[%s435 + $0x99] sm:$0xff]
      %v482 = vld [vmem:[%s435 + $0xa9] sm:$0xff]
      %v483 = vld [vmem:[%s435 + $0xb1] sm:$0xff]
      %v484 = vld [vmem:[%s435 + $0xc1] sm:$0xff]
      %v485 = vld [vmem:[%s435 + $0xc9] sm:$0xff]
      %v486 = vld [vmem:[%s435 + $0xd9] sm:$0xff]
      %v487 = vld [vmem:[%s435 + $0xe1] sm:$0xff]
      %v488 = vld [vmem:[%s435 + $0xf1] sm:$0xff]
      %v489 = vld [vmem:[%s435 + $0xf9] sm:$0xff]
      %v490 = vld [vmem:[%s435 + $0x109] sm:$0xff]
      %v491 = vld [vmem:[%s435 + $0x111] sm:$0xff]
      %v492 = vld [vmem:[%s435 + $0x121] sm:$0xff]
      %v493 = vld [vmem:[%s435 + $0x129] sm:$0xff]
      %v494 = vld [vmem:[%s435 + $0x139] sm:$0xff]
      %v495 = vld [vmem:[%s435 + $0x141] sm:$0xff]
      %v496 = vld [vmem:[%s435 + $0x151] sm:$0xff]
      %v497 = vld [vmem:[%s435 + $0x159] sm:$0xff]
      %v498 = vld [vmem:[%s435 + $0x169] sm:$0xff]
      %v499 = vld [vmem:[%s435 + $0x171] sm:$0xff]
      %v500 = vld [vmem:[%s435 + $0x2] sm:$0xff]
      %v501 = vld [vmem:[%s435 + $0xa] sm:$0xff]
      %v502 = vld [vmem:[%s435 + $0x1a] sm:$0xff]
      %v503 = vld [vmem:[%s435 + $0x22] sm:$0xff]
      %v504 = vld [vmem:[%s435 + $0x32] sm:$0xff]
      %v505 = vld [vmem:[%s435 + $0x3a] sm:$0xff]
      %v506 = vld [vmem:[%s435 + $0x4a] sm:$0xff]
      %v507 = vld [vmem:[%s435 + $0x52] sm:$0xff]
      %v508 = vld [vmem:[%s435 + $0x62] sm:$0xff]
      %v509 = vld [vmem:[%s435 + $0x6a] sm:$0xff]
      %v510 = vld [vmem:[%s435 + $0x7a] sm:$0xff]
      %v511 = vld [vmem:[%s435 + $0x82] sm:$0xff]
      %v512 = vld [vmem:[%s435 + $0x92] sm:$0xff]
      %v513 = vld [vmem:[%s435 + $0x9a] sm:$0xff]
      %v514 = vld [vmem:[%s435 + $0xaa] sm:$0xff]
      %v515 = vld [vmem:[%s435 + $0xb2] sm:$0xff]
      %v516 = vld [vmem:[%s435 + $0xc2] sm:$0xff]
      %v517 = vld [vmem:[%s435 + $0xca] sm:$0xff]
      %v518 = vld [vmem:[%s435 + $0xda] sm:$0xff]
      %v519 = vld [vmem:[%s435 + $0xe2] sm:$0xff]
      %v520 = vld [vmem:[%s435 + $0xf2] sm:$0xff]
      %v521 = vld [vmem:[%s435 + $0xfa] sm:$0xff]
      %v522 = vld [vmem:[%s435 + $0x10a] sm:$0xff]
      %v523 = vld [vmem:[%s435 + $0x112] sm:$0xff]
      %v524 = vld [vmem:[%s435 + $0x122] sm:$0xff]
      %v525 = vld [vmem:[%s435 + $0x12a] sm:$0xff]
      %v526 = vld [vmem:[%s435 + $0x13a] sm:$0xff]
      %v527 = vld [vmem:[%s435 + $0x142] sm:$0xff]
      %v528 = vld [vmem:[%s435 + $0x152] sm:$0xff]
      %v529 = vld [vmem:[%s435 + $0x15a] sm:$0xff]
      %v530 = vld [vmem:[%s435 + $0x16a] sm:$0xff]
      %v531 = vld [vmem:[%s435 + $0x172] sm:$0xff]
      %564 = vrot.lane.b32.xlu0 %v274, 8
      %v565 = vpop.permute.xlu0 %564
      %566 = vrot.lane.b32.xlu0 %v275, 8
      %v567 = vpop.permute.xlu0 %566
      %568 = vrot.lane.b32.xlu0 %v276, 8
      %v569 = vpop.permute.xlu0 %568
      %570 = vrot.lane.b32.xlu0 %v277, 8
      %v571 = vpop.permute.xlu0 %570
      %572 = vrot.lane.b32.xlu0 %v278, 8
      %v573 = vpop.permute.xlu0 %572
      %574 = vrot.lane.b32.xlu0 %v279, 8
      %v575 = vpop.permute.xlu0 %574
      %576 = vrot.lane.b32.xlu0 %v280, 8
      %v577 = vpop.permute.xlu0 %576
      %578 = vrot.lane.b32.xlu0 %v281, 8
      %v579 = vpop.permute.xlu0 %578
      %580 = vrot.lane.b32.xlu0 %v282, 8
      %v581 = vpop.permute.xlu0 %580
      %582 = vrot.lane.b32.xlu0 %v283, 8
      %v583 = vpop.permute.xlu0 %582
      %584 = vrot.lane.b32.xlu0 %v284, 8
      %v585 = vpop.permute.xlu0 %584
      %586 = vrot.lane.b32.xlu0 %v285, 8
      %v587 = vpop.permute.xlu0 %586
      %588 = vrot.lane.b32.xlu0 %v286, 8
      %v589 = vpop.permute.xlu0 %588
      %590 = vrot.lane.b32.xlu0 %v287, 8
      %v591 = vpop.permute.xlu0 %590
      %592 = vrot.lane.b32.xlu0 %v288, 8
      %v593 = vpop.permute.xlu0 %592
      %594 = vrot.lane.b32.xlu0 %v289, 8
      %v595 = vpop.permute.xlu0 %594
      %596 = vrot.lane.b32.xlu0 %v290, 8
      %v597 = vpop.permute.xlu0 %596
      %598 = vrot.lane.b32.xlu0 %v291, 8
      %v599 = vpop.permute.xlu0 %598
      %600 = vrot.lane.b32.xlu0 %v292, 8
      %v601 = vpop.permute.xlu0 %600
      %602 = vrot.lane.b32.xlu0 %v293, 8
      %v603 = vpop.permute.xlu0 %602
      %604 = vrot.lane.b32.xlu0 %v294, 8
      %v605 = vpop.permute.xlu0 %604
      %606 = vrot.lane.b32.xlu0 %v295, 8
      %v607 = vpop.permute.xlu0 %606
      %608 = vrot.lane.b32.xlu0 %v296, 8
      %v609 = vpop.permute.xlu0 %608
      %610 = vrot.lane.b32.xlu0 %v297, 8
      %v611 = vpop.permute.xlu0 %610
      %612 = vrot.lane.b32.xlu0 %v298, 8
      %v613 = vpop.permute.xlu0 %612
      %614 = vrot.lane.b32.xlu0 %v299, 8
      %v615 = vpop.permute.xlu0 %614
      %616 = vrot.lane.b32.xlu0 %v300, 8
      %v617 = vpop.permute.xlu0 %616
      %618 = vrot.lane.b32.xlu0 %v301, 8
      %v619 = vpop.permute.xlu0 %618
      %620 = vrot.lane.b32.xlu0 %v302, 8
      %v621 = vpop.permute.xlu0 %620
      %622 = vrot.lane.b32.xlu0 %v303, 8
      %v623 = vpop.permute.xlu0 %622
      %624 = vrot.lane.b32.xlu0 %v304, 8
      %v625 = vpop.permute.xlu0 %624
      %626 = vrot.lane.b32.xlu0 %v305, 8
      %v627 = vpop.permute.xlu0 %626
      %692 = vrot.lane.b32.xlu0 %v306, 16
      %v693 = vpop.permute.xlu0 %692
      %694 = vrot.lane.b32.xlu0 %v307, 16
      %v695 = vpop.permute.xlu0 %694
      %696 = vrot.lane.b32.xlu0 %v308, 16
      %v697 = vpop.permute.xlu0 %696
      %698 = vrot.lane.b32.xlu0 %v309, 16
      %v699 = vpop.permute.xlu0 %698
      %700 = vrot.lane.b32.xlu0 %v310, 16
      %v701 = vpop.permute.xlu0 %700
      %702 = vrot.lane.b32.xlu0 %v311, 16
      %v703 = vpop.permute.xlu0 %702
      %704 = vrot.lane.b32.xlu0 %v312, 16
      %v705 = vpop.permute.xlu0 %704
      %706 = vrot.lane.b32.xlu0 %v313, 16
      %v707 = vpop.permute.xlu0 %706
      %708 = vrot.lane.b32.xlu0 %v314, 16
      %v709 = vpop.permute.xlu0 %708
      %710 = vrot.lane.b32.xlu0 %v315, 16
      %v711 = vpop.permute.xlu0 %710
      %712 = vrot.lane.b32.xlu0 %v316, 16
      %v713 = vpop.permute.xlu0 %712
      %714 = vrot.lane.b32.xlu0 %v317, 16
      %v715 = vpop.permute.xlu0 %714
      %716 = vrot.lane.b32.xlu0 %v318, 16
      %v717 = vpop.permute.xlu0 %716
      %718 = vrot.lane.b32.xlu0 %v319, 16
      %v719 = vpop.permute.xlu0 %718
      %720 = vrot.lane.b32.xlu0 %v320, 16
      %v721 = vpop.permute.xlu0 %720
      %722 = vrot.lane.b32.xlu0 %v321, 16
      %v723 = vpop.permute.xlu0 %722
      %724 = vrot.lane.b32.xlu0 %v322, 16
      %v725 = vpop.permute.xlu0 %724
      %726 = vrot.lane.b32.xlu0 %v323, 16
      %v727 = vpop.permute.xlu0 %726
      %728 = vrot.lane.b32.xlu0 %v324, 16
      %v729 = vpop.permute.xlu0 %728
      %730 = vrot.lane.b32.xlu0 %v325, 16
      %v731 = vpop.permute.xlu0 %730
      %732 = vrot.lane.b32.xlu0 %v326, 16
      %v733 = vpop.permute.xlu0 %732
      %734 = vrot.lane.b32.xlu0 %v327, 16
      %v735 = vpop.permute.xlu0 %734
      %736 = vrot.lane.b32.xlu0 %v328, 16
      %v737 = vpop.permute.xlu0 %736
      %738 = vrot.lane.b32.xlu0 %v329, 16
      %v739 = vpop.permute.xlu0 %738
      %740 = vrot.lane.b32.xlu0 %v330, 16
      %v741 = vpop.permute.xlu0 %740
      %742 = vrot.lane.b32.xlu0 %v331, 16
      %v743 = vpop.permute.xlu0 %742
      %744 = vrot.lane.b32.xlu0 %v332, 16
      %v745 = vpop.permute.xlu0 %744
      %746 = vrot.lane.b32.xlu0 %v333, 16
      %v747 = vpop.permute.xlu0 %746
      %748 = vrot.lane.b32.xlu0 %v334, 16
      %v749 = vpop.permute.xlu0 %748
      %750 = vrot.lane.b32.xlu0 %v335, 16
      %v751 = vpop.permute.xlu0 %750
      %752 = vrot.lane.b32.xlu0 %v336, 16
      %v753 = vpop.permute.xlu0 %752
      %754 = vrot.lane.b32.xlu0 %v337, 16
      %v755 = vpop.permute.xlu0 %754
      %820 = vrot.lane.b32.xlu0 %v339, 24
      %v821 = vpop.permute.xlu0 %820
      %822 = vrot.lane.b32.xlu0 %v340, 24
      %v823 = vpop.permute.xlu0 %822
      %824 = vrot.lane.b32.xlu0 %v341, 24
      %v825 = vpop.permute.xlu0 %824
      %826 = vrot.lane.b32.xlu0 %v342, 24
      %v827 = vpop.permute.xlu0 %826
      %828 = vrot.lane.b32.xlu0 %v343, 24
      %v829 = vpop.permute.xlu0 %828
      %830 = vrot.lane.b32.xlu0 %v344, 24
      %v831 = vpop.permute.xlu0 %830
      %832 = vrot.lane.b32.xlu0 %v345, 24
      %v833 = vpop.permute.xlu0 %832
      %834 = vrot.lane.b32.xlu0 %v346, 24
      %v835 = vpop.permute.xlu0 %834
      %836 = vrot.lane.b32.xlu0 %v347, 24
      %v837 = vpop.permute.xlu0 %836
      %838 = vrot.lane.b32.xlu0 %v348, 24
      %v839 = vpop.permute.xlu0 %838
      %840 = vrot.lane.b32.xlu0 %v349, 24
      %v841 = vpop.permute.xlu0 %840
      %842 = vrot.lane.b32.xlu0 %v350, 24
      %v843 = vpop.permute.xlu0 %842
      %844 = vrot.lane.b32.xlu0 %v351, 24
      %v845 = vpop.permute.xlu0 %844
      %846 = vrot.lane.b32.xlu0 %v352, 24
      %v847 = vpop.permute.xlu0 %846
      %848 = vrot.lane.b32.xlu0 %v353, 24
      %v849 = vpop.permute.xlu0 %848
      %850 = vrot.lane.b32.xlu0 %v354, 24
      %v851 = vpop.permute.xlu0 %850
      %852 = vrot.lane.b32.xlu0 %v355, 24
      %v853 = vpop.permute.xlu0 %852
      %854 = vrot.lane.b32.xlu0 %v356, 24
      %v855 = vpop.permute.xlu0 %854
      %856 = vrot.lane.b32.xlu0 %v357, 24
      %v857 = vpop.permute.xlu0 %856
      %858 = vrot.lane.b32.xlu0 %v358, 24
      %v859 = vpop.permute.xlu0 %858
      %860 = vrot.lane.b32.xlu0 %v359, 24
      %v861 = vpop.permute.xlu0 %860
      %862 = vrot.lane.b32.xlu0 %v360, 24
      %v863 = vpop.permute.xlu0 %862
      %864 = vrot.lane.b32.xlu0 %v361, 24
      %v865 = vpop.permute.xlu0 %864
      %866 = vrot.lane.b32.xlu0 %v362, 24
      %v867 = vpop.permute.xlu0 %866
      %868 = vrot.lane.b32.xlu0 %v363, 24
      %v869 = vpop.permute.xlu0 %868
      %870 = vrot.lane.b32.xlu0 %v364, 24
      %v871 = vpop.permute.xlu0 %870
      %872 = vrot.lane.b32.xlu0 %v365, 24
      %v873 = vpop.permute.xlu0 %872
      %874 = vrot.lane.b32.xlu0 %v366, 24
      %v875 = vpop.permute.xlu0 %874
      %876 = vrot.lane.b32.xlu0 %v367, 24
      %v877 = vpop.permute.xlu0 %876
      %878 = vrot.lane.b32.xlu0 %v368, 24
      %v879 = vpop.permute.xlu0 %878
      %880 = vrot.lane.b32.xlu0 %v369, 24
      %v881 = vpop.permute.xlu0 %880
      %882 = vrot.lane.b32.xlu0 %v370, 24
      %v883 = vpop.permute.xlu0 %882
      %948 = vrot.lane.b32.xlu0 %v371, 32
      %v949 = vpop.permute.xlu0 %948
      %950 = vrot.lane.b32.xlu0 %v372, 32
      %v951 = vpop.permute.xlu0 %950
      %952 = vrot.lane.b32.xlu0 %v373, 32
      %v953 = vpop.permute.xlu0 %952
      %954 = vrot.lane.b32.xlu0 %v374, 32
      %v955 = vpop.permute.xlu0 %954
      %956 = vrot.lane.b32.xlu0 %v375, 32
      %v957 = vpop.permute.xlu0 %956
      %958 = vrot.lane.b32.xlu0 %v376, 32
      %v959 = vpop.permute.xlu0 %958
      %960 = vrot.lane.b32.xlu0 %v377, 32
      %v961 = vpop.permute.xlu0 %960
      %962 = vrot.lane.b32.xlu0 %v378, 32
      %v963 = vpop.permute.xlu0 %962
      %964 = vrot.lane.b32.xlu0 %v379, 32
      %v965 = vpop.permute.xlu0 %964
      %966 = vrot.lane.b32.xlu0 %v380, 32
      %v967 = vpop.permute.xlu0 %966
      %968 = vrot.lane.b32.xlu0 %v381, 32
      %v969 = vpop.permute.xlu0 %968
      %970 = vrot.lane.b32.xlu0 %v382, 32
      %v971 = vpop.permute.xlu0 %970
      %972 = vrot.lane.b32.xlu0 %v383, 32
      %v973 = vpop.permute.xlu0 %972
      %974 = vrot.lane.b32.xlu0 %v384, 32
      %v975 = vpop.permute.xlu0 %974
      %976 = vrot.lane.b32.xlu0 %v385, 32
      %v977 = vpop.permute.xlu0 %976
      %978 = vrot.lane.b32.xlu0 %v386, 32
      %v979 = vpop.permute.xlu0 %978
      %980 = vrot.lane.b32.xlu0 %v387, 32
      %v981 = vpop.permute.xlu0 %980
      %982 = vrot.lane.b32.xlu0 %v388, 32
      %v983 = vpop.permute.xlu0 %982
      %984 = vrot.lane.b32.xlu0 %v389, 32
      %v985 = vpop.permute.xlu0 %984
      %986 = vrot.lane.b32.xlu0 %v390, 32
      %v987 = vpop.permute.xlu0 %986
      %988 = vrot.lane.b32.xlu0 %v391, 32
      %v989 = vpop.permute.xlu0 %988
      %990 = vrot.lane.b32.xlu0 %v392, 32
      %v991 = vpop.permute.xlu0 %990
      %992 = vrot.lane.b32.xlu0 %v393, 32
      %v993 = vpop.permute.xlu0 %992
      %994 = vrot.lane.b32.xlu0 %v394, 32
      %v995 = vpop.permute.xlu0 %994
      %996 = vrot.lane.b32.xlu0 %v395, 32
      %v997 = vpop.permute.xlu0 %996
      %998 = vrot.lane.b32.xlu0 %v396, 32
      %v999 = vpop.permute.xlu0 %998
      %1000 = vrot.lane.b32.xlu0 %v397, 32
      %v1001 = vpop.permute.xlu0 %1000
      %1002 = vrot.lane.b32.xlu0 %v398, 32
      %v1003 = vpop.permute.xlu0 %1002
      %1004 = vrot.lane.b32.xlu0 %v399, 32
      %v1005 = vpop.permute.xlu0 %1004
      %1006 = vrot.lane.b32.xlu0 %v400, 32
      %v1007 = vpop.permute.xlu0 %1006
      %1008 = vrot.lane.b32.xlu0 %v401, 32
      %v1009 = vpop.permute.xlu0 %1008
      %1010 = vrot.lane.b32.xlu0 %v402, 32
      %v1011 = vpop.permute.xlu0 %1010
      %1076 = vrot.lane.b32.xlu0 %v403, 40
      %v1077 = vpop.permute.xlu0 %1076
      %1078 = vrot.lane.b32.xlu0 %v404, 40
      %v1079 = vpop.permute.xlu0 %1078
      %1080 = vrot.lane.b32.xlu0 %v405, 40
      %v1081 = vpop.permute.xlu0 %1080
      %1082 = vrot.lane.b32.xlu0 %v406, 40
      %v1083 = vpop.permute.xlu0 %1082
      %1084 = vrot.lane.b32.xlu0 %v407, 40
      %v1085 = vpop.permute.xlu0 %1084
      %1086 = vrot.lane.b32.xlu0 %v408, 40
      %v1087 = vpop.permute.xlu0 %1086
      %1088 = vrot.lane.b32.xlu0 %v409, 40
      %v1089 = vpop.permute.xlu0 %1088
      %1090 = vrot.lane.b32.xlu0 %v410, 40
      %v1091 = vpop.permute.xlu0 %1090
      %1092 = vrot.lane.b32.xlu0 %v411, 40
      %v1093 = vpop.permute.xlu0 %1092
      %1094 = vrot.lane.b32.xlu0 %v412, 40
      %v1095 = vpop.permute.xlu0 %1094
      %1096 = vrot.lane.b32.xlu0 %v413, 40
      %v1097 = vpop.permute.xlu0 %1096
      %1098 = vrot.lane.b32.xlu0 %v414, 40
      %v1099 = vpop.permute.xlu0 %1098
      %1100 = vrot.lane.b32.xlu0 %v415, 40
      %v1101 = vpop.permute.xlu0 %1100
      %1102 = vrot.lane.b32.xlu0 %v416, 40
      %v1103 = vpop.permute.xlu0 %1102
      %1104 = vrot.lane.b32.xlu0 %v417, 40
      %v1105 = vpop.permute.xlu0 %1104
      %1106 = vrot.lane.b32.xlu0 %v418, 40
      %v1107 = vpop.permute.xlu0 %1106
      %1108 = vrot.lane.b32.xlu0 %v419, 40
      %v1109 = vpop.permute.xlu0 %1108
      %1110 = vrot.lane.b32.xlu0 %v420, 40
      %v1111 = vpop.permute.xlu0 %1110
      %1112 = vrot.lane.b32.xlu0 %v421, 40
      %v1113 = vpop.permute.xlu0 %1112
      %1114 = vrot.lane.b32.xlu0 %v422, 40
      %v1115 = vpop.permute.xlu0 %1114
      %1116 = vrot.lane.b32.xlu0 %v423, 40
      %v1117 = vpop.permute.xlu0 %1116
      %1118 = vrot.lane.b32.xlu0 %v424, 40
      %v1119 = vpop.permute.xlu0 %1118
      %1120 = vrot.lane.b32.xlu0 %v425, 40
      %v1121 = vpop.permute.xlu0 %1120
      %1122 = vrot.lane.b32.xlu0 %v426, 40
      %v1123 = vpop.permute.xlu0 %1122
      %1124 = vrot.lane.b32.xlu0 %v427, 40
      %v1125 = vpop.permute.xlu0 %1124
      %1126 = vrot.lane.b32.xlu0 %v428, 40
      %v1127 = vpop.permute.xlu0 %1126
      %1128 = vrot.lane.b32.xlu0 %v429, 40
      %v1129 = vpop.permute.xlu0 %1128
      %1130 = vrot.lane.b32.xlu0 %v430, 40
      %v1131 = vpop.permute.xlu0 %1130
      %1132 = vrot.lane.b32.xlu0 %v431, 40
      %v1133 = vpop.permute.xlu0 %1132
      %1134 = vrot.lane.b32.xlu0 %v432, 40
      %v1135 = vpop.permute.xlu0 %1134
      %1136 = vrot.lane.b32.xlu0 %v433, 40
      %v1137 = vpop.permute.xlu0 %1136
      %1138 = vrot.lane.b32.xlu0 %v434, 40
      %v1139 = vpop.permute.xlu0 %1138
      %1204 = vrot.lane.b32.xlu0 %v436, 48
      %v1205 = vpop.permute.xlu0 %1204
      %1206 = vrot.lane.b32.xlu0 %v437, 48
      %v1207 = vpop.permute.xlu0 %1206
      %1208 = vrot.lane.b32.xlu0 %v438, 48
      %v1209 = vpop.permute.xlu0 %1208
      %1210 = vrot.lane.b32.xlu0 %v439, 48
      %v1211 = vpop.permute.xlu0 %1210
      %1212 = vrot.lane.b32.xlu0 %v440, 48
      %v1213 = vpop.permute.xlu0 %1212
      %1214 = vrot.lane.b32.xlu0 %v441, 48
      %v1215 = vpop.permute.xlu0 %1214
      %1216 = vrot.lane.b32.xlu0 %v442, 48
      %v1217 = vpop.permute.xlu0 %1216
      %1218 = vrot.lane.b32.xlu0 %v443, 48
      %v1219 = vpop.permute.xlu0 %1218
      %1220 = vrot.lane.b32.xlu0 %v444, 48
      %v1221 = vpop.permute.xlu0 %1220
      %1222 = vrot.lane.b32.xlu0 %v445, 48
      %v1223 = vpop.permute.xlu0 %1222
      %1224 = vrot.lane.b32.xlu0 %v446, 48
      %v1225 = vpop.permute.xlu0 %1224
      %1226 = vrot.lane.b32.xlu0 %v447, 48
      %v1227 = vpop.permute.xlu0 %1226
      %1228 = vrot.lane.b32.xlu0 %v448, 48
      %v1229 = vpop.permute.xlu0 %1228
      %1230 = vrot.lane.b32.xlu0 %v449, 48
      %v1231 = vpop.permute.xlu0 %1230
      %1232 = vrot.lane.b32.xlu0 %v450, 48
      %v1233 = vpop.permute.xlu0 %1232
      %1234 = vrot.lane.b32.xlu0 %v451, 48
      %v1235 = vpop.permute.xlu0 %1234
      %1236 = vrot.lane.b32.xlu0 %v452, 48
      %v1237 = vpop.permute.xlu0 %1236
      %1238 = vrot.lane.b32.xlu0 %v453, 48
      %v1239 = vpop.permute.xlu0 %1238
      %1240 = vrot.lane.b32.xlu0 %v454, 48
      %v1241 = vpop.permute.xlu0 %1240
      %1242 = vrot.lane.b32.xlu0 %v455, 48
      %v1243 = vpop.permute.xlu0 %1242
      %1244 = vrot.lane.b32.xlu0 %v456, 48
      %v1245 = vpop.permute.xlu0 %1244
      %1246 = vrot.lane.b32.xlu0 %v457, 48
      %v1247 = vpop.permute.xlu0 %1246
      %1248 = vrot.lane.b32.xlu0 %v458, 48
      %v1249 = vpop.permute.xlu0 %1248
      %1250 = vrot.lane.b32.xlu0 %v459, 48
      %v1251 = vpop.permute.xlu0 %1250
      %1252 = vrot.lane.b32.xlu0 %v460, 48
      %v1253 = vpop.permute.xlu0 %1252
      %1254 = vrot.lane.b32.xlu0 %v461, 48
      %v1255 = vpop.permute.xlu0 %1254
      %1256 = vrot.lane.b32.xlu0 %v462, 48
      %v1257 = vpop.permute.xlu0 %1256
      %1258 = vrot.lane.b32.xlu0 %v463, 48
      %v1259 = vpop.permute.xlu0 %1258
      %1260 = vrot.lane.b32.xlu0 %v464, 48
      %v1261 = vpop.permute.xlu0 %1260
      %1262 = vrot.lane.b32.xlu0 %v465, 48
      %v1263 = vpop.permute.xlu0 %1262
      %1264 = vrot.lane.b32.xlu0 %v466, 48
      %v1265 = vpop.permute.xlu0 %1264
      %1266 = vrot.lane.b32.xlu0 %v467, 48
      %v1267 = vpop.permute.xlu0 %1266
      %1332 = vrot.lane.b32.xlu0 %v468, 56
      %v1333 = vpop.permute.xlu0 %1332
      %1334 = vrot.lane.b32.xlu0 %v469, 56
      %v1335 = vpop.permute.xlu0 %1334
      %1336 = vrot.lane.b32.xlu0 %v470, 56
      %v1337 = vpop.permute.xlu0 %1336
      %1338 = vrot.lane.b32.xlu0 %v471, 56
      %v1339 = vpop.permute.xlu0 %1338
      %1340 = vrot.lane.b32.xlu0 %v472, 56
      %v1341 = vpop.permute.xlu0 %1340
      %1342 = vrot.lane.b32.xlu0 %v473, 56
      %v1343 = vpop.permute.xlu0 %1342
      %1344 = vrot.lane.b32.xlu0 %v474, 56
      %v1345 = vpop.permute.xlu0 %1344
      %1346 = vrot.lane.b32.xlu0 %v475, 56
      %v1347 = vpop.permute.xlu0 %1346
      %1348 = vrot.lane.b32.xlu0 %v476, 56
      %v1349 = vpop.permute.xlu0 %1348
      %1350 = vrot.lane.b32.xlu0 %v477, 56
      %v1351 = vpop.permute.xlu0 %1350
      %1352 = vrot.lane.b32.xlu0 %v478, 56
      %v1353 = vpop.permute.xlu0 %1352
      %1354 = vrot.lane.b32.xlu0 %v479, 56
      %v1355 = vpop.permute.xlu0 %1354
      %1356 = vrot.lane.b32.xlu0 %v480, 56
      %v1357 = vpop.permute.xlu0 %1356
      %1358 = vrot.lane.b32.xlu0 %v481, 56
      %v1359 = vpop.permute.xlu0 %1358
      %1360 = vrot.lane.b32.xlu0 %v482, 56
      %v1361 = vpop.permute.xlu0 %1360
      %1362 = vrot.lane.b32.xlu0 %v483, 56
      %v1363 = vpop.permute.xlu0 %1362
      %1364 = vrot.lane.b32.xlu0 %v484, 56
      %v1365 = vpop.permute.xlu0 %1364
      %1366 = vrot.lane.b32.xlu0 %v485, 56
      %v1367 = vpop.permute.xlu0 %1366
      %1368 = vrot.lane.b32.xlu0 %v486, 56
      %v1369 = vpop.permute.xlu0 %1368
      %1370 = vrot.lane.b32.xlu0 %v487, 56
      %v1371 = vpop.permute.xlu0 %1370
      %1372 = vrot.lane.b32.xlu0 %v488, 56
      %v1373 = vpop.permute.xlu0 %1372
      %1374 = vrot.lane.b32.xlu0 %v489, 56
      %v1375 = vpop.permute.xlu0 %1374
      %1376 = vrot.lane.b32.xlu0 %v490, 56
      %v1377 = vpop.permute.xlu0 %1376
      %1378 = vrot.lane.b32.xlu0 %v491, 56
      %v1379 = vpop.permute.xlu0 %1378
      %1380 = vrot.lane.b32.xlu0 %v492, 56
      %v1381 = vpop.permute.xlu0 %1380
      %1382 = vrot.lane.b32.xlu0 %v493, 56
      %v1383 = vpop.permute.xlu0 %1382
      %1384 = vrot.lane.b32.xlu0 %v494, 56
      %v1385 = vpop.permute.xlu0 %1384
      %1386 = vrot.lane.b32.xlu0 %v495, 56
      %v1387 = vpop.permute.xlu0 %1386
      %1388 = vrot.lane.b32.xlu0 %v496, 56
      %v1389 = vpop.permute.xlu0 %1388
      %1390 = vrot.lane.b32.xlu0 %v497, 56
      %v1391 = vpop.permute.xlu0 %1390
      %1392 = vrot.lane.b32.xlu0 %v498, 56
      %v1393 = vpop.permute.xlu0 %1392
      %1394 = vrot.lane.b32.xlu0 %v499, 56
      %v1395 = vpop.permute.xlu0 %1394
      %1460 = vrot.lane.b32.xlu0 %v500, 64
      %v1461 = vpop.permute.xlu0 %1460
      %1462 = vrot.lane.b32.xlu0 %v501, 64
      %v1463 = vpop.permute.xlu0 %1462
      %1464 = vrot.lane.b32.xlu0 %v502, 64
      %v1465 = vpop.permute.xlu0 %1464
      %1466 = vrot.lane.b32.xlu0 %v503, 64
      %v1467 = vpop.permute.xlu0 %1466
      %1468 = vrot.lane.b32.xlu0 %v504, 64
      %v1469 = vpop.permute.xlu0 %1468
      %1470 = vrot.lane.b32.xlu0 %v505, 64
      %v1471 = vpop.permute.xlu0 %1470
      %1472 = vrot.lane.b32.xlu0 %v506, 64
      %v1473 = vpop.permute.xlu0 %1472
      %1474 = vrot.lane.b32.xlu0 %v507, 64
      %v1475 = vpop.permute.xlu0 %1474
      %1476 = vrot.lane.b32.xlu0 %v508, 64
      %v1477 = vpop.permute.xlu0 %1476
      %1478 = vrot.lane.b32.xlu0 %v509, 64
      %v1479 = vpop.permute.xlu0 %1478
      %1480 = vrot.lane.b32.xlu0 %v510, 64
      %v1481 = vpop.permute.xlu0 %1480
      %1482 = vrot.lane.b32.xlu0 %v511, 64
      %v1483 = vpop.permute.xlu0 %1482
      %1484 = vrot.lane.b32.xlu0 %v512, 64
      %v1485 = vpop.permute.xlu0 %1484
      %1486 = vrot.lane.b32.xlu0 %v513, 64
      %v1487 = vpop.permute.xlu0 %1486
      %1488 = vrot.lane.b32.xlu0 %v514, 64
      %v1489 = vpop.permute.xlu0 %1488
      %1490 = vrot.lane.b32.xlu0 %v515, 64
      %v1491 = vpop.permute.xlu0 %1490
      %1492 = vrot.lane.b32.xlu0 %v516, 64
      %v1493 = vpop.permute.xlu0 %1492
      %1494 = vrot.lane.b32.xlu0 %v517, 64
      %v1495 = vpop.permute.xlu0 %1494
      %1496 = vrot.lane.b32.xlu0 %v518, 64
      %v1497 = vpop.permute.xlu0 %1496
      %1498 = vrot.lane.b32.xlu0 %v519, 64
      %v1499 = vpop.permute.xlu0 %1498
      %1500 = vrot.lane.b32.xlu0 %v520, 64
      %v1501 = vpop.permute.xlu0 %1500
      %1502 = vrot.lane.b32.xlu0 %v521, 64
      %v1503 = vpop.permute.xlu0 %1502
      %1504 = vrot.lane.b32.xlu0 %v522, 64
      %v1505 = vpop.permute.xlu0 %1504
      %1506 = vrot.lane.b32.xlu0 %v523, 64
      %v1507 = vpop.permute.xlu0 %1506
      %1508 = vrot.lane.b32.xlu0 %v524, 64
      %v1509 = vpop.permute.xlu0 %1508
      %1510 = vrot.lane.b32.xlu0 %v525, 64
      %v1511 = vpop.permute.xlu0 %1510
      %1512 = vrot.lane.b32.xlu0 %v526, 64
      %v1513 = vpop.permute.xlu0 %1512
      %1514 = vrot.lane.b32.xlu0 %v527, 64
      %v1515 = vpop.permute.xlu0 %1514
      %1516 = vrot.lane.b32.xlu0 %v528, 64
      %v1517 = vpop.permute.xlu0 %1516
      %1518 = vrot.lane.b32.xlu0 %v529, 64
      %v1519 = vpop.permute.xlu0 %1518
      %1520 = vrot.lane.b32.xlu0 %v530, 64
      %v1521 = vpop.permute.xlu0 %1520
      %1522 = vrot.lane.b32.xlu0 %v531, 64
      %v1523 = vpop.permute.xlu0 %1522
      %vm1556 = vcmask 64512
      %v1557 = vsel %vm1556, %v242, %v565
      %v1558 = vsel %vm1556, %v243, %v567
      %v1559 = vsel %vm1556, %v244, %v569
      %v1560 = vsel %vm1556, %v245, %v571
      %v1561 = vsel %vm1556, %v246, %v573
      %v1562 = vsel %vm1556, %v247, %v575
      %v1563 = vsel %vm1556, %v248, %v577
      %v1564 = vsel %vm1556, %v249, %v579
      %v1565 = vsel %vm1556, %v250, %v581
      %v1566 = vsel %vm1556, %v251, %v583
      %v1567 = vsel %vm1556, %v252, %v585
      %v1568 = vsel %vm1556, %v253, %v587
      %v1569 = vsel %vm1556, %v254, %v589
      %v1570 = vsel %vm1556, %v255, %v591
      %v1571 = vsel %vm1556, %v256, %v593
      %v1572 = vsel %vm1556, %v257, %v595
      %v1573 = vsel %vm1556, %v258, %v597
      %v1574 = vsel %vm1556, %v259, %v599
      %v1575 = vsel %vm1556, %v260, %v601
      %v1576 = vsel %vm1556, %v261, %v603
      %v1577 = vsel %vm1556, %v262, %v605
      %v1578 = vsel %vm1556, %v263, %v607
      %v1579 = vsel %vm1556, %v264, %v609
      %v1580 = vsel %vm1556, %v265, %v611
      %v1581 = vsel %vm1556, %v266, %v613
      %v1582 = vsel %vm1556, %v267, %v615
      %v1583 = vsel %vm1556, %v268, %v617
      %v1584 = vsel %vm1556, %v269, %v619
      %v1585 = vsel %vm1556, %v270, %v621
      %v1586 = vsel %vm1556, %v271, %v623
      %v1587 = vsel %vm1556, %v272, %v625
      %v1588 = vsel %vm1556, %v273, %v627
      %vm1589 = vcmask 130048
      %v1590 = vsel %vm1589, %v1557, %v693
      %v1591 = vsel %vm1589, %v1558, %v695
      %v1592 = vsel %vm1589, %v1559, %v697
      %v1593 = vsel %vm1589, %v1560, %v699
      %v1594 = vsel %vm1589, %v1561, %v701
      %v1595 = vsel %vm1589, %v1562, %v703
      %v1596 = vsel %vm1589, %v1563, %v705
      %v1597 = vsel %vm1589, %v1564, %v707
      %v1598 = vsel %vm1589, %v1565, %v709
      %v1599 = vsel %vm1589, %v1566, %v711
      %v1600 = vsel %vm1589, %v1567, %v713
      %v1601 = vsel %vm1589, %v1568, %v715
      %v1602 = vsel %vm1589, %v1569, %v717
      %v1603 = vsel %vm1589, %v1570, %v719
      %v1604 = vsel %vm1589, %v1571, %v721
      %v1605 = vsel %vm1589, %v1572, %v723
      %v1606 = vsel %vm1589, %v1573, %v725
      %v1607 = vsel %vm1589, %v1574, %v727
      %v1608 = vsel %vm1589, %v1575, %v729
      %v1609 = vsel %vm1589, %v1576, %v731
      %v1610 = vsel %vm1589, %v1577, %v733
      %v1611 = vsel %vm1589, %v1578, %v735
      %v1612 = vsel %vm1589, %v1579, %v737
      %v1613 = vsel %vm1589, %v1580, %v739
      %v1614 = vsel %vm1589, %v1581, %v741
      %v1615 = vsel %vm1589, %v1582, %v743
      %v1616 = vsel %vm1589, %v1583, %v745
      %v1617 = vsel %vm1589, %v1584, %v747
      %v1618 = vsel %vm1589, %v1585, %v749
      %v1619 = vsel %vm1589, %v1586, %v751
      %v1620 = vsel %vm1589, %v1587, %v753
      %v1621 = vsel %vm1589, %v1588, %v755
      %vm1622 = vcmask 195584
      %v1623 = vsel %vm1622, %v1590, %v821
      %v1624 = vsel %vm1622, %v1591, %v823
      %v1625 = vsel %vm1622, %v1592, %v825
      %v1626 = vsel %vm1622, %v1593, %v827
      %v1627 = vsel %vm1622, %v1594, %v829
      %v1628 = vsel %vm1622, %v1595, %v831
      %v1629 = vsel %vm1622, %v1596, %v833
      %v1630 = vsel %vm1622, %v1597, %v835
      %v1631 = vsel %vm1622, %v1598, %v837
      %v1632 = vsel %vm1622, %v1599, %v839
      %v1633 = vsel %vm1622, %v1600, %v841
      %v1634 = vsel %vm1622, %v1601, %v843
      %v1635 = vsel %vm1622, %v1602, %v845
      %v1636 = vsel %vm1622, %v1603, %v847
      %v1637 = vsel %vm1622, %v1604, %v849
      %v1638 = vsel %vm1622, %v1605, %v851
      %v1639 = vsel %vm1622, %v1606, %v853
      %v1640 = vsel %vm1622, %v1607, %v855
      %v1641 = vsel %vm1622, %v1608, %v857
      %v1642 = vsel %vm1622, %v1609, %v859
      %v1643 = vsel %vm1622, %v1610, %v861
      %v1644 = vsel %vm1622, %v1611, %v863
      %v1645 = vsel %vm1622, %v1612, %v865
      %v1646 = vsel %vm1622, %v1613, %v867
      %v1647 = vsel %vm1622, %v1614, %v869
      %v1648 = vsel %vm1622, %v1615, %v871
      %v1649 = vsel %vm1622, %v1616, %v873
      %v1650 = vsel %vm1622, %v1617, %v875
      %v1651 = vsel %vm1622, %v1618, %v877
      %v1652 = vsel %vm1622, %v1619, %v879
      %v1653 = vsel %vm1622, %v1620, %v881
      %v1654 = vsel %vm1622, %v1621, %v883
      %vm1655 = vcmask 261120
      %v1656 = vsel %vm1655, %v1623, %v949
      %v1657 = vsel %vm1655, %v1624, %v951
      %v1658 = vsel %vm1655, %v1625, %v953
      %v1659 = vsel %vm1655, %v1626, %v955
      %v1660 = vsel %vm1655, %v1627, %v957
      %v1661 = vsel %vm1655, %v1628, %v959
      %v1662 = vsel %vm1655, %v1629, %v961
      %v1663 = vsel %vm1655, %v1630, %v963
      %v1664 = vsel %vm1655, %v1631, %v965
      %v1665 = vsel %vm1655, %v1632, %v967
      %v1666 = vsel %vm1655, %v1633, %v969
      %v1667 = vsel %vm1655, %v1634, %v971
      %v1668 = vsel %vm1655, %v1635, %v973
      %v1669 = vsel %vm1655, %v1636, %v975
      %v1670 = vsel %vm1655, %v1637, %v977
      %v1671 = vsel %vm1655, %v1638, %v979
      %v1672 = vsel %vm1655, %v1639, %v981
      %v1673 = vsel %vm1655, %v1640, %v983
      %v1674 = vsel %vm1655, %v1641, %v985
      %v1675 = vsel %vm1655, %v1642, %v987
      %v1676 = vsel %vm1655, %v1643, %v989
      %v1677 = vsel %vm1655, %v1644, %v991
      %v1678 = vsel %vm1655, %v1645, %v993
      %v1679 = vsel %vm1655, %v1646, %v995
      %v1680 = vsel %vm1655, %v1647, %v997
      %v1681 = vsel %vm1655, %v1648, %v999
      %v1682 = vsel %vm1655, %v1649, %v1001
      %v1683 = vsel %vm1655, %v1650, %v1003
      %v1684 = vsel %vm1655, %v1651, %v1005
      %v1685 = vsel %vm1655, %v1652, %v1007
      %v1686 = vsel %vm1655, %v1653, %v1009
      %v1687 = vsel %vm1655, %v1654, %v1011
      %vm1688 = vcmask 326656
      %v1689 = vsel %vm1688, %v1656, %v1077
      %v1690 = vsel %vm1688, %v1657, %v1079
      %v1691 = vsel %vm1688, %v1658, %v1081
      %v1692 = vsel %vm1688, %v1659, %v1083
      %v1693 = vsel %vm1688, %v1660, %v1085
      %v1694 = vsel %vm1688, %v1661, %v1087
      %v1695 = vsel %vm1688, %v1662, %v1089
      %v1696 = vsel %vm1688, %v1663, %v1091
      %v1697 = vsel %vm1688, %v1664, %v1093
      %v1698 = vsel %vm1688, %v1665, %v1095
      %v1699 = vsel %vm1688, %v1666, %v1097
      %v1700 = vsel %vm1688, %v1667, %v1099
      %v1701 = vsel %vm1688, %v1668, %v1101
      %v1702 = vsel %vm1688, %v1669, %v1103
      %v1703 = vsel %vm1688, %v1670, %v1105
      %v1704 = vsel %vm1688, %v1671, %v1107
      %v1705 = vsel %vm1688, %v1672, %v1109
      %v1706 = vsel %vm1688, %v1673, %v1111
      %v1707 = vsel %vm1688, %v1674, %v1113
      %v1708 = vsel %vm1688, %v1675, %v1115
      %v1709 = vsel %vm1688, %v1676, %v1117
      %v1710 = vsel %vm1688, %v1677, %v1119
      %v1711 = vsel %vm1688, %v1678, %v1121
      %v1712 = vsel %vm1688, %v1679, %v1123
      %v1713 = vsel %vm1688, %v1680, %v1125
      %v1714 = vsel %vm1688, %v1681, %v1127
      %v1715 = vsel %vm1688, %v1682, %v1129
      %v1716 = vsel %vm1688, %v1683, %v1131
      %v1717 = vsel %vm1688, %v1684, %v1133
      %v1718 = vsel %vm1688, %v1685, %v1135
      %v1719 = vsel %vm1688, %v1686, %v1137
      %v1720 = vsel %vm1688, %v1687, %v1139
      %vm1721 = vcmask 392192
      %v1722 = vsel %vm1721, %v1689, %v1205
      %v1723 = vsel %vm1721, %v1690, %v1207
      %v1724 = vsel %vm1721, %v1691, %v1209
      %v1725 = vsel %vm1721, %v1692, %v1211
      %v1726 = vsel %vm1721, %v1693, %v1213
      %v1727 = vsel %vm1721, %v1694, %v1215
      %v1728 = vsel %vm1721, %v1695, %v1217
      %v1729 = vsel %vm1721, %v1696, %v1219
      %v1730 = vsel %vm1721, %v1697, %v1221
      %v1731 = vsel %vm1721, %v1698, %v1223
      %v1732 = vsel %vm1721, %v1699, %v1225
      %v1733 = vsel %vm1721, %v1700, %v1227
      %v1734 = vsel %vm1721, %v1701, %v1229
      %v1735 = vsel %vm1721, %v1702, %v1231
      %v1736 = vsel %vm1721, %v1703, %v1233
      %v1737 = vsel %vm1721, %v1704, %v1235
      %v1738 = vsel %vm1721, %v1705, %v1237
      %v1739 = vsel %vm1721, %v1706, %v1239
      %v1740 = vsel %vm1721, %v1707, %v1241
      %v1741 = vsel %vm1721, %v1708, %v1243
      %v1742 = vsel %vm1721, %v1709, %v1245
      %v1743 = vsel %vm1721, %v1710, %v1247
      %v1744 = vsel %vm1721, %v1711, %v1249
      %v1745 = vsel %vm1721, %v1712, %v1251
      %v1746 = vsel %vm1721, %v1713, %v1253
      %v1747 = vsel %vm1721, %v1714, %v1255
      %v1748 = vsel %vm1721, %v1715, %v1257
      %v1749 = vsel %vm1721, %v1716, %v1259
      %v1750 = vsel %vm1721, %v1717, %v1261
      %v1751 = vsel %vm1721, %v1718, %v1263
      %v1752 = vsel %vm1721, %v1719, %v1265
      %v1753 = vsel %vm1721, %v1720, %v1267
      %vm1754 = vcmask 457728
      %v1755 = vsel %vm1754, %v1722, %v1333
      %v1756 = vsel %vm1754, %v1723, %v1335
      %v1757 = vsel %vm1754, %v1724, %v1337
      %v1758 = vsel %vm1754, %v1725, %v1339
      %v1759 = vsel %vm1754, %v1726, %v1341
      %v1760 = vsel %vm1754, %v1727, %v1343
      %v1761 = vsel %vm1754, %v1728, %v1345
      %v1762 = vsel %vm1754, %v1729, %v1347
      %v1763 = vsel %vm1754, %v1730, %v1349
      %v1764 = vsel %vm1754, %v1731, %v1351
      %v1765 = vsel %vm1754, %v1732, %v1353
      %v1766 = vsel %vm1754, %v1733, %v1355
      %v1767 = vsel %vm1754, %v1734, %v1357
      %v1768 = vsel %vm1754, %v1735, %v1359
      %v1769 = vsel %vm1754, %v1736, %v1361
      %v1770 = vsel %vm1754, %v1737, %v1363
      %v1771 = vsel %vm1754, %v1738, %v1365
      %v1772 = vsel %vm1754, %v1739, %v1367
      %v1773 = vsel %vm1754, %v1740, %v1369
      %v1774 = vsel %vm1754, %v1741, %v1371
      %v1775 = vsel %vm1754, %v1742, %v1373
      %v1776 = vsel %vm1754, %v1743, %v1375
      %v1777 = vsel %vm1754, %v1744, %v1377
      %v1778 = vsel %vm1754, %v1745, %v1379
      %v1779 = vsel %vm1754, %v1746, %v1381
      %v1780 = vsel %vm1754, %v1747, %v1383
      %v1781 = vsel %vm1754, %v1748, %v1385
      %v1782 = vsel %vm1754, %v1749, %v1387
      %v1783 = vsel %vm1754, %v1750, %v1389
      %v1784 = vsel %vm1754, %v1751, %v1391
      %v1785 = vsel %vm1754, %v1752, %v1393
      %v1786 = vsel %vm1754, %v1753, %v1395
      %vm1787 = vcmask 523264
      %v1788 = vsel %vm1787, %v1755, %v1461
      %v1789 = vsel %vm1787, %v1756, %v1463
      %v1790 = vsel %vm1787, %v1757, %v1465
      %v1791 = vsel %vm1787, %v1758, %v1467
      %v1792 = vsel %vm1787, %v1759, %v1469
      %v1793 = vsel %vm1787, %v1760, %v1471
      %v1794 = vsel %vm1787, %v1761, %v1473
      %v1795 = vsel %vm1787, %v1762, %v1475
      %v1796 = vsel %vm1787, %v1763, %v1477
      %v1797 = vsel %vm1787, %v1764, %v1479
      %v1798 = vsel %vm1787, %v1765, %v1481
      %v1799 = vsel %vm1787, %v1766, %v1483
      %v1800 = vsel %vm1787, %v1767, %v1485
      %v1801 = vsel %vm1787, %v1768, %v1487
      %v1802 = vsel %vm1787, %v1769, %v1489
      %v1803 = vsel %vm1787, %v1770, %v1491
      %v1804 = vsel %vm1787, %v1771, %v1493
      %v1805 = vsel %vm1787, %v1772, %v1495
      %v1806 = vsel %vm1787, %v1773, %v1497
      %v1807 = vsel %vm1787, %v1774, %v1499
      %v1808 = vsel %vm1787, %v1775, %v1501
      %v1809 = vsel %vm1787, %v1776, %v1503
      %v1810 = vsel %vm1787, %v1777, %v1505
      %v1811 = vsel %vm1787, %v1778, %v1507
      %v1812 = vsel %vm1787, %v1779, %v1509
      %v1813 = vsel %vm1787, %v1780, %v1511
      %v1814 = vsel %vm1787, %v1781, %v1513
      %v1815 = vsel %vm1787, %v1782, %v1515
      %v1816 = vsel %vm1787, %v1783, %v1517
      %v1817 = vsel %vm1787, %v1784, %v1519
      %v1818 = vsel %vm1787, %v1785, %v1521
      %v1819 = vsel %vm1787, %v1786, %v1523
      %v1820 = vld [vmem:[%s1] sm:$0xff]
      %v1821 = vld [vmem:[%s1 + $0x8] sm:$0xff]
      %v1822 = vld [vmem:[%s1 + $0x10] sm:$0xff]
      %v1823 = vld [vmem:[%s1 + $0x18] sm:$0xff]
      %v1824 = vld [vmem:[%s1 + $0x20] sm:$0xff]
      %v1825 = vld [vmem:[%s1 + $0x28] sm:$0xff]
      %v1826 = vld [vmem:[%s1 + $0x30] sm:$0xff]
      %v1827 = vld [vmem:[%s1 + $0x38] sm:$0xff]
      %v1828 = vld [vmem:[%s1 + $0x40] sm:$0xff]
      %v1829 = vld [vmem:[%s2] sm:$0x1]
      %v1831 = vlaneseq
      %v1832 = vshrl.u32 %v1831, 7
      %v1833 = vsub.s32 0, %v1832
      %v1834 = vrot.slane %v1829, %v1833
      %vm1836 = vcmask 588800
      %v1838 = vsel %vm1836, %v1788, 0
      %v1841 = vsel %vm1836, %v1789, 0
      %v1844 = vsel %vm1836, %v1790, 0
      %v1847 = vsel %vm1836, %v1791, 0
      %v1850 = vsel %vm1836, %v1792, 0
      %v1853 = vsel %vm1836, %v1793, 0
      %v1856 = vsel %vm1836, %v1794, 0
      %v1859 = vsel %vm1836, %v1795, 0
      %v1862 = vsel %vm1836, %v1796, 0
      %v1865 = vsel %vm1836, %v1797, 0
      %v1868 = vsel %vm1836, %v1798, 0
      %v1871 = vsel %vm1836, %v1799, 0
      %v1874 = vsel %vm1836, %v1800, 0
      %v1877 = vsel %vm1836, %v1801, 0
      %v1880 = vsel %vm1836, %v1802, 0
      %v1883 = vsel %vm1836, %v1803, 0
      %v1886 = vsel %vm1836, %v1804, 0
      %v1889 = vsel %vm1836, %v1805, 0
      %v1892 = vsel %vm1836, %v1806, 0
      %v1895 = vsel %vm1836, %v1807, 0
      %v1898 = vsel %vm1836, %v1808, 0
      %v1901 = vsel %vm1836, %v1809, 0
      %v1904 = vsel %vm1836, %v1810, 0
      %v1907 = vsel %vm1836, %v1811, 0
      %v1910 = vsel %vm1836, %v1812, 0
      %v1913 = vsel %vm1836, %v1813, 0
      %v1916 = vsel %vm1836, %v1814, 0
      %v1919 = vsel %vm1836, %v1815, 0
      %v1922 = vsel %vm1836, %v1816, 0
      %v1925 = vsel %vm1836, %v1817, 0
      %v1928 = vsel %vm1836, %v1818, 0
      %v1931 = vsel %vm1836, %v1819, 0
      %1933 = vmatprep.subr.mxu0 0.0
      %1934 = vmatpush1.msra.mxu0 %v1820
      %1935 = vmatprep.subr.mxu0 0.0
      %1936 = vmatpush1.msra.mxu0 %v1821
      %1937 = vmatprep.subr.mxu0 0.0
      %1938 = vmatpush1.msra.mxu0 %v1822
      %1939 = vmatprep.subr.mxu0 0.0
      %1940 = vmatpush1.msra.mxu0 %v1823
      %1941 = vmatprep.subr.mxu0 0.0
      %1942 = vmatpush1.msra.mxu0 %v1824
      %1943 = vmatprep.subr.mxu0 0.0
      %1944 = vmatpush1.msra.mxu0 %v1825
      %1945 = vmatprep.subr.mxu0 0.0
      %1946 = vmatpush1.msra.mxu0 %v1826
      %1947 = vmatprep.subr.mxu0 0.0
      %1948 = vmatpush1.msra.mxu0 %v1827
      %1949 = vmatprep.subr.mxu0 0.0
      %1950 = vmatpush1.msra.mxu0 %v1828
      %1951 = vmatprep.subr.mxu0 0.0
      %1952 = vmatpush1.msra.mxu0 0.0
      %1953 = vmatprep.subr.mxu0 0.0
      %1954 = vmatpush1.msra.mxu0 0.0
      %1955 = vmatprep.subr.mxu0 0.0
      %1956 = vmatpush1.msra.mxu0 0.0
      %1957 = vmatprep.subr.mxu0 0.0
      %1958 = vmatpush1.msra.mxu0 0.0
      %1959 = vmatprep.subr.mxu0 0.0
      %1960 = vmatpush1.msra.mxu0 0.0
      %1961 = vmatprep.subr.mxu0 0.0
      %1962 = vmatpush1.msra.mxu0 0.0
      %1963 = vmatprep.subr.mxu0 0.0
      %1964 = vmatpush1.msra.mxu0 0.0
      %1965 = vmatprep.subr.mxu0 0.0
      %1966 = vmatpush1.msra.mxu0 0.0
      %1967 = vmatprep.subr.mxu0 0.0
      %1968 = vmatpush1.msra.mxu0 0.0
      %1969 = vmatprep.subr.mxu0 0.0
      %1970 = vmatpush1.msra.mxu0 0.0
      %1971 = vmatprep.subr.mxu0 0.0
      %1972 = vmatpush1.msra.mxu0 0.0
      %1973 = vmatprep.subr.mxu0 0.0
      %1974 = vmatpush1.msra.mxu0 0.0
      %1975 = vmatprep.subr.mxu0 0.0
      %1976 = vmatpush1.msra.mxu0 0.0
      %1977 = vmatprep.subr.mxu0 0.0
      %1978 = vmatpush1.msra.mxu0 0.0
      %1979 = vmatprep.subr.mxu0 0.0
      %1980 = vmatpush1.msra.mxu0 0.0
      %1981 = vmatprep.subr.mxu0 0.0
      %1982 = vmatpush1.msra.mxu0 0.0
      %1983 = vmatprep.subr.mxu0 0.0
      %1984 = vmatpush1.msra.mxu0 0.0
      %1985 = vmatprep.subr.mxu0 0.0
      %1986 = vmatpush1.msra.mxu0 0.0
      %1987 = vmatprep.subr.mxu0 0.0
      %1988 = vmatpush1.msra.mxu0 0.0
      %1989 = vmatprep.subr.mxu0 0.0
      %1990 = vmatpush1.msra.mxu0 0.0
      %1991 = vmatprep.subr.mxu0 0.0
      %1992 = vmatpush1.msra.mxu0 0.0
      %1993 = vmatprep.subr.mxu0 0.0
      %1994 = vmatpush1.msra.mxu0 0.0
      %1995 = vmatprep.subr.mxu0 0.0
      %1996 = vmatpush1.msra.mxu0 0.0
      %1997 = vmatprep.mubr.f32.mxu0 0.0
      %1998 = vmatmul.mubr.f32.gmra.mrb[0].mxu0 %v1838
      %v1999 = vpop.f32.mrb[0].mxu0
      %v2000 = vadd.f32 %v1834, %v1999
      %v2001 = vpop.f32.mrb[0].mxu0
      %2002 = vmatprep.mubr.f32.mxu0 0.0
      %2003 = vmatmul.mubr.f32.gmra.mrb[0].mxu0 %v1841
      %v2004 = vpop.f32.mrb[0].mxu0
      %v2005 = vadd.f32 %v1834, %v2004
      %v2006 = vpop.f32.mrb[0].mxu0
      %2007 = vmatprep.mubr.f32.mxu0 0.0
      %2008 = vmatmul.mubr.f32.gmra.mrb[0].mxu0 %v1844
      %v2009 = vpop.f32.mrb[0].mxu0
      %v2010 = vadd.f32 %v1834, %v2009
      %v2011 = vpop.f32.mrb[0].mxu0
      %2012 = vmatprep.mubr.f32.mxu0 0.0
      %2013 = vmatmul.mubr.f32.gmra.mrb[0].mxu0 %v1847
      %v2014 = vpop.f32.mrb[0].mxu0
      %v2015 = vadd.f32 %v1834, %v2014
      %v2016 = vpop.f32.mrb[0].mxu0
      %2017 = vmatprep.mubr.f32.mxu0 0.0
      %2018 = vmatmul.mubr.f32.gmra.mrb[0].mxu0 %v1850
      %v2019 = vpop.f32.mrb[0].mxu0
      %v2020 = vadd.f32 %v1834, %v2019
      %v2021 = vpop.f32.mrb[0].mxu0
      %2022 = vmatprep.mubr.f32.mxu0 0.0
      %2023 = vmatmul.mubr.f32.gmra.mrb[0].mxu0 %v1853
      %v2024 = vpop.f32.mrb[0].mxu0
      %v2025 = vadd.f32 %v1834, %v2024
      %v2026 = vpop.f32.mrb[0].mxu0
      %2027 = vmatprep.mubr.f32.mxu0 0.0
      %2028 = vmatmul.mubr.f32.gmra.mrb[0].mxu0 %v1856
      %v2029 = vpop.f32.mrb[0].mxu0
      %v2030 = vadd.f32 %v1834, %v2029
      %v2031 = vpop.f32.mrb[0].mxu0
      %2032 = vmatprep.mubr.f32.mxu0 0.0
      %2033 = vmatmul.mubr.f32.gmra.mrb[0].mxu0 %v1859
      %v2034 = vpop.f32.mrb[0].mxu0
      %v2035 = vadd.f32 %v1834, %v2034
      %v2036 = vpop.f32.mrb[0].mxu0
      %2037 = vmatprep.mubr.f32.mxu0 0.0
      %2038 = vmatmul.mubr.f32.gmra.mrb[0].mxu0 %v1862
      %v2039 = vpop.f32.mrb[0].mxu0
      %v2040 = vadd.f32 %v1834, %v2039
      %v2041 = vpop.f32.mrb[0].mxu0
      %2042 = vmatprep.mubr.f32.mxu0 0.0
      %2043 = vmatmul.mubr.f32.gmra.mrb[0].mxu0 %v1865
      %v2044 = vpop.f32.mrb[0].mxu0
      %v2045 = vadd.f32 %v1834, %v2044
      %v2046 = vpop.f32.mrb[0].mxu0
      %2047 = vmatprep.mubr.f32.mxu0 0.0
      %2048 = vmatmul.mubr.f32.gmra.mrb[0].mxu0 %v1868
      %v2049 = vpop.f32.mrb[0].mxu0
      %v2050 = vadd.f32 %v1834, %v2049
      %v2051 = vpop.f32.mrb[0].mxu0
      %2052 = vmatprep.mubr.f32.mxu0 0.0
      %2053 = vmatmul.mubr.f32.gmra.mrb[0].mxu0 %v1871
      %v2054 = vpop.f32.mrb[0].mxu0
      %v2055 = vadd.f32 %v1834, %v2054
      %v2056 = vpop.f32.mrb[0].mxu0
      %2057 = vmatprep.mubr.f32.mxu0 0.0
      %2058 = vmatmul.mubr.f32.gmra.mrb[0].mxu0 %v1874
      %v2059 = vpop.f32.mrb[0].mxu0
      %v2060 = vadd.f32 %v1834, %v2059
      %v2061 = vpop.f32.mrb[0].mxu0
      %2062 = vmatprep.mubr.f32.mxu0 0.0
      %2063 = vmatmul.mubr.f32.gmra.mrb[0].mxu0 %v1877
      %v2064 = vpop.f32.mrb[0].mxu0
      %v2065 = vadd.f32 %v1834, %v2064
      %v2066 = vpop.f32.mrb[0].mxu0
      %2067 = vmatprep.mubr.f32.mxu0 0.0
      %2068 = vmatmul.mubr.f32.gmra.mrb[0].mxu0 %v1880
      %v2069 = vpop.f32.mrb[0].mxu0
      %v2070 = vadd.f32 %v1834, %v2069
      %v2071 = vpop.f32.mrb[0].mxu0
      %2072 = vmatprep.mubr.f32.mxu0 0.0
      %2073 = vmatmul.mubr.f32.gmra.mrb[0].mxu0 %v1883
      %v2074 = vpop.f32.mrb[0].mxu0
      %v2075 = vadd.f32 %v1834, %v2074
      %v2076 = vpop.f32.mrb[0].mxu0
      %2077 = vmatprep.mubr.f32.mxu0 0.0
      %2078 = vmatmul.mubr.f32.gmra.mrb[0].mxu0 %v1886
      %v2079 = vpop.f32.mrb[0].mxu0
      %v2080 = vadd.f32 %v1834, %v2079
      %v2081 = vpop.f32.mrb[0].mxu0
      %2082 = vmatprep.mubr.f32.mxu0 0.0
      %2083 = vmatmul.mubr.f32.gmra.mrb[0].mxu0 %v1889
      %v2084 = vpop.f32.mrb[0].mxu0
      %v2085 = vadd.f32 %v1834, %v2084
      %v2086 = vpop.f32.mrb[0].mxu0
      %2087 = vmatprep.mubr.f32.mxu0 0.0
      %2088 = vmatmul.mubr.f32.gmra.mrb[0].mxu0 %v1892
      %v2089 = vpop.f32.mrb[0].mxu0
      %v2090 = vadd.f32 %v1834, %v2089
      %v2091 = vpop.f32.mrb[0].mxu0
      %2092 = vmatprep.mubr.f32.mxu0 0.0
      %2093 = vmatmul.mubr.f32.gmra.mrb[0].mxu0 %v1895
      %v2094 = vpop.f32.mrb[0].mxu0
      %v2095 = vadd.f32 %v1834, %v2094
      %v2096 = vpop.f32.mrb[0].mxu0
      %2097 = vmatprep.mubr.f32.mxu0 0.0
      %2098 = vmatmul.mubr.f32.gmra.mrb[0].mxu0 %v1898
      %v2099 = vpop.f32.mrb[0].mxu0
      %v2100 = vadd.f32 %v1834, %v2099
      %v2101 = vpop.f32.mrb[0].mxu0
      %2102 = vmatprep.mubr.f32.mxu0 0.0
      %2103 = vmatmul.mubr.f32.gmra.mrb[0].mxu0 %v1901
      %v2104 = vpop.f32.mrb[0].mxu0
      %v2105 = vadd.f32 %v1834, %v2104
      %v2106 = vpop.f32.mrb[0].mxu0
      %2107 = vmatprep.mubr.f32.mxu0 0.0
      %2108 = vmatmul.mubr.f32.gmra.mrb[0].mxu0 %v1904
      %v2109 = vpop.f32.mrb[0].mxu0
      %v2110 = vadd.f32 %v1834, %v2109
      %v2111 = vpop.f32.mrb[0].mxu0
      %2112 = vmatprep.mubr.f32.mxu0 0.0
      %2113 = vmatmul.mubr.f32.gmra.mrb[0].mxu0 %v1907
      %v2114 = vpop.f32.mrb[0].mxu0
      %v2115 = vadd.f32 %v1834, %v2114
      %v2116 = vpop.f32.mrb[0].mxu0
      %2117 = vmatprep.mubr.f32.mxu0 0.0
      %2118 = vmatmul.mubr.f32.gmra.mrb[0].mxu0 %v1910
      %v2119 = vpop.f32.mrb[0].mxu0
      %v2120 = vadd.f32 %v1834, %v2119
      %v2121 = vpop.f32.mrb[0].mxu0
      %2122 = vmatprep.mubr.f32.mxu0 0.0
      %2123 = vmatmul.mubr.f32.gmra.mrb[0].mxu0 %v1913
      %v2124 = vpop.f32.mrb[0].mxu0
      %v2125 = vadd.f32 %v1834, %v2124
      %v2126 = vpop.f32.mrb[0].mxu0
      %2127 = vmatprep.mubr.f32.mxu0 0.0
      %2128 = vmatmul.mubr.f32.gmra.mrb[0].mxu0 %v1916
      %v2129 = vpop.f32.mrb[0].mxu0
      %v2130 = vadd.f32 %v1834, %v2129
      %v2131 = vpop.f32.mrb[0].mxu0
      %2132 = vmatprep.mubr.f32.mxu0 0.0
      %2133 = vmatmul.mubr.f32.gmra.mrb[0].mxu0 %v1919
      %v2134 = vpop.f32.mrb[0].mxu0
      %v2135 = vadd.f32 %v1834, %v2134
      %v2136 = vpop.f32.mrb[0].mxu0
      %2137 = vmatprep.mubr.f32.mxu0 0.0
      %2138 = vmatmul.mubr.f32.gmra.mrb[0].mxu0 %v1922
      %v2139 = vpop.f32.mrb[0].mxu0
      %v2140 = vadd.f32 %v1834, %v2139
      %v2141 = vpop.f32.mrb[0].mxu0
      %2142 = vmatprep.mubr.f32.mxu0 0.0
      %2143 = vmatmul.mubr.f32.gmra.mrb[0].mxu0 %v1925
      %v2144 = vpop.f32.mrb[0].mxu0
      %v2145 = vadd.f32 %v1834, %v2144
      %v2146 = vpop.f32.mrb[0].mxu0
      %2147 = vmatprep.mubr.f32.mxu0 0.0
      %2148 = vmatmul.mubr.f32.gmra.mrb[0].mxu0 %v1928
      %v2149 = vpop.f32.mrb[0].mxu0
      %v2150 = vadd.f32 %v1834, %v2149
      %v2151 = vpop.f32.mrb[0].mxu0
      %2152 = vmatprep.mubr.f32.mxu0 0.0
      %2153 = vmatmul.mubr.f32.gmra.mrb[0].mxu0 %v1931
      %v2154 = vpop.f32.mrb[0].mxu0
      %v2155 = vadd.f32 %v1834, %v2154
      %v2156 = vpop.f32.mrb[0].mxu0
      %2157 = vdwg.mxu0
      %vm2158 = vcmask 31744
      %2159 = vst.msk [vmem:[%s235] sm:$0xff] %vm2158, %v2000
      %2160 = vst.msk [vmem:[%s235 + $0x8] sm:$0xff] %vm2158, %v2005
      %2161 = vst.msk [vmem:[%s235 + $0x10] sm:$0xff] %vm2158, %v2010
      %2162 = vst.msk [vmem:[%s235 + $0x18] sm:$0xff] %vm2158, %v2015
      %2163 = vst.msk [vmem:[%s235 + $0x20] sm:$0xff] %vm2158, %v2020
      %2164 = vst.msk [vmem:[%s235 + $0x28] sm:$0xff] %vm2158, %v2025
      %2165 = vst.msk [vmem:[%s235 + $0x30] sm:$0xff] %vm2158, %v2030
      %2166 = vst.msk [vmem:[%s235 + $0x38] sm:$0xff] %vm2158, %v2035
      %2167 = vst.msk [vmem:[%s235 + $0x40] sm:$0xff] %vm2158, %v2040
      %2168 = vst.msk [vmem:[%s235 + $0x48] sm:$0xff] %vm2158, %v2045
      %2169 = vst.msk [vmem:[%s235 + $0x50] sm:$0xff] %vm2158, %v2050
      %2170 = vst.msk [vmem:[%s235 + $0x58] sm:$0xff] %vm2158, %v2055
      %2171 = vst.msk [vmem:[%s235 + $0x60] sm:$0xff] %vm2158, %v2060
      %2172 = vst.msk [vmem:[%s235 + $0x68] sm:$0xff] %vm2158, %v2065
      %2173 = vst.msk [vmem:[%s235 + $0x70] sm:$0xff] %vm2158, %v2070
      %2174 = vst.msk [vmem:[%s235 + $0x78] sm:$0xff] %vm2158, %v2075
      %2175 = vst.msk [vmem:[%s235 + $0x80] sm:$0xff] %vm2158, %v2080
      %2176 = vst.msk [vmem:[%s235 + $0x88] sm:$0xff] %vm2158, %v2085
      %2177 = vst.msk [vmem:[%s235 + $0x90] sm:$0xff] %vm2158, %v2090
      %2178 = vst.msk [vmem:[%s235 + $0x98] sm:$0xff] %vm2158, %v2095
      %2179 = vst.msk [vmem:[%s235 + $0xa0] sm:$0xff] %vm2158, %v2100
      %2180 = vst.msk [vmem:[%s235 + $0xa8] sm:$0xff] %vm2158, %v2105
      %2181 = vst.msk [vmem:[%s235 + $0xb0] sm:$0xff] %vm2158, %v2110
      %2182 = vst.msk [vmem:[%s235 + $0xb8] sm:$0xff] %vm2158, %v2115
      %2183 = vst.msk [vmem:[%s235 + $0xc0] sm:$0xff] %vm2158, %v2120
      %2184 = vst.msk [vmem:[%s235 + $0xc8] sm:$0xff] %vm2158, %v2125
      %2185 = vst.msk [vmem:[%s235 + $0xd0] sm:$0xff] %vm2158, %v2130
      %2186 = vst.msk [vmem:[%s235 + $0xd8] sm:$0xff] %vm2158, %v2135
      %2187 = vst.msk [vmem:[%s235 + $0xe0] sm:$0xff] %vm2158, %v2140
      %2188 = vst.msk [vmem:[%s235 + $0xe8] sm:$0xff] %vm2158, %v2145
      %2189 = vst.msk [vmem:[%s235 + $0xf0] sm:$0xff] %vm2158, %v2150
      %2190 = vst.msk [vmem:[%s235 + $0xf8] sm:$0xff] %vm2158, %v2155
      %v2191 = vsel %vm2158, %v2000, 0.0
      %v2192 = vsel %vm2158, %v2005, 0.0
      %v2193 = vadd.f32 %v2191, %v2192
      %v2194 = vsel %vm2158, %v2010, 0.0
      %v2195 = vadd.f32 %v2193, %v2194
      %v2196 = vsel %vm2158, %v2015, 0.0
      %v2197 = vadd.f32 %v2195, %v2196
      %v2198 = vsel %vm2158, %v2020, 0.0
      %v2199 = vadd.f32 %v2197, %v2198
      %v2200 = vsel %vm2158, %v2025, 0.0
      %v2201 = vadd.f32 %v2199, %v2200
      %v2202 = vsel %vm2158, %v2030, 0.0
      %v2203 = vadd.f32 %v2201, %v2202
      %v2204 = vsel %vm2158, %v2035, 0.0
      %v2205 = vadd.f32 %v2203, %v2204
      %v2206 = vsel %vm2158, %v2040, 0.0
      %v2207 = vadd.f32 %v2205, %v2206
      %v2208 = vsel %vm2158, %v2045, 0.0
      %v2209 = vadd.f32 %v2207, %v2208
      %v2210 = vsel %vm2158, %v2050, 0.0
      %v2211 = vadd.f32 %v2209, %v2210
      %v2212 = vsel %vm2158, %v2055, 0.0
      %v2213 = vadd.f32 %v2211, %v2212
      %v2214 = vsel %vm2158, %v2060, 0.0
      %v2215 = vadd.f32 %v2213, %v2214
      %v2216 = vsel %vm2158, %v2065, 0.0
      %v2217 = vadd.f32 %v2215, %v2216
      %v2218 = vsel %vm2158, %v2070, 0.0
      %v2219 = vadd.f32 %v2217, %v2218
      %v2220 = vsel %vm2158, %v2075, 0.0
      %v2221 = vadd.f32 %v2219, %v2220
      %v2222 = vsel %vm2158, %v2080, 0.0
      %v2223 = vadd.f32 %v2221, %v2222
      %v2224 = vsel %vm2158, %v2085, 0.0
      %v2225 = vadd.f32 %v2223, %v2224
      %v2226 = vsel %vm2158, %v2090, 0.0
      %v2227 = vadd.f32 %v2225, %v2226
      %v2228 = vsel %vm2158, %v2095, 0.0
      %v2229 = vadd.f32 %v2227, %v2228
      %v2230 = vsel %vm2158, %v2100, 0.0
      %v2231 = vadd.f32 %v2229, %v2230
      %v2232 = vsel %vm2158, %v2105, 0.0
      %v2233 = vadd.f32 %v2231, %v2232
      %v2234 = vsel %vm2158, %v2110, 0.0
      %v2235 = vadd.f32 %v2233, %v2234
      %v2236 = vsel %vm2158, %v2115, 0.0
      %v2237 = vadd.f32 %v2235, %v2236
      %v2238 = vsel %vm2158, %v2120, 0.0
      %v2239 = vadd.f32 %v2237, %v2238
      %v2240 = vsel %vm2158, %v2125, 0.0
      %v2241 = vadd.f32 %v2239, %v2240
      %v2242 = vsel %vm2158, %v2130, 0.0
      %v2243 = vadd.f32 %v2241, %v2242
      %v2244 = vsel %vm2158, %v2135, 0.0
      %v2245 = vadd.f32 %v2243, %v2244
      %v2246 = vsel %vm2158, %v2140, 0.0
      %v2247 = vadd.f32 %v2245, %v2246
      %v2248 = vsel %vm2158, %v2145, 0.0
      %v2249 = vadd.f32 %v2247, %v2248
      %v2250 = vsel %vm2158, %v2150, 0.0
      %v2251 = vadd.f32 %v2249, %v2250
      %v2252 = vsel %vm2158, %v2155, 0.0
      %v2253 = vadd.f32 %v2251, %v2252
      %v2254 = vrot.slane %v2253, 4
      %v2255 = vadd.f32 %v2253, %v2254
      %v2256 = vrot.slane %v2255, 2
      %v2257 = vadd.f32 %v2255, %v2256
      %v2258 = vrot.slane %v2257, 1
      %v2259 = vadd.f32 %v2257, %v2258
      %vm2260 = vcmask 24576
      %2261 = vst.msk [vmem:[%s238] sm:$0x1] %vm2260, %v2259
      %v2262 = vmul.f32 %v2000, %v2000
      %v2263 = vmul.f32 %v2005, %v2005
      %v2264 = vmul.f32 %v2010, %v2010
      %v2265 = vmul.f32 %v2015, %v2015
      %v2266 = vmul.f32 %v2020, %v2020
      %v2267 = vmul.f32 %v2025, %v2025
      %v2268 = vmul.f32 %v2030, %v2030
      %v2269 = vmul.f32 %v2035, %v2035
      %v2270 = vmul.f32 %v2040, %v2040
      %v2271 = vmul.f32 %v2045, %v2045
      %v2272 = vmul.f32 %v2050, %v2050
      %v2273 = vmul.f32 %v2055, %v2055
      %v2274 = vmul.f32 %v2060, %v2060
      %v2275 = vmul.f32 %v2065, %v2065
      %v2276 = vmul.f32 %v2070, %v2070
      %v2277 = vmul.f32 %v2075, %v2075
      %v2278 = vmul.f32 %v2080, %v2080
      %v2279 = vmul.f32 %v2085, %v2085
      %v2280 = vmul.f32 %v2090, %v2090
      %v2281 = vmul.f32 %v2095, %v2095
      %v2282 = vmul.f32 %v2100, %v2100
      %v2283 = vmul.f32 %v2105, %v2105
      %v2284 = vmul.f32 %v2110, %v2110
      %v2285 = vmul.f32 %v2115, %v2115
      %v2286 = vmul.f32 %v2120, %v2120
      %v2287 = vmul.f32 %v2125, %v2125
      %v2288 = vmul.f32 %v2130, %v2130
      %v2289 = vmul.f32 %v2135, %v2135
      %v2290 = vmul.f32 %v2140, %v2140
      %v2291 = vmul.f32 %v2145, %v2145
      %v2292 = vmul.f32 %v2150, %v2150
      %v2293 = vmul.f32 %v2155, %v2155
      %v2294 = vsel %vm2158, %v2262, 0.0
      %v2295 = vsel %vm2158, %v2263, 0.0
      %v2296 = vadd.f32 %v2294, %v2295
      %v2297 = vsel %vm2158, %v2264, 0.0
      %v2298 = vadd.f32 %v2296, %v2297
      %v2299 = vsel %vm2158, %v2265, 0.0
      %v2300 = vadd.f32 %v2298, %v2299
      %v2301 = vsel %vm2158, %v2266, 0.0
      %v2302 = vadd.f32 %v2300, %v2301
      %v2303 = vsel %vm2158, %v2267, 0.0
      %v2304 = vadd.f32 %v2302, %v2303
      %v2305 = vsel %vm2158, %v2268, 0.0
      %v2306 = vadd.f32 %v2304, %v2305
      %v2307 = vsel %vm2158, %v2269, 0.0
      %v2308 = vadd.f32 %v2306, %v2307
      %v2309 = vsel %vm2158, %v2270, 0.0
      %v2310 = vadd.f32 %v2308, %v2309
      %v2311 = vsel %vm2158, %v2271, 0.0
      %v2312 = vadd.f32 %v2310, %v2311
      %v2313 = vsel %vm2158, %v2272, 0.0
      %v2314 = vadd.f32 %v2312, %v2313
      %v2315 = vsel %vm2158, %v2273, 0.0
      %v2316 = vadd.f32 %v2314, %v2315
      %v2317 = vsel %vm2158, %v2274, 0.0
      %v2318 = vadd.f32 %v2316, %v2317
      %v2319 = vsel %vm2158, %v2275, 0.0
      %v2320 = vadd.f32 %v2318, %v2319
      %v2321 = vsel %vm2158, %v2276, 0.0
      %v2322 = vadd.f32 %v2320, %v2321
      %v2323 = vsel %vm2158, %v2277, 0.0
      %v2324 = vadd.f32 %v2322, %v2323
      %v2325 = vsel %vm2158, %v2278, 0.0
      %v2326 = vadd.f32 %v2324, %v2325
      %v2327 = vsel %vm2158, %v2279, 0.0
      %v2328 = vadd.f32 %v2326, %v2327
      %v2329 = vsel %vm2158, %v2280, 0.0
      %v2330 = vadd.f32 %v2328, %v2329
      %v2331 = vsel %vm2158, %v2281, 0.0
      %v2332 = vadd.f32 %v2330, %v2331
      %v2333 = vsel %vm2158, %v2282, 0.0
      %v2334 = vadd.f32 %v2332, %v2333
      %v2335 = vsel %vm2158, %v2283, 0.0
      %v2336 = vadd.f32 %v2334, %v2335
      %v2337 = vsel %vm2158, %v2284, 0.0
      %v2338 = vadd.f32 %v2336, %v2337
      %v2339 = vsel %vm2158, %v2285, 0.0
      %v2340 = vadd.f32 %v2338, %v2339
      %v2341 = vsel %vm2158, %v2286, 0.0
      %v2342 = vadd.f32 %v2340, %v2341
      %v2343 = vsel %vm2158, %v2287, 0.0
      %v2344 = vadd.f32 %v2342, %v2343
      %v2345 = vsel %vm2158, %v2288, 0.0
      %v2346 = vadd.f32 %v2344, %v2345
      %v2347 = vsel %vm2158, %v2289, 0.0
      %v2348 = vadd.f32 %v2346, %v2347
      %v2349 = vsel %vm2158, %v2290, 0.0
      %v2350 = vadd.f32 %v2348, %v2349
      %v2351 = vsel %vm2158, %v2291, 0.0
      %v2352 = vadd.f32 %v2350, %v2351
      %v2353 = vsel %vm2158, %v2292, 0.0
      %v2354 = vadd.f32 %v2352, %v2353
      %v2355 = vsel %vm2158, %v2293, 0.0
      %v2356 = vadd.f32 %v2354, %v2355
      %v2357 = vrot.slane %v2356, 4
      %v2358 = vadd.f32 %v2356, %v2357
      %v2359 = vrot.slane %v2358, 2
      %v2360 = vadd.f32 %v2358, %v2359
      %v2361 = vrot.slane %v2360, 1
      %v2362 = vadd.f32 %v2360, %v2361
      %2363 = vst.msk [vmem:[%s241] sm:$0x1] %vm2260, %v2362
      %p2364 = scmp.lt.s32.totalorder %s17, 1
      %s2365 = scalar_select %p2364, %s17, 1
      %s2366 = smul.addr %s2365, 32
      %s2367 = smul.addr %s2366, 8
      %s2368 = scalar_lea.vmem %s3, %s2367
      %p2369 = scmp.lt.s32.totalorder %s17, 1
      %s2370 = scalar_select %p2369, %s17, 1
      %s2371 = scalar_lea.vmem %s4, %s2370
      %p2372 = scmp.lt.s32.totalorder %s17, 1
      %s2373 = scalar_select %p2372, %s17, 1
      %s2374 = scalar_lea.vmem %s5, %s2373
      // Predicated region
      $region33: #{up_block_forward.5} parent=31 // pred_check
        %p2375 = pneg %p103
      $region34: #{up_block_forward.5} parent=31 // pred_check_branch
        %2377 = sbr.rel (%p2375) target = $region36
      $region35: #{up_block_forward.5} parent=31 // pred_region
        _
      $region36: #{up_block_forward.5} parent=31 // pred_fallthru
        _
      // Predicated region
      $region37: #{up_block_forward.5} parent=31 // pred_check
        %p2378 = pneg %p129
      $region38: #{up_block_forward.5} parent=31 // pred_check_branch
        %2380 = sbr.rel (%p2378) target = $region40
      $region39: #{up_block_forward.5} parent=31 // pred_region
        _
      $region40: #{up_block_forward.5} parent=31 // pred_fallthru
        _
      // Predicated region
      $region41: #{up_block_forward.5} parent=31 // pred_check
        %p2381 = pneg %p155
      $region42: #{up_block_forward.5} parent=31 // pred_check_branch
        %2383 = sbr.rel (%p2381) target = $region44
      $region43: #{up_block_forward.5} parent=31 // pred_region
        _
      $region44: #{up_block_forward.5} parent=31 // pred_fallthru
        _
    $region32: #{up_block_forward.5} parent=5 // pred_fallthru
      _
    %p2384 = scmp.le.s32.totalorder 2, %s12
    // Predicated region
    $region45: #{up_block_forward.5} parent=5 // pred_check
      %p2385 = pneg %p2384
    $region46: #{up_block_forward.5} parent=5 // pred_check_branch
      %2387 = sbr.rel (%p2385) target = $region48
    $region47: #{up_block_forward.5} parent=5 // pred_region
      %s2388 = ssub.s32 %s12, 2
      // Predicated region
      $region49: #{up_block_forward.5} parent=47 // pred_check
        %p2389 = pneg %p109
      $region50: #{up_block_forward.5} parent=47 // pred_check_branch
        %2391 = sbr.rel (%p2389) target = $region52
      $region51: #{up_block_forward.5} parent=47 // pred_region
        %p2392 = scmp.lt.s32.totalorder %s18, 1
        %s2393 = scalar_select %p2392, %s18, 1
        %s2394 = smul.addr %s2393, 32
        %s2395 = smul.addr %s2394, 8
        %s2396 = scalar_lea.vmem %s3, %s2395
      $region52: #{up_block_forward.5} parent=47 // pred_fallthru
        _
      // Predicated region
      $region53: #{up_block_forward.5} parent=47 // pred_check
        %p2397 = pneg %p135
      $region54: #{up_block_forward.5} parent=47 // pred_check_branch
        %2399 = sbr.rel (%p2397) target = $region56
      $region55: #{up_block_forward.5} parent=47 // pred_region
        %p2400 = scmp.lt.s32.totalorder %s18, 1
        %s2401 = scalar_select %p2400, %s18, 1
        %s2402 = scalar_lea.vmem %s4, %s2401
      $region56: #{up_block_forward.5} parent=47 // pred_fallthru
        _
      // Predicated region
      $region57: #{up_block_forward.5} parent=47 // pred_check
        %p2403 = pneg %p161
      $region58: #{up_block_forward.5} parent=47 // pred_check_branch
        %2405 = sbr.rel (%p2403) target = $region60
      $region59: #{up_block_forward.5} parent=47 // pred_region
        %p2406 = scmp.lt.s32.totalorder %s18, 1
        %s2407 = scalar_select %p2406, %s18, 1
        %s2408 = scalar_lea.vmem %s5, %s2407
      $region60: #{up_block_forward.5} parent=47 // pred_fallthru
        _
    $region48: #{up_block_forward.5} parent=5 // pred_fallthru
      _
  $region6: #{up_block_forward.5} parent=0 // loop_footer
    %s16 = sadd.s32 1, %s12
  $region7: #{up_block_forward.5} parent=0 // loop_footer_branch
    %11 = sbr.rel target = $region3
  $region8: #{up_block_forward.5} parent=0 // loop_exit
    _

// kernel: up_block_forward.6
$region0: #{up_block_forward.6}
  #allocation0 [shape = 'u32[]', space=smem, size = 0x4, offset = 0x4, fixed_abs, tag = 'smem constant byte address 0x4 - core index']
  #allocation1 [shape = 'u32[144,128]{1,0:T(1,128)}', space=vmem, size = 0x12000, scoped, tag = 'internal scratch']
  #allocation2 [shape = 'f32[18,18,4]{2,1,0:T(8,128)}', space=vmem, size = 0x36000, scoped, tag = 'scratch operand']
  %s0 = inlined_call_operand.vmem [shape: f32[2,16,16,4], index: 0, kind: input, shape index: {}]
  %s1 = inlined_call_operand.vmem [shape: f32[36,4], index: 1, kind: input, shape index: {}]
  %s2 = inlined_call_operand.vmem [shape: f32[1,4], index: 2, kind: input, shape index: {}]
  %s3 = inlined_call_operand.vmem [shape: f32[1,4], index: 3, kind: input, shape index: {}]
  %s4 = inlined_call_operand.vmem [shape: f32[1,4], index: 4, kind: input, shape index: {}]
  %s5 = inlined_call_operand.vmem [shape: f32[2,16,16,4], index: 5, kind: output, shape index: {0}]
  %s6 = inlined_call_operand.vmem [shape: f32[2,1,4], index: 6, kind: output, shape index: {1}]
  %s7 = inlined_call_operand.vmem [shape: f32[2,1,4], index: 7, kind: output, shape index: {2}]
  %8 = xla_tuple %s5, %s6, %s7
  %s9 = sld [smem:[#allocation0]]
  $region69: #{up_block_forward.6} parent=0
    _
  %s11 = ssub.s32 1, %s9
  %s12 = scalar_select 0, %s11, %s9
  loop: start=0, step=1, limit=4
  $region2: #{up_block_forward.6} parent=0 // loop_pre_header
    _
  $region3: #{up_block_forward.6} parent=0 // loop_header
    %s14 = sphi 0, %s18
    %p15 = scmp.ge.s32.totalorder %s14, 4
    %s24 = sphi 0, %s26
    %s27 = sphi 0, %s24
    %s28 = sphi 0, %s27
    %s44 = sphi 0, %s28
    %s48 = sphi 0, %s48
    %s50 = sphi 0, %s48
    %s51 = sphi 0, %s50
    %s65 = sphi 0, %s51
    %s69 = sphi 0, %s69
    %s71 = sphi 0, %s69
    %s72 = sphi 0, %s71
    %s86 = sphi 0, %s72
    %s90 = sphi 0, %s90
    %s92 = sphi 0, %s90
    %s93 = sphi 0, %s92
    %s107 = sphi 0, %s93
    %s111 = sphi 0, %s111
    %s113 = sphi 0, %s111
    %s114 = sphi 0, %s113
    %s128 = sphi 0, %s114
    %s134 = sphi 0, %s136
    %s137 = sphi 0, %s134
    %s138 = sphi 0, %s137
    %s154 = sphi 0, %s138
    %s160 = sphi 0, %s162
    %s163 = sphi 0, %s160
    %s164 = sphi 0, %s163
    %s180 = sphi 0, %s164
    %s186 = sphi 0, %s188
    %s189 = sphi 0, %s186
    %s190 = sphi 0, %s189
    %s206 = sphi 0, %s190
  $region4: #{up_block_forward.6} parent=0 // loop_header_branch
    %17 = sbr.rel (%p15) target = $region8
  $region5: #{up_block_forward.6} parent=0 // loop_body
    %s19 = ssub.s32 %s14, 1
    %s20 = ssub.s32 %s14, 2
    %s21 = sadd.s32 %s14, 1
    %s22 = ssub.s32 %s14, %s21
    %p23 = scmp.eq.s32.totalorder %s22, 0
    %s25 = sadd.s32 %s24, 1
    %s26 = scalar_select %p23, %s24, %s25
    %p29 = pneg %p23
    %p30 = scmp.eq.s32.totalorder %s14, 1
    %p31 = por %p29, %p30
    %p32 = scmp.ne.s32.totalorder %s24, %s27
    %p33 = scmp.eq.s32.totalorder %s14, 0
    %p34 = por %p32, %p33
    %p35 = scmp.ne.s32.totalorder %s24, %s27
    %p36 = scmp.eq.s32.totalorder %s19, 1
    %p37 = por %p35, %p36
    %p38 = scmp.ne.s32.totalorder %s27, %s28
    %p39 = scmp.eq.s32.totalorder %s19, 0
    %p40 = por %p38, %p39
    %p41 = scmp.ne.s32.totalorder %s27, %s28
    %p42 = scmp.eq.s32.totalorder %s20, 1
    %p43 = por %p41, %p42
    %p45 = scmp.ne.s32.totalorder %s28, %s44
    %p46 = scmp.eq.s32.totalorder %s20, 0
    %p47 = por %p45, %p46
    %s49 = sadd.s32 %s48, 1
    %p52 = scmp.eq.s32.totalorder %s14, 1
    %p53 = scmp.ne.s32.totalorder %s48, %s50
    %p54 = scmp.eq.s32.totalorder %s14, 0
    %p55 = por %p53, %p54
    %p56 = scmp.ne.s32.totalorder %s48, %s50
    %p57 = scmp.eq.s32.totalorder %s19, 1
    %p58 = por %p56, %p57
    %p59 = scmp.ne.s32.totalorder %s50, %s51
    %p60 = scmp.eq.s32.totalorder %s19, 0
    %p61 = por %p59, %p60
    %p62 = scmp.ne.s32.totalorder %s50, %s51
    %p63 = scmp.eq.s32.totalorder %s20, 1
    %p64 = por %p62, %p63
    %p66 = scmp.ne.s32.totalorder %s51, %s65
    %p67 = scmp.eq.s32.totalorder %s20, 0
    %p68 = por %p66, %p67
    %s70 = sadd.s32 %s69, 1
    %p73 = scmp.eq.s32.totalorder %s14, 1
    %p74 = scmp.ne.s32.totalorder %s69, %s71
    %p75 = scmp.eq.s32.totalorder %s14, 0
    %p76 = por %p74, %p75
    %p77 = scmp.ne.s32.totalorder %s69, %s71
    %p78 = scmp.eq.s32.totalorder %s19, 1
    %p79 = por %p77, %p78
    %p80 = scmp.ne.s32.totalorder %s71, %s72
    %p81 = scmp.eq.s32.totalorder %s19, 0
    %p82 = por %p80, %p81
    %p83 = scmp.ne.s32.totalorder %s71, %s72
    %p84 = scmp.eq.s32.totalorder %s20, 1
    %p85 = por %p83, %p84
    %p87 = scmp.ne.s32.totalorder %s72, %s86
    %p88 = scmp.eq.s32.totalorder %s20, 0
    %p89 = por %p87, %p88
    %s91 = sadd.s32 %s90, 1
    %p94 = scmp.eq.s32.totalorder %s14, 1
    %p95 = scmp.ne.s32.totalorder %s90, %s92
    %p96 = scmp.eq.s32.totalorder %s14, 0
    %p97 = por %p95, %p96
    %p98 = scmp.ne.s32.totalorder %s90, %s92
    %p99 = scmp.eq.s32.totalorder %s19, 1
    %p100 = por %p98, %p99
    %p101 = scmp.ne.s32.totalorder %s92, %s93
    %p102 = scmp.eq.s32.totalorder %s19, 0
    %p103 = por %p101, %p102
    %p104 = scmp.ne.s32.totalorder %s92, %s93
    %p105 = scmp.eq.s32.totalorder %s20, 1
    %p106 = por %p104, %p105
    %p108 = scmp.ne.s32.totalorder %s93, %s107
    %p109 = scmp.eq.s32.totalorder %s20, 0
    %p110 = por %p108, %p109
    %s112 = sadd.s32 %s111, 1
    %p115 = scmp.eq.s32.totalorder %s14, 1
    %p116 = scmp.ne.s32.totalorder %s111, %s113
    %p117 = scmp.eq.s32.totalorder %s14, 0
    %p118 = por %p116, %p117
    %p119 = scmp.ne.s32.totalorder %s111, %s113
    %p120 = scmp.eq.s32.totalorder %s19, 1
    %p121 = por %p119, %p120
    %p122 = scmp.ne.s32.totalorder %s113, %s114
    %p123 = scmp.eq.s32.totalorder %s19, 0
    %p124 = por %p122, %p123
    %p125 = scmp.ne.s32.totalorder %s113, %s114
    %p126 = scmp.eq.s32.totalorder %s20, 1
    %p127 = por %p125, %p126
    %p129 = scmp.ne.s32.totalorder %s114, %s128
    %p130 = scmp.eq.s32.totalorder %s20, 0
    %p131 = por %p129, %p130
    %s132 = ssub.s32 %s14, %s21
    %p133 = scmp.eq.s32.totalorder %s132, 0
    %s135 = sadd.s32 %s134, 1
    %s136 = scalar_select %p133, %s134, %s135
    %p139 = pneg %p133
    %p140 = scmp.eq.s32.totalorder %s14, 1
    %p141 = por %p139, %p140
    %p142 = scmp.ne.s32.totalorder %s134, %s137
    %p143 = scmp.eq.s32.totalorder %s14, 0
    %p144 = por %p142, %p143
    %p145 = scmp.ne.s32.totalorder %s134, %s137
    %p146 = scmp.eq.s32.totalorder %s19, 1
    %p147 = por %p145, %p146
    %p148 = scmp.ne.s32.totalorder %s137, %s138
    %p149 = scmp.eq.s32.totalorder %s19, 0
    %p150 = por %p148, %p149
    %p151 = scmp.ne.s32.totalorder %s137, %s138
    %p152 = scmp.eq.s32.totalorder %s20, 1
    %p153 = por %p151, %p152
    %p155 = scmp.ne.s32.totalorder %s138, %s154
    %p156 = scmp.eq.s32.totalorder %s20, 0
    %p157 = por %p155, %p156
    %s158 = ssub.s32 %s14, %s21
    %p159 = scmp.eq.s32.totalorder %s158, 0
    %s161 = sadd.s32 %s160, 1
    %s162 = scalar_select %p159, %s160, %s161
    %p165 = pneg %p159
    %p166 = scmp.eq.s32.totalorder %s14, 1
    %p167 = por %p165, %p166
    %p168 = scmp.ne.s32.totalorder %s160, %s163
    %p169 = scmp.eq.s32.totalorder %s14, 0
    %p170 = por %p168, %p169
    %p171 = scmp.ne.s32.totalorder %s160, %s163
    %p172 = scmp.eq.s32.totalorder %s19, 1
    %p173 = por %p171, %p172
    %p174 = scmp.ne.s32.totalorder %s163, %s164
    %p175 = scmp.eq.s32.totalorder %s19, 0
    %p176 = por %p174, %p175
    %p177 = scmp.ne.s32.totalorder %s163, %s164
    %p178 = scmp.eq.s32.totalorder %s20, 1
    %p179 = por %p177, %p178
    %p181 = scmp.ne.s32.totalorder %s164, %s180
    %p182 = scmp.eq.s32.totalorder %s20, 0
    %p183 = por %p181, %p182
    %s184 = ssub.s32 %s14, %s21
    %p185 = scmp.eq.s32.totalorder %s184, 0
    %s187 = sadd.s32 %s186, 1
    %s188 = scalar_select %p185, %s186, %s187
    %p191 = pneg %p185
    %p192 = scmp.eq.s32.totalorder %s14, 1
    %p193 = por %p191, %p192
    %p194 = scmp.ne.s32.totalorder %s186, %s189
    %p195 = scmp.eq.s32.totalorder %s14, 0
    %p196 = por %p194, %p195
    %p197 = scmp.ne.s32.totalorder %s186, %s189
    %p198 = scmp.eq.s32.totalorder %s19, 1
    %p199 = por %p197, %p198
    %p200 = scmp.ne.s32.totalorder %s189, %s190
    %p201 = scmp.eq.s32.totalorder %s19, 0
    %p202 = por %p200, %p201
    %p203 = scmp.ne.s32.totalorder %s189, %s190
    %p204 = scmp.eq.s32.totalorder %s20, 1
    %p205 = por %p203, %p204
    %p207 = scmp.ne.s32.totalorder %s190, %s206
    %p208 = scmp.eq.s32.totalorder %s20, 0
    %p209 = por %p207, %p208
    %p210 = scmp.le.s32.totalorder 1, %s14
    %p211 = scmp.lt.s32.totalorder %s14, 3
    %p212 = pnand %p210, %p211
    %p213 = pneg %p212
    // Predicated region
    $region9: #{up_block_forward.6} parent=5 // pred_check
      _
    $region10: #{up_block_forward.6} parent=5 // pred_check_branch
      %215 = sbr.rel (%p212) target = $region12
    $region11: #{up_block_forward.6} parent=5 // pred_region
      %s216 = ssub.s32 %s14, 1
      // Predicated region
      $region13: #{up_block_forward.6} parent=11 // pred_check
        %p217 = pneg %p61
      $region14: #{up_block_forward.6} parent=11 // pred_check_branch
        %219 = sbr.rel (%p217) target = $region16
      $region15: #{up_block_forward.6} parent=11 // pred_region
        _
      $region16: #{up_block_forward.6} parent=11 // pred_fallthru
        _
      // Predicated region
      $region17: #{up_block_forward.6} parent=11 // pred_check
        %p220 = pneg %p82
      $region18: #{up_block_forward.6} parent=11 // pred_check_branch
        %222 = sbr.rel (%p220) target = $region20
      $region19: #{up_block_forward.6} parent=11 // pred_region
        _
      $region20: #{up_block_forward.6} parent=11 // pred_fallthru
        _
      // Predicated region
      $region21: #{up_block_forward.6} parent=11 // pred_check
        %p223 = pneg %p103
      $region22: #{up_block_forward.6} parent=11 // pred_check_branch
        %225 = sbr.rel (%p223) target = $region24
      $region23: #{up_block_forward.6} parent=11 // pred_region
        _
      $region24: #{up_block_forward.6} parent=11 // pred_fallthru
        _
      // Predicated region
      $region25: #{up_block_forward.6} parent=11 // pred_check
        %p226 = pneg %p124
      $region26: #{up_block_forward.6} parent=11 // pred_check_branch
        %228 = sbr.rel (%p226) target = $region28
      $region27: #{up_block_forward.6} parent=11 // pred_region
        _
      $region28: #{up_block_forward.6} parent=11 // pred_fallthru
        _
    $region12: #{up_block_forward.6} parent=5 // pred_fallthru
      _
    %p229 = scmp.lt.s32.totalorder %s14, 2
    // Predicated region
    $region29: #{up_block_forward.6} parent=5 // pred_check
      %p230 = pneg %p229
    $region30: #{up_block_forward.6} parent=5 // pred_check_branch
      %232 = sbr.rel (%p230) target = $region32
    $region31: #{up_block_forward.6} parent=5 // pred_region
      // Predicated region
      $region33: #{up_block_forward.6} parent=31 // pred_check
        %p233 = pneg %p34
      $region34: #{up_block_forward.6} parent=31 // pred_check_branch
        %235 = sbr.rel (%p233) target = $region36
      $region35: #{up_block_forward.6} parent=31 // pred_region
        %p236 = scmp.lt.s32.totalorder %s14, 1
        %s237 = scalar_select %p236, %s14, 1
        %s238 = smul.addr %s237, 32
        %s239 = smul.addr %s238, 8
        %s240 = scalar_lea.vmem %s0, %s239
      $region36: #{up_block_forward.6} parent=31 // pred_fallthru
        _
    $region32: #{up_block_forward.6} parent=5 // pred_fallthru
      _
    %p241 = scmp.le.s32.totalorder 1, %s14
    %p242 = scmp.lt.s32.totalorder %s14, 3
    %p243 = pnand %p241, %p242
    %p244 = pneg %p243
    // Predicated region
    $region37: #{up_block_forward.6} parent=5 // pred_check
      _
    $region38: #{up_block_forward.6} parent=5 // pred_check_branch
      %246 = sbr.rel (%p243) target = $region40
    $region39: #{up_block_forward.6} parent=5 // pred_region
      %s247 = ssub.s32 %s14, 1
      %p248 = scmp.lt.s32.totalorder %s19, 1
      %s249 = scalar_select %p248, %s19, 1
      %s250 = smul.addr %s249, 32
      %s251 = smul.addr %s250, 8
      %s252 = scalar_lea.vmem %s0, %s251
      %p253 = pneg %p40
      %p254 = pneg %p37
      %p255 = pneg %p61
      %p256 = pneg %p58
      %p257 = pneg %p82
      %p258 = pneg %p79
      %p259 = pneg %p103
      %p260 = pneg %p100
      %p261 = pneg %p124
      %p262 = pneg %p121
      %p263 = pneg %p150
      %p264 = pneg %p147
      %p265 = scmp.lt.s32.totalorder %s19, 1
      %s266 = scalar_select %p265, %s19, 1
      %s267 = smul.addr %s266, 32
      %s268 = smul.addr %s267, 8
      %s269 = scalar_lea.vmem %s5, %s268
      %p270 = pneg %p176
      %p271 = pneg %p173
      %p272 = scmp.lt.s32.totalorder %s19, 1
      %s273 = scalar_select %p272, %s19, 1
      %s274 = scalar_lea.vmem %s6, %s273
      %p275 = pneg %p202
      %p276 = pneg %p199
      %p277 = scmp.lt.s32.totalorder %s19, 1
      %s278 = scalar_select %p277, %s19, 1
      %s279 = scalar_lea.vmem %s7, %s278
      %p280 = scmp.lt.s32.totalorder %s19, 1
      %s281 = scalar_select %p280, %s19, 1
      %s282 = smul.addr %s281, 32
      %s283 = smul.addr %s282, 8
      %s284 = scalar_lea.vmem %s0, %s283
      %p285 = scmp.lt.s32.totalorder %s19, 1
      %s286 = scalar_select %p285, %s19, 1
      %s287 = smul.addr %s286, 32
      %s288 = smul.addr %s287, 8
      %s289 = scalar_lea.vmem %s5, %s288
      %p290 = scmp.lt.s32.totalorder %s19, 1
      %s291 = scalar_select %p290, %s19, 1
      %s292 = scalar_lea.vmem %s6, %s291
      %p293 = scmp.lt.s32.totalorder %s19, 1
      %s294 = scalar_select %p293, %s19, 1
      %s295 = scalar_lea.vmem %s7, %s294
      %v296 = vld [vmem:[%s284] sm:$0xff]
      %v297 = vld [vmem:[%s284 + $0x8] sm:$0xff]
      %v298 = vld [vmem:[%s284 + $0x10] sm:$0xff]
      %v299 = vld [vmem:[%s284 + $0x18] sm:$0xff]
      %v300 = vld [vmem:[%s284 + $0x20] sm:$0xff]
      %v301 = vld [vmem:[%s284 + $0x28] sm:$0xff]
      %v302 = vld [vmem:[%s284 + $0x30] sm:$0xff]
      %v303 = vld [vmem:[%s284 + $0x38] sm:$0xff]
      %v304 = vld [vmem:[%s284 + $0x40] sm:$0xff]
      %v305 = vld [vmem:[%s284 + $0x48] sm:$0xff]
      %v306 = vld [vmem:[%s284 + $0x50] sm:$0xff]
      %v307 = vld [vmem:[%s284 + $0x58] sm:$0xff]
      %v308 = vld [vmem:[%s284 + $0x60] sm:$0xff]
      %v309 = vld [vmem:[%s284 + $0x68] sm:$0xff]
      %v310 = vld [vmem:[%s284 + $0x70] sm:$0xff]
      %v311 = vld [vmem:[%s284 + $0x78] sm:$0xff]
      %v312 = vld [vmem:[%s284 + $0x80] sm:$0xff]
      %v313 = vld [vmem:[%s284 + $0x88] sm:$0xff]
      %v314 = vld [vmem:[%s284 + $0x90] sm:$0xff]
      %v315 = vld [vmem:[%s284 + $0x98] sm:$0xff]
      %v316 = vld [vmem:[%s284 + $0xa0] sm:$0xff]
      %v317 = vld [vmem:[%s284 + $0xa8] sm:$0xff]
      %v318 = vld [vmem:[%s284 + $0xb0] sm:$0xff]
      %v319 = vld [vmem:[%s284 + $0xb8] sm:$0xff]
      %v320 = vld [vmem:[%s284 + $0xc0] sm:$0xff]
      %v321 = vld [vmem:[%s284 + $0xc8] sm:$0xff]
      %v322 = vld [vmem:[%s284 + $0xd0] sm:$0xff]
      %v323 = vld [vmem:[%s284 + $0xd8] sm:$0xff]
      %v324 = vld [vmem:[%s284 + $0xe0] sm:$0xff]
      %v325 = vld [vmem:[%s284 + $0xe8] sm:$0xff]
      %v326 = vld [vmem:[%s284 + $0xf0] sm:$0xff]
      %v327 = vld [vmem:[%s284 + $0xf8] sm:$0xff]
      %v328 = vld [vmem:[%s3] sm:$0x1]
      %v330 = vlaneseq
      %v331 = vshrl.u32 %v330, 7
      %v332 = vsub.s32 0, %v331
      %v333 = vrot.slane %v328, %v332
      %v335 = vmul.f32 %v296, %v333
      %v336 = vmul.f32 %v297, %v333
      %v337 = vmul.f32 %v298, %v333
      %v338 = vmul.f32 %v299, %v333
      %v339 = vmul.f32 %v300, %v333
      %v340 = vmul.f32 %v301, %v333
      %v341 = vmul.f32 %v302, %v333
      %v342 = vmul.f32 %v303, %v333
      %v343 = vmul.f32 %v304, %v333
      %v344 = vmul.f32 %v305, %v333
      %v345 = vmul.f32 %v306, %v333
      %v346 = vmul.f32 %v307, %v333
      %v347 = vmul.f32 %v308, %v333
      %v348 = vmul.f32 %v309, %v333
      %v349 = vmul.f32 %v310, %v333
      %v350 = vmul.f32 %v311, %v333
      %v351 = vmul.f32 %v312, %v333
      %v352 = vmul.f32 %v313, %v333
      %v353 = vmul.f32 %v314, %v333
      %v354 = vmul.f32 %v315, %v333
      %v355 = vmul.f32 %v316, %v333
      %v356 = vmul.f32 %v317, %v333
      %v357 = vmul.f32 %v318, %v333
      %v358 = vmul.f32 %v319, %v333
      %v359 = vmul.f32 %v320, %v333
      %v360 = vmul.f32 %v321, %v333
      %v361 = vmul.f32 %v322, %v333
      %v362 = vmul.f32 %v323, %v333
      %v363 = vmul.f32 %v324, %v333
      %v364 = vmul.f32 %v325, %v333
      %v365 = vmul.f32 %v326, %v333
      %v366 = vmul.f32 %v327, %v333
      %v367 = vld [vmem:[%s4] sm:$0x1]
      %v369 = vlaneseq
      %v370 = vshrl.u32 %v369, 7
      %v371 = vsub.s32 0, %v370
      %v372 = vrot.slane %v367, %v371
      %v374 = vadd.f32 %v335, %v372
      %v375 = vadd.f32 %v336, %v372
      %v376 = vadd.f32 %v337, %v372
      %v377 = vadd.f32 %v338, %v372
      %v378 = vadd.f32 %v339, %v372
      %v379 = vadd.f32 %v340, %v372
      %v380 = vadd.f32 %v341, %v372
      %v381 = vadd.f32 %v342, %v372
      %v382 = vadd.f32 %v343, %v372
      %v383 = vadd.f32 %v344, %v372
      %v384 = vadd.f32 %v345, %v372
      %v385 = vadd.f32 %v346, %v372
      %v386 = vadd.f32 %v347, %v372
      %v387 = vadd.f32 %v348, %v372
      %v388 = vadd.f32 %v349, %v372
      %v389 = vadd.f32 %v350, %v372
      %v390 = vadd.f32 %v351, %v372
      %v391 = vadd.f32 %v352, %v372
      %v392 = vadd.f32 %v353, %v372
      %v393 = vadd.f32 %v354, %v372
      %v394 = vadd.f32 %v355, %v372
      %v395 = vadd.f32 %v356, %v372
      %v396 = vadd.f32 %v357, %v372
      %v397 = vadd.f32 %v358, %v372
      %v398 = vadd.f32 %v359, %v372
      %v399 = vadd.f32 %v360, %v372
      %v400 = vadd.f32 %v361, %v372
      %v401 = vadd.f32 %v362, %v372
      %v402 = vadd.f32 %v363, %v372
      %v403 = vadd.f32 %v364, %v372
      %v404 = vadd.f32 %v365, %v372
      %v405 = vadd.f32 %v366, %v372
      %v406 = vmax.f32 %v374, 0.0
      %v407 = vmax.f32 %v375, 0.0
      %v408 = vmax.f32 %v376, 0.0
      %v409 = vmax.f32 %v377, 0.0
      %v410 = vmax.f32 %v378, 0.0
      %v411 = vmax.f32 %v379, 0.0
      %v412 = vmax.f32 %v380, 0.0
      %v413 = vmax.f32 %v381, 0.0
      %v414 = vmax.f32 %v382, 0.0
      %v415 = vmax.f32 %v383, 0.0
      %v416 = vmax.f32 %v384, 0.0
      %v417 = vmax.f32 %v385, 0.0
      %v418 = vmax.f32 %v386, 0.0
      %v419 = vmax.f32 %v387, 0.0
      %v420 = vmax.f32 %v388, 0.0
      %v421 = vmax.f32 %v389, 0.0
      %v422 = vmax.f32 %v390, 0.0
      %v423 = vmax.f32 %v391, 0.0
      %v424 = vmax.f32 %v392, 0.0
      %v425 = vmax.f32 %v393, 0.0
      %v426 = vmax.f32 %v394, 0.0
      %v427 = vmax.f32 %v395, 0.0
      %v428 = vmax.f32 %v396, 0.0
      %v429 = vmax.f32 %v397, 0.0
      %v430 = vmax.f32 %v398, 0.0
      %v431 = vmax.f32 %v399, 0.0
      %v432 = vmax.f32 %v400, 0.0
      %v433 = vmax.f32 %v401, 0.0
      %v434 = vmax.f32 %v402, 0.0
      %v435 = vmax.f32 %v403, 0.0
      %v436 = vmax.f32 %v404, 0.0
      %v437 = vmax.f32 %v405, 0.0
      %vm438 = vcmask 31744
      %439 = vst.msk [vmem:[#allocation2] sm:$0xff] %vm438, 0.0
      %440 = vst.msk [vmem:[#allocation2 + $0x8] sm:$0xff] %vm438, 0.0
      %vm441 = vcmask 25600
      %442 = vst.msk [vmem:[#allocation2 + $0x10] sm:$0x3] %vm441, 0.0
      %443 = vst.msk [vmem:[#allocation2 + $0x18] sm:$0xff] %vm438, 0.0
      %444 = vst.msk [vmem:[#allocation2 + $0x20] sm:$0xff] %vm438, 0.0
      %445 = vst.msk [vmem:[#allocation2 + $0x28] sm:$0x3] %vm441, 0.0
      %446 = vst.msk [vmem:[#allocation2 + $0x30] sm:$0xff] %vm438, 0.0
      %447 = vst.msk [vmem:[#allocation2 + $0x38] sm:$0xff] %vm438, 0.0
      %448 = vst.msk [vmem:[#allocation2 + $0x40] sm:$0x3] %vm441, 0.0
      %449 = vst.msk [vmem:[#allocation2 + $0x48] sm:$0xff] %vm438, 0.0
      %450 = vst.msk [vmem:[#allocation2 + $0x50] sm:$0xff] %vm438, 0.0
      %451 = vst.msk [vmem:[#allocation2 + $0x58] sm:$0x3] %vm441, 0.0
      %452 = vst.msk [vmem:[#allocation2 + $0x60] sm:$0xff] %vm438, 0.0
      %453 = vst.msk [vmem:[#allocation2 + $0x68] sm:$0xff] %vm438, 0.0
      %454 = vst.msk [vmem:[#allocation2 + $0x70] sm:$0x3] %vm441, 0.0
      %455 = vst.msk [vmem:[#allocation2 + $0x78] sm:$0xff] %vm438, 0.0
      %456 = vst.msk [vmem:[#allocation2 + $0x80] sm:$0xff] %vm438, 0.0
      %457 = vst.msk [vmem:[#allocation2 + $0x88] sm:$0x3] %vm441, 0.0
      %458 = vst.msk [vmem:[#allocation2 + $0x90] sm:$0xff] %vm438, 0.0
      %459 = vst.msk [vmem:[#allocation2 + $0x98] sm:$0xff] %vm438, 0.0
      %460 = vst.msk [vmem:[#allocation2 + $0xa0] sm:$0x3] %vm441, 0.0
      %461 = vst.msk [vmem:[#allocation2 + $0xa8] sm:$0xff] %vm438, 0.0
      %462 = vst.msk [vmem:[#allocation2 + $0xb0] sm:$0xff] %vm438, 0.0
      %463 = vst.msk [vmem:[#allocation2 + $0xb8] sm:$0x3] %vm441, 0.0
      %464 = vst.msk [vmem:[#allocation2 + $0xc0] sm:$0xff] %vm438, 0.0
      %465 = vst.msk [vmem:[#allocation2 + $0xc8] sm:$0xff] %vm438, 0.0
      %466 = vst.msk [vmem:[#allocation2 + $0xd0] sm:$0x3] %vm441, 0.0
      %467 = vst.msk [vmem:[#allocation2 + $0xd8] sm:$0xff] %vm438, 0.0
      %468 = vst.msk [vmem:[#allocation2 + $0xe0] sm:$0xff] %vm438, 0.0
      %469 = vst.msk [vmem:[#allocation2 + $0xe8] sm:$0x3] %vm441, 0.0
      %470 = vst.msk [vmem:[#allocation2 + $0xf0] sm:$0xff] %vm438, 0.0
      %471 = vst.msk [vmem:[#allocation2 + $0xf8] sm:$0xff] %vm438, 0.0
      %472 = vst.msk [vmem:[#allocation2 + $0x100] sm:$0x3] %vm441, 0.0
      %473 = vst.msk [vmem:[#allocation2 + $0x108] sm:$0xff] %vm438, 0.0
      %474 = vst.msk [vmem:[#allocation2 + $0x110] sm:$0xff] %vm438, 0.0
      %475 = vst.msk [vmem:[#allocation2 + $0x118] sm:$0x3] %vm441, 0.0
      %476 = vst.msk [vmem:[#allocation2 + $0x120] sm:$0xff] %vm438, 0.0
      %477 = vst.msk [vmem:[#allocation2 + $0x128] sm:$0xff] %vm438, 0.0
      %478 = vst.msk [vmem:[#allocation2 + $0x130] sm:$0x3] %vm441, 0.0
      %479 = vst.msk [vmem:[#allocation2 + $0x138] sm:$0xff] %vm438, 0.0
      %480 = vst.msk [vmem:[#allocation2 + $0x140] sm:$0xff] %vm438, 0.0
      %481 = vst.msk [vmem:[#allocation2 + $0x148] sm:$0x3] %vm441, 0.0
      %482 = vst.msk [vmem:[#allocation2 + $0x150] sm:$0xff] %vm438, 0.0
      %483 = vst.msk [vmem:[#allocation2 + $0x158] sm:$0xff] %vm438, 0.0
      %484 = vst.msk [vmem:[#allocation2 + $0x160] sm:$0x3] %vm441, 0.0
      %485 = vst.msk [vmem:[#allocation2 + $0x168] sm:$0xff] %vm438, 0.0
      %486 = vst.msk [vmem:[#allocation2 + $0x170] sm:$0xff] %vm438, 0.0
      %487 = vst.msk [vmem:[#allocation2 + $0x178] sm:$0x3] %vm441, 0.0
      %488 = vst.msk [vmem:[#allocation2 + $0x180] sm:$0xff] %vm438, 0.0
      %489 = vst.msk [vmem:[#allocation2 + $0x188] sm:$0xff] %vm438, 0.0
      %490 = vst.msk [vmem:[#allocation2 + $0x190] sm:$0x3] %vm441, 0.0
      %491 = vst.msk [vmem:[#allocation2 + $0x198] sm:$0xff] %vm438, 0.0
      %492 = vst.msk [vmem:[#allocation2 + $0x1a0] sm:$0xff] %vm438, 0.0
      %493 = vst.msk [vmem:[#allocation2 + $0x1a8] sm:$0x3] %vm441, 0.0
      %s494 = scalar_lea.vmem [#allocation2], 24
      %495 = vst.msk [vmem:[%s494 + $0x1] sm:$0xff] %vm438, %v406
      %496 = vst.msk [vmem:[%s494 + $0x9] sm:$0xff] %vm438, %v407
      %497 = vst.msk [vmem:[%s494 + $0x19] sm:$0xff] %vm438, %v408
      %498 = vst.msk [vmem:[%s494 + $0x21] sm:$0xff] %vm438, %v409
      %499 = vst.msk [vmem:[%s494 + $0x31] sm:$0xff] %vm438, %v410
      %500 = vst.msk [vmem:[%s494 + $0x39] sm:$0xff] %vm438, %v411
      %501 = vst.msk [vmem:[%s494 + $0x49] sm:$0xff] %vm438, %v412
      %502 = vst.msk [vmem:[%s494 + $0x51] sm:$0xff] %vm438, %v413
      %503 = vst.msk [vmem:[%s494 + $0x61] sm:$0xff] %vm438, %v414
      %504 = vst.msk [vmem:[%s494 + $0x69] sm:$0xff] %vm438, %v415
      %505 = vst.msk [vmem:[%s494 + $0x79] sm:$0xff] %vm438, %v416
      %506 = vst.msk [vmem:[%s494 + $0x81] sm:$0xff] %vm438, %v417
      %507 = vst.msk [vmem:[%s494 + $0x91] sm:$0xff] %vm438, %v418
      %508 = vst.msk [vmem:[%s494 + $0x99] sm:$0xff] %vm438, %v419
      %509 = vst.msk [vmem:[%s494 + $0xa9] sm:$0xff] %vm438, %v420
      %510 = vst.msk [vmem:[%s494 + $0xb1] sm:$0xff] %vm438, %v421
      %511 = vst.msk [vmem:[%s494 + $0xc1] sm:$0xff] %vm438, %v422
      %512 = vst.msk [vmem:[%s494 + $0xc9] sm:$0xff] %vm438, %v423
      %513 = vst.msk [vmem:[%s494 + $0xd9] sm:$0xff] %vm438, %v424
      %514 = vst.msk [vmem:[%s494 + $0xe1] sm:$0xff] %vm438, %v425
      %515 = vst.msk [vmem:[%s494 + $0xf1] sm:$0xff] %vm438, %v426
      %516 = vst.msk [vmem:[%s494 + $0xf9] sm:$0xff] %vm438, %v427
      %517 = vst.msk [vmem:[%s494 + $0x109] sm:$0xff] %vm438, %v428
      %518 = vst.msk [vmem:[%s494 + $0x111] sm:$0xff] %vm438, %v429
      %519 = vst.msk [vmem:[%s494 + $0x121] sm:$0xff] %vm438, %v430
      %520 = vst.msk [vmem:[%s494 + $0x129] sm:$0xff] %vm438, %v431
      %521 = vst.msk [vmem:[%s494 + $0x139] sm:$0xff] %vm438, %v432
      %522 = vst.msk [vmem:[%s494 + $0x141] sm:$0xff] %vm438, %v433
      %523 = vst.msk [vmem:[%s494 + $0x151] sm:$0xff] %vm438, %v434
      %524 = vst.msk [vmem:[%s494 + $0x159] sm:$0xff] %vm438, %v435
      %525 = vst.msk [vmem:[%s494 + $0x169] sm:$0xff] %vm438, %v436
      %526 = vst.msk [vmem:[%s494 + $0x171] sm:$0xff] %vm438, %v437
      %v527 = vld [vmem:[#allocation2] sm:$0xff]
      %v528 = vld [vmem:[#allocation2 + $0x8] sm:$0xff]
      %v529 = vld [vmem:[#allocation2 + $0x18] sm:$0xff]
      %v530 = vld [vmem:[#allocation2 + $0x20] sm:$0xff]
      %v531 = vld [vmem:[#allocation2 + $0x30] sm:$0xff]
      %v532 = vld [vmem:[#allocation2 + $0x38] sm:$0xff]
      %v533 = vld [vmem:[#allocation2 + $0x48] sm:$0xff]
      %v534 = vld [vmem:[#allocation2 + $0x50] sm:$0xff]
      %v535 = vld [vmem:[#allocation2 + $0x60] sm:$0xff]
      %v536 = vld [vmem:[#allocation2 + $0x68] sm:$0xff]
      %v537 = vld [vmem:[#allocation2 + $0x78] sm:$0xff]
      %v538 = vld [vmem:[#allocation2 + $0x80] sm:$0xff]
      %v539 = vld [vmem:[#allocation2 + $0x90] sm:$0xff]
      %v540 = vld [vmem:[#allocation2 + $0x98] sm:$0xff]
      %v541 = vld [vmem:[#allocation2 + $0xa8] sm:$0xff]
      %v542 = vld [vmem:[#allocation2 + $0xb0] sm:$0xff]
      %v543 = vld [vmem:[#allocation2 + $0xc0] sm:$0xff]
      %v544 = vld [vmem:[#allocation2 + $0xc8] sm:$0xff]
      %v545 = vld [vmem:[#allocation2 + $0xd8] sm:$0xff]
      %v546 = vld [vmem:[#allocation2 + $0xe0] sm:$0xff]
      %v547 = vld [vmem:[#allocation2 + $0xf0] sm:$0xff]
      %v548 = vld [vmem:[#allocation2 + $0xf8] sm:$0xff]
      %v549 = vld [vmem:[#allocation2 + $0x108] sm:$0xff]
      %v550 = vld [vmem:[#allocation2 + $0x110] sm:$0xff]
      %v551 = vld [vmem:[#allocation2 + $0x120] sm:$0xff]
      %v552 = vld [vmem:[#allocation2 + $0x128] sm:$0xff]
      %v553 = vld [vmem:[#allocation2 + $0x138] sm:$0xff]
      %v554 = vld [vmem:[#allocation2 + $0x140] sm:$0xff]
      %v555 = vld [vmem:[#allocation2 + $0x150] sm:$0xff]
      %v556 = vld [vmem:[#allocation2 + $0x158] sm:$0xff]
      %v557 = vld [vmem:[#allocation2 + $0x168] sm:$0xff]
      %v558 = vld [vmem:[#allocation2 + $0x170] sm:$0xff]
      %v559 = vld [vmem:[#allocation2 + $0x1] sm:$0xff]
      %v560 = vld [vmem:[#allocation2 + $0x9] sm:$0xff]
      %v561 = vld [vmem:[#allocation2 + $0x19] sm:$0xff]
      %v562 = vld [vmem:[#allocation2 + $0x21] sm:$0xff]
      %v563 = vld [vmem:[#allocation2 + $0x31] sm:$0xff]
      %v564 = vld [vmem:[#allocation2 + $0x39] sm:$0xff]
      %v565 = vld [vmem:[#allocation2 + $0x49] sm:$0xff]
      %v566 = vld [vmem:[#allocation2 + $0x51] sm:$0xff]
      %v567 = vld [vmem:[#allocation2 + $0x61] sm:$0xff]
      %v568 = vld [vmem:[#allocation2 + $0x69] sm:$0xff]
      %v569 = vld [vmem:[#allocation2 + $0x79] sm:$0xff]
      %v570 = vld [vmem:[#allocation2 + $0x81] sm:$0xff]
      %v571 = vld [vmem:[#allocation2 + $0x91] sm:$0xff]
      %v572 = vld [vmem:[#allocation2 + $0x99] sm:$0xff]
      %v573 = vld [vmem:[#allocation2 + $0xa9] sm:$0xff]
      %v574 = vld [vmem:[#allocation2 + $0xb1] sm:$0xff]
      %v575 = vld [vmem:[#allocation2 + $0xc1] sm:$0xff]
      %v576 = vld [vmem:[#allocation2 + $0xc9] sm:$0xff]
      %v577 = vld [vmem:[#allocation2 + $0xd9] sm:$0xff]
      %v578 = vld [vmem:[#allocation2 + $0xe1] sm:$0xff]
      %v579 = vld [vmem:[#allocation2 + $0xf1] sm:$0xff]
      %v580 = vld [vmem:[#allocation2 + $0xf9] sm:$0xff]
      %v581 = vld [vmem:[#allocation2 + $0x109] sm:$0xff]
      %v582 = vld [vmem:[#allocation2 + $0x111] sm:$0xff]
      %v583 = vld [vmem:[#allocation2 + $0x121] sm:$0xff]
      %v584 = vld [vmem:[#allocation2 + $0x129] sm:$0xff]
      %v585 = vld [vmem:[#allocation2 + $0x139] sm:$0xff]
      %v586 = vld [vmem:[#allocation2 + $0x141] sm:$0xff]
      %v587 = vld [vmem:[#allocation2 + $0x151] sm:$0xff]
      %v588 = vld [vmem:[#allocation2 + $0x159] sm:$0xff]
      %v589 = vld [vmem:[#allocation2 + $0x169] sm:$0xff]
      %v590 = vld [vmem:[#allocation2 + $0x171] sm:$0xff]
      %v591 = vld [vmem:[#allocation2 + $0x2] sm:$0xff]
      %v592 = vld [vmem:[#allocation2 + $0xa] sm:$0xff]
      %v593 = vld [vmem:[#allocation2 + $0x1a] sm:$0xff]
      %v594 = vld [vmem:[#allocation2 + $0x22] sm:$0xff]
      %v595 = vld [vmem:[#allocation2 + $0x32] sm:$0xff]
      %v596 = vld [vmem:[#allocation2 + $0x3a] sm:$0xff]
      %v597 = vld [vmem:[#allocation2 + $0x4a] sm:$0xff]
      %v598 = vld [vmem:[#allocation2 + $0x52] sm:$0xff]
      %v599 = vld [vmem:[#allocation2 + $0x62] sm:$0xff]
      %v600 = vld [vmem:[#allocation2 + $0x6a] sm:$0xff]
      %v601 = vld [vmem:[#allocation2 + $0x7a] sm:$0xff]
      %v602 = vld [vmem:[#allocation2 + $0x82] sm:$0xff]
      %v603 = vld [vmem:[#allocation2 + $0x92] sm:$0xff]
      %v604 = vld [vmem:[#allocation2 + $0x9a] sm:$0xff]
      %v605 = vld [vmem:[#allocation2 + $0xaa] sm:$0xff]
      %v606 = vld [vmem:[#allocation2 + $0xb2] sm:$0xff]
      %v607 = vld [vmem:[#allocation2 + $0xc2] sm:$0xff]
      %v608 = vld [vmem:[#allocation2 + $0xca] sm:$0xff]
      %v609 = vld [vmem:[#allocation2 + $0xda] sm:$0xff]
      %v610 = vld [vmem:[#allocation2 + $0xe2] sm:$0xff]
      %v611 = vld [vmem:[#allocation2 + $0xf2] sm:$0xff]
      %v612 = vld [vmem:[#allocation2 + $0xfa] sm:$0xff]
      %v613 = vld [vmem:[#allocation2 + $0x10a] sm:$0xff]
      %v614 = vld [vmem:[#allocation2 + $0x112] sm:$0xff]
      %v615 = vld [vmem:[#allocation2 + $0x122] sm:$0xff]
      %v616 = vld [vmem:[#allocation2 + $0x12a] sm:$0xff]
      %v617 = vld [vmem:[#allocation2 + $0x13a] sm:$0xff]
      %v618 = vld [vmem:[#allocation2 + $0x142] sm:$0xff]
      %v619 = vld [vmem:[#allocation2 + $0x152] sm:$0xff]
      %v620 = vld [vmem:[#allocation2 + $0x15a] sm:$0xff]
      %v621 = vld [vmem:[#allocation2 + $0x16a] sm:$0xff]
      %v622 = vld [vmem:[#allocation2 + $0x172] sm:$0xff]
      %v623 = vld [vmem:[%s494] sm:$0xff]
      %v624 = vld [vmem:[%s494 + $0x8] sm:$0xff]
      %v625 = vld [vmem:[%s494 + $0x18] sm:$0xff]
      %v626 = vld [vmem:[%s494 + $0x20] sm:$0xff]
      %v627 = vld [vmem:[%s494 + $0x30] sm:$0xff]
      %v628 = vld [vmem:[%s494 + $0x38] sm:$0xff]
      %v629 = vld [vmem:[%s494 + $0x48] sm:$0xff]
      %v630 = vld [vmem:[%s494 + $0x50] sm:$0xff]
      %v631 = vld [vmem:[%s494 + $0x60] sm:$0xff]
      %v632 = vld [vmem:[%s494 + $0x68] sm:$0xff]
      %v633 = vld [vmem:[%s494 + $0x78] sm:$0xff]
      %v634 = vld [vmem:[%s494 + $0x80] sm:$0xff]
      %v635 = vld [vmem:[%s494 + $0x90] sm:$0xff]
      %v636 = vld [vmem:[%s494 + $0x98] sm:$0xff]
      %v637 = vld [vmem:[%s494 + $0xa8] sm:$0xff]
      %v638 = vld [vmem:[%s494 + $0xb0] sm:$0xff]
      %v639 = vld [vmem:[%s494 + $0xc0] sm:$0xff]
      %v640 = vld [vmem:[%s494 + $0xc8] sm:$0xff]
      %v641 = vld [vmem:[%s494 + $0xd8] sm:$0xff]
      %v642 = vld [vmem:[%s494 + $0xe0] sm:$0xff]
      %v643 = vld [vmem:[%s494 + $0xf0] sm:$0xff]
      %v644 = vld [vmem:[%s494 + $0xf8] sm:$0xff]
      %v645 = vld [vmem:[%s494 + $0x108] sm:$0xff]
      %v646 = vld [vmem:[%s494 + $0x110] sm:$0xff]
      %v647 = vld [vmem:[%s494 + $0x120] sm:$0xff]
      %v648 = vld [vmem:[%s494 + $0x128] sm:$0xff]
      %v649 = vld [vmem:[%s494 + $0x138] sm:$0xff]
      %v650 = vld [vmem:[%s494 + $0x140] sm:$0xff]
      %v651 = vld [vmem:[%s494 + $0x150] sm:$0xff]
      %v652 = vld [vmem:[%s494 + $0x158] sm:$0xff]
      %v653 = vld [vmem:[%s494 + $0x168] sm:$0xff]
      %v654 = vld [vmem:[%s494 + $0x170] sm:$0xff]
      %v655 = vld [vmem:[%s494 + $0x1] sm:$0xff]
      %v656 = vld [vmem:[%s494 + $0x9] sm:$0xff]
      %v657 = vld [vmem:[%s494 + $0x19] sm:$0xff]
      %v658 = vld [vmem:[%s494 + $0x21] sm:$0xff]
      %v659 = vld [vmem:[%s494 + $0x31] sm:$0xff]
      %v660 = vld [vmem:[%s494 + $0x39] sm:$0xff]
      %v661 = vld [vmem:[%s494 + $0x49] sm:$0xff]
      %v662 = vld [vmem:[%s494 + $0x51] sm:$0xff]
      %v663 = vld [vmem:[%s494 + $0x61] sm:$0xff]
      %v664 = vld [vmem:[%s494 + $0x69] sm:$0xff]
      %v665 = vld [vmem:[%s494 + $0x79] sm:$0xff]
      %v666 = vld [vmem:[%s494 + $0x81] sm:$0xff]
      %v667 = vld [vmem:[%s494 + $0x91] sm:$0xff]
      %v668 = vld [vmem:[%s494 + $0x99] sm:$0xff]
      %v669 = vld [vmem:[%s494 + $0xa9] sm:$0xff]
      %v670 = vld [vmem:[%s494 + $0xb1] sm:$0xff]
      %v671 = vld [vmem:[%s494 + $0xc1] sm:$0xff]
      %v672 = vld [vmem:[%s494 + $0xc9] sm:$0xff]
      %v673 = vld [vmem:[%s494 + $0xd9] sm:$0xff]
      %v674 = vld [vmem:[%s494 + $0xe1] sm:$0xff]
      %v675 = vld [vmem:[%s494 + $0xf1] sm:$0xff]
      %v676 = vld [vmem:[%s494 + $0xf9] sm:$0xff]
      %v677 = vld [vmem:[%s494 + $0x109] sm:$0xff]
      %v678 = vld [vmem:[%s494 + $0x111] sm:$0xff]
      %v679 = vld [vmem:[%s494 + $0x121] sm:$0xff]
      %v680 = vld [vmem:[%s494 + $0x129] sm:$0xff]
      %v681 = vld [vmem:[%s494 + $0x139] sm:$0xff]
      %v682 = vld [vmem:[%s494 + $0x141] sm:$0xff]
      %v683 = vld [vmem:[%s494 + $0x151] sm:$0xff]
      %v684 = vld [vmem:[%s494 + $0x159] sm:$0xff]
      %v685 = vld [vmem:[%s494 + $0x169] sm:$0xff]
      %v686 = vld [vmem:[%s494 + $0x171] sm:$0xff]
      %v687 = vld [vmem:[%s494 + $0x2] sm:$0xff]
      %v688 = vld [vmem:[%s494 + $0xa] sm:$0xff]
      %v689 = vld [vmem:[%s494 + $0x1a] sm:$0xff]
      %v690 = vld [vmem:[%s494 + $0x22] sm:$0xff]
      %v691 = vld [vmem:[%s494 + $0x32] sm:$0xff]
      %v692 = vld [vmem:[%s494 + $0x3a] sm:$0xff]
      %v693 = vld [vmem:[%s494 + $0x4a] sm:$0xff]
      %v694 = vld [vmem:[%s494 + $0x52] sm:$0xff]
      %v695 = vld [vmem:[%s494 + $0x62] sm:$0xff]
      %v696 = vld [vmem:[%s494 + $0x6a] sm:$0xff]
      %v697 = vld [vmem:[%s494 + $0x7a] sm:$0xff]
      %v698 = vld [vmem:[%s494 + $0x82] sm:$0xff]
      %v699 = vld [vmem:[%s494 + $0x92] sm:$0xff]
      %v700 = vld [vmem:[%s494 + $0x9a] sm:$0xff]
      %v701 = vld [vmem:[%s494 + $0xaa] sm:$0xff]
      %v702 = vld [vmem:[%s494 + $0xb2] sm:$0xff]
      %v703 = vld [vmem:[%s494 + $0xc2] sm:$0xff]
      %v704 = vld [vmem:[%s494 + $0xca] sm:$0xff]
      %v705 = vld [vmem:[%s494 + $0xda] sm:$0xff]
      %v706 = vld [vmem:[%s494 + $0xe2] sm:$0xff]
      %v707 = vld [vmem:[%s494 + $0xf2] sm:$0xff]
      %v708 = vld [vmem:[%s494 + $0xfa] sm:$0xff]
      %v709 = vld [vmem:[%s494 + $0x10a] sm:$0xff]
      %v710 = vld [vmem:[%s494 + $0x112] sm:$0xff]
      %v711 = vld [vmem:[%s494 + $0x122] sm:$0xff]
      %v712 = vld [vmem:[%s494 + $0x12a] sm:$0xff]
      %v713 = vld [vmem:[%s494 + $0x13a] sm:$0xff]
      %v714 = vld [vmem:[%s494 + $0x142] sm:$0xff]
      %v715 = vld [vmem:[%s494 + $0x152] sm:$0xff]
      %v716 = vld [vmem:[%s494 + $0x15a] sm:$0xff]
      %v717 = vld [vmem:[%s494 + $0x16a] sm:$0xff]
      %v718 = vld [vmem:[%s494 + $0x172] sm:$0xff]
      %s719 = scalar_lea.vmem [#allocation2], 48
      %v720 = vld [vmem:[%s719] sm:$0xff]
      %v721 = vld [vmem:[%s719 + $0x8] sm:$0xff]
      %v722 = vld [vmem:[%s719 + $0x18] sm:$0xff]
      %v723 = vld [vmem:[%s719 + $0x20] sm:$0xff]
      %v724 = vld [vmem:[%s719 + $0x30] sm:$0xff]
      %v725 = vld [vmem:[%s719 + $0x38] sm:$0xff]
      %v726 = vld [vmem:[%s719 + $0x48] sm:$0xff]
      %v727 = vld [vmem:[%s719 + $0x50] sm:$0xff]
      %v728 = vld [vmem:[%s719 + $0x60] sm:$0xff]
      %v729 = vld [vmem:[%s719 + $0x68] sm:$0xff]
      %v730 = vld [vmem:[%s719 + $0x78] sm:$0xff]
      %v731 = vld [vmem:[%s719 + $0x80] sm:$0xff]
      %v732 = vld [vmem:[%s719 + $0x90] sm:$0xff]
      %v733 = vld [vmem:[%s719 + $0x98] sm:$0xff]
      %v734 = vld [vmem:[%s719 + $0xa8] sm:$0xff]
      %v735 = vld [vmem:[%s719 + $0xb0] sm:$0xff]
      %v736 = vld [vmem:[%s719 + $0xc0] sm:$0xff]
      %v737 = vld [vmem:[%s719 + $0xc8] sm:$0xff]
      %v738 = vld [vmem:[%s719 + $0xd8] sm:$0xff]
      %v739 = vld [vmem:[%s719 + $0xe0] sm:$0xff]
      %v740 = vld [vmem:[%s719 + $0xf0] sm:$0xff]
      %v741 = vld [vmem:[%s719 + $0xf8] sm:$0xff]
      %v742 = vld [vmem:[%s719 + $0x108] sm:$0xff]
      %v743 = vld [vmem:[%s719 + $0x110] sm:$0xff]
      %v744 = vld [vmem:[%s719 + $0x120] sm:$0xff]
      %v745 = vld [vmem:[%s719 + $0x128] sm:$0xff]
      %v746 = vld [vmem:[%s719 + $0x138] sm:$0xff]
      %v747 = vld [vmem:[%s719 + $0x140] sm:$0xff]
      %v748 = vld [vmem:[%s719 + $0x150] sm:$0xff]
      %v749 = vld [vmem:[%s719 + $0x158] sm:$0xff]
      %v750 = vld [vmem:[%s719 + $0x168] sm:$0xff]
      %v751 = vld [vmem:[%s719 + $0x170] sm:$0xff]
      %v752 = vld [vmem:[%s719 + $0x1] sm:$0xff]
      %v753 = vld [vmem:[%s719 + $0x9] sm:$0xff]
      %v754 = vld [vmem:[%s719 + $0x19] sm:$0xff]
      %v755 = vld [vmem:[%s719 + $0x21] sm:$0xff]
      %v756 = vld [vmem:[%s719 + $0x31] sm:$0xff]
      %v757 = vld [vmem:[%s719 + $0x39] sm:$0xff]
      %v758 = vld [vmem:[%s719 + $0x49] sm:$0xff]
      %v759 = vld [vmem:[%s719 + $0x51] sm:$0xff]
      %v760 = vld [vmem:[%s719 + $0x61] sm:$0xff]
      %v761 = vld [vmem:[%s719 + $0x69] sm:$0xff]
      %v762 = vld [vmem:[%s719 + $0x79] sm:$0xff]
      %v763 = vld [vmem:[%s719 + $0x81] sm:$0xff]
      %v764 = vld [vmem:[%s719 + $0x91] sm:$0xff]
      %v765 = vld [vmem:[%s719 + $0x99] sm:$0xff]
      %v766 = vld [vmem:[%s719 + $0xa9] sm:$0xff]
      %v767 = vld [vmem:[%s719 + $0xb1] sm:$0xff]
      %v768 = vld [vmem:[%s719 + $0xc1] sm:$0xff]
      %v769 = vld [vmem:[%s719 + $0xc9] sm:$0xff]
      %v770 = vld [vmem:[%s719 + $0xd9] sm:$0xff]
      %v771 = vld [vmem:[%s719 + $0xe1] sm:$0xff]
      %v772 = vld [vmem:[%s719 + $0xf1] sm:$0xff]
      %v773 = vld [vmem:[%s719 + $0xf9] sm:$0xff]
      %v774 = vld [vmem:[%s719 + $0x109] sm:$0xff]
      %v775 = vld [vmem:[%s719 + $0x111] sm:$0xff]
      %v776 = vld [vmem:[%s719 + $0x121] sm:$0xff]
      %v777 = vld [vmem:[%s719 + $0x129] sm:$0xff]
      %v778 = vld [vmem:[%s719 + $0x139] sm:$0xff]
      %v779 = vld [vmem:[%s719 + $0x141] sm:$0xff]
      %v780 = vld [vmem:[%s719 + $0x151] sm:$0xff]
      %v781 = vld [vmem:[%s719 + $0x159] sm:$0xff]
      %v782 = vld [vmem:[%s719 + $0x169] sm:$0xff]
      %v783 = vld [vmem:[%s719 + $0x171] sm:$0xff]
      %v784 = vld [vmem:[%s719 + $0x2] sm:$0xff]
      %v785 = vld [vmem:[%s719 + $0xa] sm:$0xff]
      %v786 = vld [vmem:[%s719 + $0x1a] sm:$0xff]
      %v787 = vld [vmem:[%s719 + $0x22] sm:$0xff]
      %v788 = vld [vmem:[%s719 + $0x32] sm:$0xff]
      %v789 = vld [vmem:[%s719 + $0x3a] sm:$0xff]
      %v790 = vld [vmem:[%s719 + $0x4a] sm:$0xff]
      %v791 = vld [vmem:[%s719 + $0x52] sm:$0xff]
      %v792 = vld [vmem:[%s719 + $0x62] sm:$0xff]
      %v793 = vld [vmem:[%s719 + $0x6a] sm:$0xff]
      %v794 = vld [vmem:[%s719 + $0x7a] sm:$0xff]
      %v795 = vld [vmem:[%s719 + $0x82] sm:$0xff]
      %v796 = vld [vmem:[%s719 + $0x92] sm:$0xff]
      %v797 = vld [vmem:[%s719 + $0x9a] sm:$0xff]
      %v798 = vld [vmem:[%s719 + $0xaa] sm:$0xff]
      %v799 = vld [vmem:[%s719 + $0xb2] sm:$0xff]
      %v800 = vld [vmem:[%s719 + $0xc2] sm:$0xff]
      %v801 = vld [vmem:[%s719 + $0xca] sm:$0xff]
      %v802 = vld [vmem:[%s719 + $0xda] sm:$0xff]
      %v803 = vld [vmem:[%s719 + $0xe2] sm:$0xff]
      %v804 = vld [vmem:[%s719 + $0xf2] sm:$0xff]
      %v805 = vld [vmem:[%s719 + $0xfa] sm:$0xff]
      %v806 = vld [vmem:[%s719 + $0x10a] sm:$0xff]
      %v807 = vld [vmem:[%s719 + $0x112] sm:$0xff]
      %v808 = vld [vmem:[%s719 + $0x122] sm:$0xff]
      %v809 = vld [vmem:[%s719 + $0x12a] sm:$0xff]
      %v810 = vld [vmem:[%s719 + $0x13a] sm:$0xff]
      %v811 = vld [vmem:[%s719 + $0x142] sm:$0xff]
      %v812 = vld [vmem:[%s719 + $0x152] sm:$0xff]
      %v813 = vld [vmem:[%s719 + $0x15a] sm:$0xff]
      %v814 = vld [vmem:[%s719 + $0x16a] sm:$0xff]
      %v815 = vld [vmem:[%s719 + $0x172] sm:$0xff]
      %848 = vrot.lane.b32.xlu0 %v559, 4
      %v849 = vpop.permute.xlu0 %848
      %850 = vrot.lane.b32.xlu0 %v560, 4
      %v851 = vpop.permute.xlu0 %850
      %852 = vrot.lane.b32.xlu0 %v561, 4
      %v853 = vpop.permute.xlu0 %852
      %854 = vrot.lane.b32.xlu0 %v562, 4
      %v855 = vpop.permute.xlu0 %854
      %856 = vrot.lane.b32.xlu0 %v563, 4
      %v857 = vpop.permute.xlu0 %856
      %858 = vrot.lane.b32.xlu0 %v564, 4
      %v859 = vpop.permute.xlu0 %858
      %860 = vrot.lane.b32.xlu0 %v565, 4
      %v861 = vpop.permute.xlu0 %860
      %862 = vrot.lane.b32.xlu0 %v566, 4
      %v863 = vpop.permute.xlu0 %862
      %864 = vrot.lane.b32.xlu0 %v567, 4
      %v865 = vpop.permute.xlu0 %864
      %866 = vrot.lane.b32.xlu0 %v568, 4
      %v867 = vpop.permute.xlu0 %866
      %868 = vrot.lane.b32.xlu0 %v569, 4
      %v869 = vpop.permute.xlu0 %868
      %870 = vrot.lane.b32.xlu0 %v570, 4
      %v871 = vpop.permute.xlu0 %870
      %872 = vrot.lane.b32.xlu0 %v571, 4
      %v873 = vpop.permute.xlu0 %872
      %874 = vrot.lane.b32.xlu0 %v572, 4
      %v875 = vpop.permute.xlu0 %874
      %876 = vrot.lane.b32.xlu0 %v573, 4
      %v877 = vpop.permute.xlu0 %876
      %878 = vrot.lane.b32.xlu0 %v574, 4
      %v879 = vpop.permute.xlu0 %878
      %880 = vrot.lane.b32.xlu0 %v575, 4
      %v881 = vpop.permute.xlu0 %880
      %882 = vrot.lane.b32.xlu0 %v576, 4
      %v883 = vpop.permute.xlu0 %882
      %884 = vrot.lane.b32.xlu0 %v577, 4
      %v885 = vpop.permute.xlu0 %884
      %886 = vrot.lane.b32.xlu0 %v578, 4
      %v887 = vpop.permute.xlu0 %886
      %888 = vrot.lane.b32.xlu0 %v579, 4
      %v889 = vpop.permute.xlu0 %888
      %890 = vrot.lane.b32.xlu0 %v580, 4
      %v891 = vpop.permute.xlu0 %890
      %892 = vrot.lane.b32.xlu0 %v581, 4
      %v893 = vpop.permute.xlu0 %892
      %894 = vrot.lane.b32.xlu0 %v582, 4
      %v895 = vpop.permute.xlu0 %894
      %896 = vrot.lane.b32.xlu0 %v583, 4
      %v897 = vpop.permute.xlu0 %896
      %898 = vrot.lane.b32.xlu0 %v584, 4
      %v899 = vpop.permute.xlu0 %898
      %900 = vrot.lane.b32.xlu0 %v585, 4
      %v901 = vpop.permute.xlu0 %900
      %902 = vrot.lane.b32.xlu0 %v586, 4
      %v903 = vpop.permute.xlu0 %902
      %904 = vrot.lane.b32.xlu0 %v587, 4
      %v905 = vpop.permute.xlu0 %904
      %906 = vrot.lane.b32.xlu0 %v588, 4
      %v907 = vpop.permute.xlu0 %906
      %908 = vrot.lane.b32.xlu0 %v589, 4
      %v909 = vpop.permute.xlu0 %908
      %910 = vrot.lane.b32.xlu0 %v590, 4
      %v911 = vpop.permute.xlu0 %910
      %976 = vrot.lane.b32.xlu0 %v591, 8
      %v977 = vpop.permute.xlu0 %976
      %978 = vrot.lane.b32.xlu0 %v592, 8
      %v979 = vpop.permute.xlu0 %978
      %980 = vrot.lane.b32.xlu0 %v593, 8
      %v981 = vpop.permute.xlu0 %980
      %982 = vrot.lane.b32.xlu0 %v594, 8
      %v983 = vpop.permute.xlu0 %982
      %984 = vrot.lane.b32.xlu0 %v595, 8
      %v985 = vpop.permute.xlu0 %984
      %986 = vrot.lane.b32.xlu0 %v596, 8
      %v987 = vpop.permute.xlu0 %986
      %988 = vrot.lane.b32.xlu0 %v597, 8
      %v989 = vpop.permute.xlu0 %988
      %990 = vrot.lane.b32.xlu0 %v598, 8
      %v991 = vpop.permute.xlu0 %990
      %992 = vrot.lane.b32.xlu0 %v599, 8
      %v993 = vpop.permute.xlu0 %992
      %994 = vrot.lane.b32.xlu0 %v600, 8
      %v995 = vpop.permute.xlu0 %994
      %996 = vrot.lane.b32.xlu0 %v601, 8
      %v997 = vpop.permute.xlu0 %996
      %998 = vrot.lane.b32.xlu0 %v602, 8
      %v999 = vpop.permute.xlu0 %998
      %1000 = vrot.lane.b32.xlu0 %v603, 8
      %v1001 = vpop.permute.xlu0 %1000
      %1002 = vrot.lane.b32.xlu0 %v604, 8
      %v1003 = vpop.permute.xlu0 %1002
      %1004 = vrot.lane.b32.xlu0 %v605, 8
      %v1005 = vpop.permute.xlu0 %1004
      %1006 = vrot.lane.b32.xlu0 %v606, 8
      %v1007 = vpop.permute.xlu0 %1006
      %1008 = vrot.lane.b32.xlu0 %v607, 8
      %v1009 = vpop.permute.xlu0 %1008
      %1010 = vrot.lane.b32.xlu0 %v608, 8
      %v1011 = vpop.permute.xlu0 %1010
      %1012 = vrot.lane.b32.xlu0 %v609, 8
      %v1013 = vpop.permute.xlu0 %1012
      %1014 = vrot.lane.b32.xlu0 %v610, 8
      %v1015 = vpop.permute.xlu0 %1014
      %1016 = vrot.lane.b32.xlu0 %v611, 8
      %v1017 = vpop.permute.xlu0 %1016
      %1018 = vrot.lane.b32.xlu0 %v612, 8
      %v1019 = vpop.permute.xlu0 %1018
      %1020 = vrot.lane.b32.xlu0 %v613, 8
      %v1021 = vpop.permute.xlu0 %1020
      %1022 = vrot.lane.b32.xlu0 %v614, 8
      %v1023 = vpop.permute.xlu0 %1022
      %1024 = vrot.lane.b32.xlu0 %v615, 8
      %v1025 = vpop.permute.xlu0 %1024
      %1026 = vrot.lane.b32.xlu0 %v616, 8
      %v1027 = vpop.permute.xlu0 %1026
      %1028 = vrot.lane.b32.xlu0 %v617, 8
      %v1029 = vpop.permute.xlu0 %1028
      %1030 = vrot.lane.b32.xlu0 %v618, 8
      %v1031 = vpop.permute.xlu0 %1030
      %1032 = vrot.lane.b32.xlu0 %v619, 8
      %v1033 = vpop.permute.xlu0 %1032
      %1034 = vrot.lane.b32.xlu0 %v620, 8
      %v1035 = vpop.permute.xlu0 %1034
      %1036 = vrot.lane.b32.xlu0 %v621, 8
      %v1037 = vpop.permute.xlu0 %1036
      %1038 = vrot.lane.b32.xlu0 %v622, 8
      %v1039 = vpop.permute.xlu0 %1038
      %1104 = vrot.lane.b32.xlu0 %v623, 12
      %v1105 = vpop.permute.xlu0 %1104
      %1106 = vrot.lane.b32.xlu0 %v624, 12
      %v1107 = vpop.permute.xlu0 %1106
      %1108 = vrot.lane.b32.xlu0 %v625, 12
      %v1109 = vpop.permute.xlu0 %1108
      %1110 = vrot.lane.b32.xlu0 %v626, 12
      %v1111 = vpop.permute.xlu0 %1110
      %1112 = vrot.lane.b32.xlu0 %v627, 12
      %v1113 = vpop.permute.xlu0 %1112
      %1114 = vrot.lane.b32.xlu0 %v628, 12
      %v1115 = vpop.permute.xlu0 %1114
      %1116 = vrot.lane.b32.xlu0 %v629, 12
      %v1117 = vpop.permute.xlu0 %1116
      %1118 = vrot.lane.b32.xlu0 %v630, 12
      %v1119 = vpop.permute.xlu0 %1118
      %1120 = vrot.lane.b32.xlu0 %v631, 12
      %v1121 = vpop.permute.xlu0 %1120
      %1122 = vrot.lane.b32.xlu0 %v632, 12
      %v1123 = vpop.permute.xlu0 %1122
      %1124 = vrot.lane.b32.xlu0 %v633, 12
      %v1125 = vpop.permute.xlu0 %1124
      %1126 = vrot.lane.b32.xlu0 %v634, 12
      %v1127 = vpop.permute.xlu0 %1126
      %1128 = vrot.lane.b32.xlu0 %v635, 12
      %v1129 = vpop.permute.xlu0 %1128
      %1130 = vrot.lane.b32.xlu0 %v636, 12
      %v1131 = vpop.permute.xlu0 %1130
      %1132 = vrot.lane.b32.xlu0 %v637, 12
      %v1133 = vpop.permute.xlu0 %1132
      %1134 = vrot.lane.b32.xlu0 %v638, 12
      %v1135 = vpop.permute.xlu0 %1134
      %1136 = vrot.lane.b32.xlu0 %v639, 12
      %v1137 = vpop.permute.xlu0 %1136
      %1138 = vrot.lane.b32.xlu0 %v640, 12
      %v1139 = vpop.permute.xlu0 %1138
      %1140 = vrot.lane.b32.xlu0 %v641, 12
      %v1141 = vpop.permute.xlu0 %1140
      %1142 = vrot.lane.b32.xlu0 %v642, 12
      %v1143 = vpop.permute.xlu0 %1142
      %1144 = vrot.lane.b32.xlu0 %v643, 12
      %v1145 = vpop.permute.xlu0 %1144
      %1146 = vrot.lane.b32.xlu0 %v644, 12
      %v1147 = vpop.permute.xlu0 %1146
      %1148 = vrot.lane.b32.xlu0 %v645, 12
      %v1149 = vpop.permute.xlu0 %1148
      %1150 = vrot.lane.b32.xlu0 %v646, 12
      %v1151 = vpop.permute.xlu0 %1150
      %1152 = vrot.lane.b32.xlu0 %v647, 12
      %v1153 = vpop.permute.xlu0 %1152
      %1154 = vrot.lane.b32.xlu0 %v648, 12
      %v1155 = vpop.permute.xlu0 %1154
      %1156 = vrot.lane.b32.xlu0 %v649, 12
      %v1157 = vpop.permute.xlu0 %1156
      %1158 = vrot.lane.b32.xlu0 %v650, 12
      %v1159 = vpop.permute.xlu0 %1158
      %1160 = vrot.lane.b32.xlu0 %v651, 12
      %v1161 = vpop.permute.xlu0 %1160
      %1162 = vrot.lane.b32.xlu0 %v652, 12
      %v1163 = vpop.permute.xlu0 %1162
      %1164 = vrot.lane.b32.xlu0 %v653, 12
      %v1165 = vpop.permute.xlu0 %1164
      %1166 = vrot.lane.b32.xlu0 %v654, 12
      %v1167 = vpop.permute.xlu0 %1166
      %1232 = vrot.lane.b32.xlu0 %v655, 16
      %v1233 = vpop.permute.xlu0 %1232
      %1234 = vrot.lane.b32.xlu0 %v656, 16
      %v1235 = vpop.permute.xlu0 %1234
      %1236 = vrot.lane.b32.xlu0 %v657, 16
      %v1237 = vpop.permute.xlu0 %1236
      %1238 = vrot.lane.b32.xlu0 %v658, 16
      %v1239 = vpop.permute.xlu0 %1238
      %1240 = vrot.lane.b32.xlu0 %v659, 16
      %v1241 = vpop.permute.xlu0 %1240
      %1242 = vrot.lane.b32.xlu0 %v660, 16
      %v1243 = vpop.permute.xlu0 %1242
      %1244 = vrot.lane.b32.xlu0 %v661, 16
      %v1245 = vpop.permute.xlu0 %1244
      %1246 = vrot.lane.b32.xlu0 %v662, 16
      %v1247 = vpop.permute.xlu0 %1246
      %1248 = vrot.lane.b32.xlu0 %v663, 16
      %v1249 = vpop.permute.xlu0 %1248
      %1250 = vrot.lane.b32.xlu0 %v664, 16
      %v1251 = vpop.permute.xlu0 %1250
      %1252 = vrot.lane.b32.xlu0 %v665, 16
      %v1253 = vpop.permute.xlu0 %1252
      %1254 = vrot.lane.b32.xlu0 %v666, 16
      %v1255 = vpop.permute.xlu0 %1254
      %1256 = vrot.lane.b32.xlu0 %v667, 16
      %v1257 = vpop.permute.xlu0 %1256
      %1258 = vrot.lane.b32.xlu0 %v668, 16
      %v1259 = vpop.permute.xlu0 %1258
      %1260 = vrot.lane.b32.xlu0 %v669, 16
      %v1261 = vpop.permute.xlu0 %1260
      %1262 = vrot.lane.b32.xlu0 %v670, 16
      %v1263 = vpop.permute.xlu0 %1262
      %1264 = vrot.lane.b32.xlu0 %v671, 16
      %v1265 = vpop.permute.xlu0 %1264
      %1266 = vrot.lane.b32.xlu0 %v672, 16
      %v1267 = vpop.permute.xlu0 %1266
      %1268 = vrot.lane.b32.xlu0 %v673, 16
      %v1269 = vpop.permute.xlu0 %1268
      %1270 = vrot.lane.b32.xlu0 %v674, 16
      %v1271 = vpop.permute.xlu0 %1270
      %1272 = vrot.lane.b32.xlu0 %v675, 16
      %v1273 = vpop.permute.xlu0 %1272
      %1274 = vrot.lane.b32.xlu0 %v676, 16
      %v1275 = vpop.permute.xlu0 %1274
      %1276 = vrot.lane.b32.xlu0 %v677, 16
      %v1277 = vpop.permute.xlu0 %1276
      %1278 = vrot.lane.b32.xlu0 %v678, 16
      %v1279 = vpop.permute.xlu0 %1278
      %1280 = vrot.lane.b32.xlu0 %v679, 16
      %v1281 = vpop.permute.xlu0 %1280
      %1282 = vrot.lane.b32.xlu0 %v680, 16
      %v1283 = vpop.permute.xlu0 %1282
      %1284 = vrot.lane.b32.xlu0 %v681, 16
      %v1285 = vpop.permute.xlu0 %1284
      %1286 = vrot.lane.b32.xlu0 %v682, 16
      %v1287 = vpop.permute.xlu0 %1286
      %1288 = vrot.lane.b32.xlu0 %v683, 16
      %v1289 = vpop.permute.xlu0 %1288
      %1290 = vrot.lane.b32.xlu0 %v684, 16
      %v1291 = vpop.permute.xlu0 %1290
      %1292 = vrot.lane.b32.xlu0 %v685, 16
      %v1293 = vpop.permute.xlu0 %1292
      %1294 = vrot.lane.b32.xlu0 %v686, 16
      %v1295 = vpop.permute.xlu0 %1294
      %1360 = vrot.lane.b32.xlu0 %v687, 20
      %v1361 = vpop.permute.xlu0 %1360
      %1362 = vrot.lane.b32.xlu0 %v688, 20
      %v1363 = vpop.permute.xlu0 %1362
      %1364 = vrot.lane.b32.xlu0 %v689, 20
      %v1365 = vpop.permute.xlu0 %1364
      %1366 = vrot.lane.b32.xlu0 %v690, 20
      %v1367 = vpop.permute.xlu0 %1366
      %1368 = vrot.lane.b32.xlu0 %v691, 20
      %v1369 = vpop.permute.xlu0 %1368
      %1370 = vrot.lane.b32.xlu0 %v692, 20
      %v1371 = vpop.permute.xlu0 %1370
      %1372 = vrot.lane.b32.xlu0 %v693, 20
      %v1373 = vpop.permute.xlu0 %1372
      %1374 = vrot.lane.b32.xlu0 %v694, 20
      %v1375 = vpop.permute.xlu0 %1374
      %1376 = vrot.lane.b32.xlu0 %v695, 20
      %v1377 = vpop.permute.xlu0 %1376
      %1378 = vrot.lane.b32.xlu0 %v696, 20
      %v1379 = vpop.permute.xlu0 %1378
      %1380 = vrot.lane.b32.xlu0 %v697, 20
      %v1381 = vpop.permute.xlu0 %1380
      %1382 = vrot.lane.b32.xlu0 %v698, 20
      %v1383 = vpop.permute.xlu0 %1382
      %1384 = vrot.lane.b32.xlu0 %v699, 20
      %v1385 = vpop.permute.xlu0 %1384
      %1386 = vrot.lane.b32.xlu0 %v700, 20
      %v1387 = vpop.permute.xlu0 %1386
      %1388 = vrot.lane.b32.xlu0 %v701, 20
      %v1389 = vpop.permute.xlu0 %1388
      %1390 = vrot.lane.b32.xlu0 %v702, 20
      %v1391 = vpop.permute.xlu0 %1390
      %1392 = vrot.lane.b32.xlu0 %v703, 20
      %v1393 = vpop.permute.xlu0 %1392
      %1394 = vrot.lane.b32.xlu0 %v704, 20
      %v1395 = vpop.permute.xlu0 %1394
      %1396 = vrot.lane.b32.xlu0 %v705, 20
      %v1397 = vpop.permute.xlu0 %1396
      %1398 = vrot.lane.b32.xlu0 %v706, 20
      %v1399 = vpop.permute.xlu0 %1398
      %1400 = vrot.lane.b32.xlu0 %v707, 20
      %v1401 = vpop.permute.xlu0 %1400
      %1402 = vrot.lane.b32.xlu0 %v708, 20
      %v1403 = vpop.permute.xlu0 %1402
      %1404 = vrot.lane.b32.xlu0 %v709, 20
      %v1405 = vpop.permute.xlu0 %1404
      %1406 = vrot.lane.b32.xlu0 %v710, 20
      %v1407 = vpop.permute.xlu0 %1406
      %1408 = vrot.lane.b32.xlu0 %v711, 20
      %v1409 = vpop.permute.xlu0 %1408
      %1410 = vrot.lane.b32.xlu0 %v712, 20
      %v1411 = vpop.permute.xlu0 %1410
      %1412 = vrot.lane.b32.xlu0 %v713, 20
      %v1413 = vpop.permute.xlu0 %1412
      %1414 = vrot.lane.b32.xlu0 %v714, 20
      %v1415 = vpop.permute.xlu0 %1414
      %1416 = vrot.lane.b32.xlu0 %v715, 20
      %v1417 = vpop.permute.xlu0 %1416
      %1418 = vrot.lane.b32.xlu0 %v716, 20
      %v1419 = vpop.permute.xlu0 %1418
      %1420 = vrot.lane.b32.xlu0 %v717, 20
      %v1421 = vpop.permute.xlu0 %1420
      %1422 = vrot.lane.b32.xlu0 %v718, 20
      %v1423 = vpop.permute.xlu0 %1422
      %1488 = vrot.lane.b32.xlu0 %v720, 24
      %v1489 = vpop.permute.xlu0 %1488
      %1490 = vrot.lane.b32.xlu0 %v721, 24
      %v1491 = vpop.permute.xlu0 %1490
      %1492 = vrot.lane.b32.xlu0 %v722, 24
      %v1493 = vpop.permute.xlu0 %1492
      %1494 = vrot.lane.b32.xlu0 %v723, 24
      %v1495 = vpop.permute.xlu0 %1494
      %1496 = vrot.lane.b32.xlu0 %v724, 24
      %v1497 = vpop.permute.xlu0 %1496
      %1498 = vrot.lane.b32.xlu0 %v725, 24
      %v1499 = vpop.permute.xlu0 %1498
      %1500 = vrot.lane.b32.xlu0 %v726, 24
      %v1501 = vpop.permute.xlu0 %1500
      %1502 = vrot.lane.b32.xlu0 %v727, 24
      %v1503 = vpop.permute.xlu0 %1502
      %1504 = vrot.lane.b32.xlu0 %v728, 24
      %v1505 = vpop.permute.xlu0 %1504
      %1506 = vrot.lane.b32.xlu0 %v729, 24
      %v1507 = vpop.permute.xlu0 %1506
      %1508 = vrot.lane.b32.xlu0 %v730, 24
      %v1509 = vpop.permute.xlu0 %1508
      %1510 = vrot.lane.b32.xlu0 %v731, 24
      %v1511 = vpop.permute.xlu0 %1510
      %1512 = vrot.lane.b32.xlu0 %v732, 24
      %v1513 = vpop.permute.xlu0 %1512
      %1514 = vrot.lane.b32.xlu0 %v733, 24
      %v1515 = vpop.permute.xlu0 %1514
      %1516 = vrot.lane.b32.xlu0 %v734, 24
      %v1517 = vpop.permute.xlu0 %1516
      %1518 = vrot.lane.b32.xlu0 %v735, 24
      %v1519 = vpop.permute.xlu0 %1518
      %1520 = vrot.lane.b32.xlu0 %v736, 24
      %v1521 = vpop.permute.xlu0 %1520
      %1522 = vrot.lane.b32.xlu0 %v737, 24
      %v1523 = vpop.permute.xlu0 %1522
      %1524 = vrot.lane.b32.xlu0 %v738, 24
      %v1525 = vpop.permute.xlu0 %1524
      %1526 = vrot.lane.b32.xlu0 %v739, 24
      %v1527 = vpop.permute.xlu0 %1526
      %1528 = vrot.lane.b32.xlu0 %v740, 24
      %v1529 = vpop.permute.xlu0 %1528
      %1530 = vrot.lane.b32.xlu0 %v741, 24
      %v1531 = vpop.permute.xlu0 %1530
      %1532 = vrot.lane.b32.xlu0 %v742, 24
      %v1533 = vpop.permute.xlu0 %1532
      %1534 = vrot.lane.b32.xlu0 %v743, 24
      %v1535 = vpop.permute.xlu0 %1534
      %1536 = vrot.lane.b32.xlu0 %v744, 24
      %v1537 = vpop.permute.xlu0 %1536
      %1538 = vrot.lane.b32.xlu0 %v745, 24
      %v1539 = vpop.permute.xlu0 %1538
      %1540 = vrot.lane.b32.xlu0 %v746, 24
      %v1541 = vpop.permute.xlu0 %1540
      %1542 = vrot.lane.b32.xlu0 %v747, 24
      %v1543 = vpop.permute.xlu0 %1542
      %1544 = vrot.lane.b32.xlu0 %v748, 24
      %v1545 = vpop.permute.xlu0 %1544
      %1546 = vrot.lane.b32.xlu0 %v749, 24
      %v1547 = vpop.permute.xlu0 %1546
      %1548 = vrot.lane.b32.xlu0 %v750, 24
      %v1549 = vpop.permute.xlu0 %1548
      %1550 = vrot.lane.b32.xlu0 %v751, 24
      %v1551 = vpop.permute.xlu0 %1550
      %1616 = vrot.lane.b32.xlu0 %v752, 28
      %v1617 = vpop.permute.xlu0 %1616
      %1618 = vrot.lane.b32.xlu0 %v753, 28
      %v1619 = vpop.permute.xlu0 %1618
      %1620 = vrot.lane.b32.xlu0 %v754, 28
      %v1621 = vpop.permute.xlu0 %1620
      %1622 = vrot.lane.b32.xlu0 %v755, 28
      %v1623 = vpop.permute.xlu0 %1622
      %1624 = vrot.lane.b32.xlu0 %v756, 28
      %v1625 = vpop.permute.xlu0 %1624
      %1626 = vrot.lane.b32.xlu0 %v757, 28
      %v1627 = vpop.permute.xlu0 %1626
      %1628 = vrot.lane.b32.xlu0 %v758, 28
      %v1629 = vpop.permute.xlu0 %1628
      %1630 = vrot.lane.b32.xlu0 %v759, 28
      %v1631 = vpop.permute.xlu0 %1630
      %1632 = vrot.lane.b32.xlu0 %v760, 28
      %v1633 = vpop.permute.xlu0 %1632
      %1634 = vrot.lane.b32.xlu0 %v761, 28
      %v1635 = vpop.permute.xlu0 %1634
      %1636 = vrot.lane.b32.xlu0 %v762, 28
      %v1637 = vpop.permute.xlu0 %1636
      %1638 = vrot.lane.b32.xlu0 %v763, 28
      %v1639 = vpop.permute.xlu0 %1638
      %1640 = vrot.lane.b32.xlu0 %v764, 28
      %v1641 = vpop.permute.xlu0 %1640
      %1642 = vrot.lane.b32.xlu0 %v765, 28
      %v1643 = vpop.permute.xlu0 %1642
      %1644 = vrot.lane.b32.xlu0 %v766, 28
      %v1645 = vpop.permute.xlu0 %1644
      %1646 = vrot.lane.b32.xlu0 %v767, 28
      %v1647 = vpop.permute.xlu0 %1646
      %1648 = vrot.lane.b32.xlu0 %v768, 28
      %v1649 = vpop.permute.xlu0 %1648
      %1650 = vrot.lane.b32.xlu0 %v769, 28
      %v1651 = vpop.permute.xlu0 %1650
      %1652 = vrot.lane.b32.xlu0 %v770, 28
      %v1653 = vpop.permute.xlu0 %1652
      %1654 = vrot.lane.b32.xlu0 %v771, 28
      %v1655 = vpop.permute.xlu0 %1654
      %1656 = vrot.lane.b32.xlu0 %v772, 28
      %v1657 = vpop.permute.xlu0 %1656
      %1658 = vrot.lane.b32.xlu0 %v773, 28
      %v1659 = vpop.permute.xlu0 %1658
      %1660 = vrot.lane.b32.xlu0 %v774, 28
      %v1661 = vpop.permute.xlu0 %1660
      %1662 = vrot.lane.b32.xlu0 %v775, 28
      %v1663 = vpop.permute.xlu0 %1662
      %1664 = vrot.lane.b32.xlu0 %v776, 28
      %v1665 = vpop.permute.xlu0 %1664
      %1666 = vrot.lane.b32.xlu0 %v777, 28
      %v1667 = vpop.permute.xlu0 %1666
      %1668 = vrot.lane.b32.xlu0 %v778, 28
      %v1669 = vpop.permute.xlu0 %1668
      %1670 = vrot.lane.b32.xlu0 %v779, 28
      %v1671 = vpop.permute.xlu0 %1670
      %1672 = vrot.lane.b32.xlu0 %v780, 28
      %v1673 = vpop.permute.xlu0 %1672
      %1674 = vrot.lane.b32.xlu0 %v781, 28
      %v1675 = vpop.permute.xlu0 %1674
      %1676 = vrot.lane.b32.xlu0 %v782, 28
      %v1677 = vpop.permute.xlu0 %1676
      %1678 = vrot.lane.b32.xlu0 %v783, 28
      %v1679 = vpop.permute.xlu0 %1678
      %1744 = vrot.lane.b32.xlu0 %v784, 32
      %v1745 = vpop.permute.xlu0 %1744
      %1746 = vrot.lane.b32.xlu0 %v785, 32
      %v1747 = vpop.permute.xlu0 %1746
      %1748 = vrot.lane.b32.xlu0 %v786, 32
      %v1749 = vpop.permute.xlu0 %1748
      %1750 = vrot.lane.b32.xlu0 %v787, 32
      %v1751 = vpop.permute.xlu0 %1750
      %1752 = vrot.lane.b32.xlu0 %v788, 32
      %v1753 = vpop.permute.xlu0 %1752
      %1754 = vrot.lane.b32.xlu0 %v789, 32
      %v1755 = vpop.permute.xlu0 %1754
      %1756 = vrot.lane.b32.xlu0 %v790, 32
      %v1757 = vpop.permute.xlu0 %1756
      %1758 = vrot.lane.b32.xlu0 %v791, 32
      %v1759 = vpop.permute.xlu0 %1758
      %1760 = vrot.lane.b32.xlu0 %v792, 32
      %v1761 = vpop.permute.xlu0 %1760
      %1762 = vrot.lane.b32.xlu0 %v793, 32
      %v1763 = vpop.permute.xlu0 %1762
      %1764 = vrot.lane.b32.xlu0 %v794, 32
      %v1765 = vpop.permute.xlu0 %1764
      %1766 = vrot.lane.b32.xlu0 %v795, 32
      %v1767 = vpop.permute.xlu0 %1766
      %1768 = vrot.lane.b32.xlu0 %v796, 32
      %v1769 = vpop.permute.xlu0 %1768
      %1770 = vrot.lane.b32.xlu0 %v797, 32
      %v1771 = vpop.permute.xlu0 %1770
      %1772 = vrot.lane.b32.xlu0 %v798, 32
      %v1773 = vpop.permute.xlu0 %1772
      %1774 = vrot.lane.b32.xlu0 %v799, 32
      %v1775 = vpop.permute.xlu0 %1774
      %1776 = vrot.lane.b32.xlu0 %v800, 32
      %v1777 = vpop.permute.xlu0 %1776
      %1778 = vrot.lane.b32.xlu0 %v801, 32
      %v1779 = vpop.permute.xlu0 %1778
      %1780 = vrot.lane.b32.xlu0 %v802, 32
      %v1781 = vpop.permute.xlu0 %1780
      %1782 = vrot.lane.b32.xlu0 %v803, 32
      %v1783 = vpop.permute.xlu0 %1782
      %1784 = vrot.lane.b32.xlu0 %v804, 32
      %v1785 = vpop.permute.xlu0 %1784
      %1786 = vrot.lane.b32.xlu0 %v805, 32
      %v1787 = vpop.permute.xlu0 %1786
      %1788 = vrot.lane.b32.xlu0 %v806, 32
      %v1789 = vpop.permute.xlu0 %1788
      %1790 = vrot.lane.b32.xlu0 %v807, 32
      %v1791 = vpop.permute.xlu0 %1790
      %1792 = vrot.lane.b32.xlu0 %v808, 32
      %v1793 = vpop.permute.xlu0 %1792
      %1794 = vrot.lane.b32.xlu0 %v809, 32
      %v1795 = vpop.permute.xlu0 %1794
      %1796 = vrot.lane.b32.xlu0 %v810, 32
      %v1797 = vpop.permute.xlu0 %1796
      %1798 = vrot.lane.b32.xlu0 %v811, 32
      %v1799 = vpop.permute.xlu0 %1798
      %1800 = vrot.lane.b32.xlu0 %v812, 32
      %v1801 = vpop.permute.xlu0 %1800
      %1802 = vrot.lane.b32.xlu0 %v813, 32
      %v1803 = vpop.permute.xlu0 %1802
      %1804 = vrot.lane.b32.xlu0 %v814, 32
      %v1805 = vpop.permute.xlu0 %1804
      %1806 = vrot.lane.b32.xlu0 %v815, 32
      %v1807 = vpop.permute.xlu0 %1806
      %v1840 = vsel %vm438, %v527, %v849
      %v1841 = vsel %vm438, %v528, %v851
      %v1842 = vsel %vm438, %v529, %v853
      %v1843 = vsel %vm438, %v530, %v855
      %v1844 = vsel %vm438, %v531, %v857
      %v1845 = vsel %vm438, %v532, %v859
      %v1846 = vsel %vm438, %v533, %v861
      %v1847 = vsel %vm438, %v534, %v863
      %v1848 = vsel %vm438, %v535, %v865
      %v1849 = vsel %vm438, %v536, %v867
      %v1850 = vsel %vm438, %v537, %v869
      %v1851 = vsel %vm438, %v538, %v871
      %v1852 = vsel %vm438, %v539, %v873
      %v1853 = vsel %vm438, %v540, %v875
      %v1854 = vsel %vm438, %v541, %v877
      %v1855 = vsel %vm438, %v542, %v879
      %v1856 = vsel %vm438, %v543, %v881
      %v1857 = vsel %vm438, %v544, %v883
      %v1858 = vsel %vm438, %v545, %v885
      %v1859 = vsel %vm438, %v546, %v887
      %v1860 = vsel %vm438, %v547, %v889
      %v1861 = vsel %vm438, %v548, %v891
      %v1862 = vsel %vm438, %v549, %v893
      %v1863 = vsel %vm438, %v550, %v895
      %v1864 = vsel %vm438, %v551, %v897
      %v1865 = vsel %vm438, %v552, %v899
      %v1866 = vsel %vm438, %v553, %v901
      %v1867 = vsel %vm438, %v554, %v903
      %v1868 = vsel %vm438, %v555, %v905
      %v1869 = vsel %vm438, %v556, %v907
      %v1870 = vsel %vm438, %v557, %v909
      %v1871 = vsel %vm438, %v558, %v911
      %vm1872 = vcmask 64512
      %v1873 = vsel %vm1872, %v1840, %v977
      %v1874 = vsel %vm1872, %v1841, %v979
      %v1875 = vsel %vm1872, %v1842, %v981
      %v1876 = vsel %vm1872, %v1843, %v983
      %v1877 = vsel %vm1872, %v1844, %v985
      %v1878 = vsel %vm1872, %v1845, %v987
      %v1879 = vsel %vm1872, %v1846, %v989
      %v1880 = vsel %vm1872, %v1847, %v991
      %v1881 = vsel %vm1872, %v1848, %v993
      %v1882 = vsel %vm1872, %v1849, %v995
      %v1883 = vsel %vm1872, %v1850, %v997
      %v1884 = vsel %vm1872, %v1851, %v999
      %v1885 = vsel %vm1872, %v1852, %v1001
      %v1886 = vsel %vm1872, %v1853, %v1003
      %v1887 = vsel %vm1872, %v1854, %v1005
      %v1888 = vsel %vm1872, %v1855, %v1007
      %v1889 = vsel %vm1872, %v1856, %v1009
      %v1890 = vsel %vm1872, %v1857, %v1011
      %v1891 = vsel %vm1872, %v1858, %v1013
      %v1892 = vsel %vm1872, %v1859, %v1015
      %v1893 = vsel %vm1872, %v1860, %v1017
      %v1894 = vsel %vm1872, %v1861, %v1019
      %v1895 = vsel %vm1872, %v1862, %v1021
      %v1896 = vsel %vm1872, %v1863, %v1023
      %v1897 = vsel %vm1872, %v1864, %v1025
      %v1898 = vsel %vm1872, %v1865, %v1027
      %v1899 = vsel %vm1872, %v1866, %v1029
      %v1900 = vsel %vm1872, %v1867, %v1031
      %v1901 = vsel %vm1872, %v1868, %v1033
      %v1902 = vsel %vm1872, %v1869, %v1035
      %v1903 = vsel %vm1872, %v1870, %v1037
      %v1904 = vsel %vm1872, %v1871, %v1039
      %vm1905 = vcmask 97280
      %v1906 = vsel %vm1905, %v1873, %v1105
      %v1907 = vsel %vm1905, %v1874, %v1107
      %v1908 = vsel %vm1905, %v1875, %v1109
      %v1909 = vsel %vm1905, %v1876, %v1111
      %v1910 = vsel %vm1905, %v1877, %v1113
      %v1911 = vsel %vm1905, %v1878, %v1115
      %v1912 = vsel %vm1905, %v1879, %v1117
      %v1913 = vsel %vm1905, %v1880, %v1119
      %v1914 = vsel %vm1905, %v1881, %v1121
      %v1915 = vsel %vm1905, %v1882, %v1123
      %v1916 = vsel %vm1905, %v1883, %v1125
      %v1917 = vsel %vm1905, %v1884, %v1127
      %v1918 = vsel %vm1905, %v1885, %v1129
      %v1919 = vsel %vm1905, %v1886, %v1131
      %v1920 = vsel %vm1905, %v1887, %v1133
      %v1921 = vsel %vm1905, %v1888, %v1135
      %v1922 = vsel %vm1905, %v1889, %v1137
      %v1923 = vsel %vm1905, %v1890, %v1139
      %v1924 = vsel %vm1905, %v1891, %v1141
      %v1925 = vsel %vm1905, %v1892, %v1143
      %v1926 = vsel %vm1905, %v1893, %v1145
      %v1927 = vsel %vm1905, %v1894, %v1147
      %v1928 = vsel %vm1905, %v1895, %v1149
      %v1929 = vsel %vm1905, %v1896, %v1151
      %v1930 = vsel %vm1905, %v1897, %v1153
      %v1931 = vsel %vm1905, %v1898, %v1155
      %v1932 = vsel %vm1905, %v1899, %v1157
      %v1933 = vsel %vm1905, %v1900, %v1159
      %v1934 = vsel %vm1905, %v1901, %v1161
      %v1935 = vsel %vm1905, %v1902, %v1163
      %v1936 = vsel %vm1905, %v1903, %v1165
      %v1937 = vsel %vm1905, %v1904, %v1167
      %vm1938 = vcmask 130048
      %v1939 = vsel %vm1938, %v1906, %v1233
      %v1940 = vsel %vm1938, %v1907, %v1235
      %v1941 = vsel %vm1938, %v1908, %v1237
      %v1942 = vsel %vm1938, %v1909, %v1239
      %v1943 = vsel %vm1938, %v1910, %v1241
      %v1944 = vsel %vm1938, %v1911, %v1243
      %v1945 = vsel %vm1938, %v1912, %v1245
      %v1946 = vsel %vm1938, %v1913, %v1247
      %v1947 = vsel %vm1938, %v1914, %v1249
      %v1948 = vsel %vm1938, %v1915, %v1251
      %v1949 = vsel %vm1938, %v1916, %v1253
      %v1950 = vsel %vm1938, %v1917, %v1255
      %v1951 = vsel %vm1938, %v1918, %v1257
      %v1952 = vsel %vm1938, %v1919, %v1259
      %v1953 = vsel %vm1938, %v1920, %v1261
      %v1954 = vsel %vm1938, %v1921, %v1263
      %v1955 = vsel %vm1938, %v1922, %v1265
      %v1956 = vsel %vm1938, %v1923, %v1267
      %v1957 = vsel %vm1938, %v1924, %v1269
      %v1958 = vsel %vm1938, %v1925, %v1271
      %v1959 = vsel %vm1938, %v1926, %v1273
      %v1960 = vsel %vm1938, %v1927, %v1275
      %v1961 = vsel %vm1938, %v1928, %v1277
      %v1962 = vsel %vm1938, %v1929, %v1279
      %v1963 = vsel %vm1938, %v1930, %v1281
      %v1964 = vsel %vm1938, %v1931, %v1283
      %v1965 = vsel %vm1938, %v1932, %v1285
      %v1966 = vsel %vm1938, %v1933, %v1287
      %v1967 = vsel %vm1938, %v1934, %v1289
      %v1968 = vsel %vm1938, %v1935, %v1291
      %v1969 = vsel %vm1938, %v1936, %v1293
      %v1970 = vsel %vm1938, %v1937, %v1295
      %vm1971 = vcmask 162816
      %v1972 = vsel %vm1971, %v1939, %v1361
      %v1973 = vsel %vm1971, %v1940, %v1363
      %v1974 = vsel %vm1971, %v1941, %v1365
      %v1975 = vsel %vm1971, %v1942, %v1367
      %v1976 = vsel %vm1971, %v1943, %v1369
      %v1977 = vsel %vm1971, %v1944, %v1371
      %v1978 = vsel %vm1971, %v1945, %v1373
      %v1979 = vsel %vm1971, %v1946, %v1375
      %v1980 = vsel %vm1971, %v1947, %v1377
      %v1981 = vsel %vm1971, %v1948, %v1379
      %v1982 = vsel %vm1971, %v1949, %v1381
      %v1983 = vsel %vm1971, %v1950, %v1383
      %v1984 = vsel %vm1971, %v1951, %v1385
      %v1985 = vsel %vm1971, %v1952, %v1387
      %v1986 = vsel %vm1971, %v1953, %v1389
      %v1987 = vsel %vm1971, %v1954, %v1391
      %v1988 = vsel %vm1971, %v1955, %v1393
      %v1989 = vsel %vm1971, %v1956, %v1395
      %v1990 = vsel %vm1971, %v1957, %v1397
      %v1991 = vsel %vm1971, %v1958, %v1399
      %v1992 = vsel %vm1971, %v1959, %v1401
      %v1993 = vsel %vm1971, %v1960, %v1403
      %v1994 = vsel %vm1971, %v1961, %v1405
      %v1995 = vsel %vm1971, %v1962, %v1407
      %v1996 = vsel %vm1971, %v1963, %v1409
      %v1997 = vsel %vm1971, %v1964, %v1411
      %v1998 = vsel %vm1971, %v1965, %v1413
      %v1999 = vsel %vm1971, %v1966, %v1415
      %v2000 = vsel %vm1971, %v1967, %v1417
      %v2001 = vsel %vm1971, %v1968, %v1419
      %v2002 = vsel %vm1971, %v1969, %v1421
      %v2003 = vsel %vm1971, %v1970, %v1423
      %vm2004 = vcmask 195584
      %v2005 = vsel %vm2004, %v1972, %v1489
      %v2006 = vsel %vm2004, %v1973, %v1491
      %v2007 = vsel %vm2004, %v1974, %v1493
      %v2008 = vsel %vm2004, %v1975, %v1495
      %v2009 = vsel %vm2004, %v1976, %v1497
      %v2010 = vsel %vm2004, %v1977, %v1499
      %v2011 = vsel %vm2004, %v1978, %v1501
      %v2012 = vsel %vm2004, %v1979, %v1503
      %v2013 = vsel %vm2004, %v1980, %v1505
      %v2014 = vsel %vm2004, %v1981, %v1507
      %v2015 = vsel %vm2004, %v1982, %v1509
      %v2016 = vsel %vm2004, %v1983, %v1511
      %v2017 = vsel %vm2004, %v1984, %v1513
      %v2018 = vsel %vm2004, %v1985, %v1515
      %v2019 = vsel %vm2004, %v1986, %v1517
      %v2020 = vsel %vm2004, %v1987, %v1519
      %v2021 = vsel %vm2004, %v1988, %v1521
      %v2022 = vsel %vm2004, %v1989, %v1523
      %v2023 = vsel %vm2004, %v1990, %v1525
      %v2024 = vsel %vm2004, %v1991, %v1527
      %v2025 = vsel %vm2004, %v1992, %v1529
      %v2026 = vsel %vm2004, %v1993, %v1531
      %v2027 = vsel %vm2004, %v1994, %v1533
      %v2028 = vsel %vm2004, %v1995, %v1535
      %v2029 = vsel %vm2004, %v1996, %v1537
      %v2030 = vsel %vm2004, %v1997, %v1539
      %v2031 = vsel %vm2004, %v1998, %v1541
      %v2032 = vsel %vm2004, %v1999, %v1543
      %v2033 = vsel %vm2004, %v2000, %v1545
      %v2034 = vsel %vm2004, %v2001, %v1547
      %v2035 = vsel %vm2004, %v2002, %v1549
      %v2036 = vsel %vm2004, %v2003, %v1551
      %vm2037 = vcmask 228352
      %v2038 = vsel %vm2037, %v2005, %v1617
      %v2039 = vsel %vm2037, %v2006, %v1619
      %v2040 = vsel %vm2037, %v2007, %v1621
      %v2041 = vsel %vm2037, %v2008, %v1623
      %v2042 = vsel %vm2037, %v2009, %v1625
      %v2043 = vsel %vm2037, %v2010, %v1627
      %v2044 = vsel %vm2037, %v2011, %v1629
      %v2045 = vsel %vm2037, %v2012, %v1631
      %v2046 = vsel %vm2037, %v2013, %v1633
      %v2047 = vsel %vm2037, %v2014, %v1635
      %v2048 = vsel %vm2037, %v2015, %v1637
      %v2049 = vsel %vm2037, %v2016, %v1639
      %v2050 = vsel %vm2037, %v2017, %v1641
      %v2051 = vsel %vm2037, %v2018, %v1643
      %v2052 = vsel %vm2037, %v2019, %v1645
      %v2053 = vsel %vm2037, %v2020, %v1647
      %v2054 = vsel %vm2037, %v2021, %v1649
      %v2055 = vsel %vm2037, %v2022, %v1651
      %v2056 = vsel %vm2037, %v2023, %v1653
      %v2057 = vsel %vm2037, %v2024, %v1655
      %v2058 = vsel %vm2037, %v2025, %v1657
      %v2059 = vsel %vm2037, %v2026, %v1659
      %v2060 = vsel %vm2037, %v2027, %v1661
      %v2061 = vsel %vm2037, %v2028, %v1663
      %v2062 = vsel %vm2037, %v2029, %v1665
      %v2063 = vsel %vm2037, %v2030, %v1667
      %v2064 = vsel %vm2037, %v2031, %v1669
      %v2065 = vsel %vm2037, %v2032, %v1671
      %v2066 = vsel %vm2037, %v2033, %v1673
      %v2067 = vsel %vm2037, %v2034, %v1675
      %v2068 = vsel %vm2037, %v2035, %v1677
      %v2069 = vsel %vm2037, %v2036, %v1679
      %vm2070 = vcmask 261120
      %v2071 = vsel %vm2070, %v2038, %v1745
      %v2072 = vsel %vm2070, %v2039, %v1747
      %v2073 = vsel %vm2070, %v2040, %v1749
      %v2074 = vsel %vm2070, %v2041, %v1751
      %v2075 = vsel %vm2070, %v2042, %v1753
      %v2076 = vsel %vm2070, %v2043, %v1755
      %v2077 = vsel %vm2070, %v2044, %v1757
      %v2078 = vsel %vm2070, %v2045, %v1759
      %v2079 = vsel %vm2070, %v2046, %v1761
      %v2080 = vsel %vm2070, %v2047, %v1763
      %v2081 = vsel %vm2070, %v2048, %v1765
      %v2082 = vsel %vm2070, %v2049, %v1767
      %v2083 = vsel %vm2070, %v2050, %v1769
      %v2084 = vsel %vm2070, %v2051, %v1771
      %v2085 = vsel %vm2070, %v2052, %v1773
      %v2086 = vsel %vm2070, %v2053, %v1775
      %v2087 = vsel %vm2070, %v2054, %v1777
      %v2088 = vsel %vm2070, %v2055, %v1779
      %v2089 = vsel %vm2070, %v2056, %v1781
      %v2090 = vsel %vm2070, %v2057, %v1783
      %v2091 = vsel %vm2070, %v2058, %v1785
      %v2092 = vsel %vm2070, %v2059, %v1787
      %v2093 = vsel %vm2070, %v2060, %v1789
      %v2094 = vsel %vm2070, %v2061, %v1791
      %v2095 = vsel %vm2070, %v2062, %v1793
      %v2096 = vsel %vm2070, %v2063, %v1795
      %v2097 = vsel %vm2070, %v2064, %v1797
      %v2098 = vsel %vm2070, %v2065, %v1799
      %v2099 = vsel %vm2070, %v2066, %v1801
      %v2100 = vsel %vm2070, %v2067, %v1803
      %v2101 = vsel %vm2070, %v2068, %v1805
      %v2102 = vsel %vm2070, %v2069, %v1807
      %v2103 = vld [vmem:[%s1] sm:$0xff]
      %v2104 = vld [vmem:[%s1 + $0x8] sm:$0xff]
      %v2105 = vld [vmem:[%s1 + $0x10] sm:$0xff]
      %v2106 = vld [vmem:[%s1 + $0x18] sm:$0xff]
      %v2107 = vld [vmem:[%s1 + $0x20] sm:$0xf]
      %v2108 = vld [vmem:[%s2] sm:$0x1]
      %v2110 = vlaneseq
      %v2111 = vshrl.u32 %v2110, 7
      %v2112 = vsub.s32 0, %v2111
      %v2113 = vrot.slane %v2108, %v2112
      %vm2115 = vcmask 293888
      %v2117 = vsel %vm2115, %v2071, 0
      %v2120 = vsel %vm2115, %v2072, 0
      %v2123 = vsel %vm2115, %v2073, 0
      %v2126 = vsel %vm2115, %v2074, 0
      %v2129 = vsel %vm2115, %v2075, 0
      %v2132 = vsel %vm2115, %v2076, 0
      %v2135 = vsel %vm2115, %v2077, 0
      %v2138 = vsel %vm2115, %v2078, 0
      %v2141 = vsel %vm2115, %v2079, 0
      %v2144 = vsel %vm2115, %v2080, 0
      %v2147 = vsel %vm2115, %v2081, 0
      %v2150 = vsel %vm2115, %v2082, 0
      %v2153 = vsel %vm2115, %v2083, 0
      %v2156 = vsel %vm2115, %v2084, 0
      %v2159 = vsel %vm2115, %v2085, 0
      %v2162 = vsel %vm2115, %v2086, 0
      %v2165 = vsel %vm2115, %v2087, 0
      %v2168 = vsel %vm2115, %v2088, 0
      %v2171 = vsel %vm2115, %v2089, 0
      %v2174 = vsel %vm2115, %v2090, 0
      %v2177 = vsel %vm2115, %v2091, 0
      %v2180 = vsel %vm2115, %v2092, 0
      %v2183 = vsel %vm2115, %v2093, 0
      %v2186 = vsel %vm2115, %v2094, 0
      %v2189 = vsel %vm2115, %v2095, 0
      %v2192 = vsel %vm2115, %v2096, 0
      %v2195 = vsel %vm2115, %v2097, 0
      %v2198 = vsel %vm2115, %v2098, 0
      %v2201 = vsel %vm2115, %v2099, 0
      %v2204 = vsel %vm2115, %v2100, 0
      %v2207 = vsel %vm2115, %v2101, 0
      %v2210 = vsel %vm2115, %v2102, 0
      %vm2212 = vcmask 1043456
      %v2214 = vsel %vm2212, %v2107, 0
      %2216 = vmatprep.subr.mxu0 0.0
      %2217 = vmatpush1.msra.mxu0 %v2103
      %2218 = vmatprep.subr.mxu0 0.0
      %2219 = vmatpush1.msra.mxu0 %v2104
      %2220 = vmatprep.subr.mxu0 0.0
      %2221 = vmatpush1.msra.mxu0 %v2105
      %2222 = vmatprep.subr.mxu0 0.0
      %2223 = vmatpush1.msra.mxu0 %v2106
      %2224 = vmatprep.subr.mxu0 0.0
      %2225 = vmatpush1.msra.mxu0 %v2214
      %2226 = vmatprep.subr.mxu0 0.0
      %2227 = vmatpush1.msra.mxu0 0.0
      %2228 = vmatprep.subr.mxu0 0.0
      %2229 = vmatpush1.msra.mxu0 0.0
      %2230 = vmatprep.subr.mxu0 0.0
      %2231 = vmatpush1.msra.mxu0 0.0
      %2232 = vmatprep.subr.mxu0 0.0
      %2233 = vmatpush1.msra.mxu0 0.0
      %2234 = vmatprep.subr.mxu0 0.0
      %2235 = vmatpush1.msra.mxu0 0.0
      %2236 = vmatprep.subr.mxu0 0.0
      %2237 = vmatpush1.msra.mxu0 0.0
      %2238 = vmatprep.subr.mxu0 0.0
      %2239 = vmatpush1.msra.mxu0 0.0
      %2240 = vmatprep.subr.mxu0 0.0
      %2241 = vmatpush1.msra.mxu0 0.0
      %2242 = vmatprep.subr.mxu0 0.0
      %2243 = vmatpush1.msra.mxu0 0.0
      %2244 = vmatprep.subr.mxu0 0.0
      %2245 = vmatpush1.msra.mxu0 0.0
      %2246 = vmatprep.subr.mxu0 0.0
      %2247 = vmatpush1.msra.mxu0 0.0
      %2248 = vmatprep.subr.mxu0 0.0
      %2249 = vmatpush1.msra.mxu0 0.0
      %2250 = vmatprep.subr.mxu0 0.0
      %2251 = vmatpush1.msra.mxu0 0.0
      %2252 = vmatprep.subr.mxu0 0.0
      %2253 = vmatpush1.msra.mxu0 0.0
      %2254 = vmatprep.subr.mxu0 0.0
      %2255 = vmatpush1.msra.mxu0 0.0
      %2256 = vmatprep.subr.mxu0 0.0
      %2257 = vmatpush1.msra.mxu0 0.0
      %2258 = vmatprep.subr.mxu0 0.0
      %2259 = vmatpush1.msra.mxu0 0.0
      %2260 = vmatprep.subr.mxu0 0.0
      %2261 = vmatpush1.msra.mxu0 0.0
      %2262 = vmatprep.subr.mxu0 0.0
      %2263 = vmatpush1.msra.mxu0 0.0
      %2264 = vmatprep.subr.mxu0 0.0
      %2265 = vmatpush1.msra.mxu0 0.0
      %2266 = vmatprep.subr.mxu0 0.0
      %2267 = vmatpush1.msra.mxu0 0.0
      %2268 = vmatprep.subr.mxu0 0.0
      %2269 = vmatpush1.msra.mxu0 0.0
      %2270 = vmatprep.subr.mxu0 0.0
      %2271 = vmatpush1.msra.mxu0 0.0
      %2272 = vmatprep.subr.mxu0 0.0
      %2273 = vmatpush1.msra.mxu0 0.0
      %2274 = vmatprep.subr.mxu0 0.0
      %2275 = vmatpush1.msra.mxu0 0.0
      %2276 = vmatprep.subr.mxu0 0.0
      %2277 = vmatpush1.msra.mxu0 0.0
      %2278 = vmatprep.subr.mxu0 0.0
      %2279 = vmatpush1.msra.mxu0 0.0
      %2280 = vmatprep.mubr.f32.mxu0 0.0
      %2281 = vmatmul.mubr.f32.gmra.mrb[0].mxu0 %v2117
      %v2282 = vpop.f32.mrb[0].mxu0
      %v2283 = vadd.f32 %v2113, %v2282
      %v2284 = vpop.f32.mrb[0].mxu0
      %2285 = vmatprep.mubr.f32.mxu0 0.0
      %2286 = vmatmul.mubr.f32.gmra.mrb[0].mxu0 %v2120
      %v2287 = vpop.f32.mrb[0].mxu0
      %v2288 = vadd.f32 %v2113, %v2287
      %v2289 = vpop.f32.mrb[0].mxu0
      %2290 = vmatprep.mubr.f32.mxu0 0.0
      %2291 = vmatmul.mubr.f32.gmra.mrb[0].mxu0 %v2123
      %v2292 = vpop.f32.mrb[0].mxu0
      %v2293 = vadd.f32 %v2113, %v2292
      %v2294 = vpop.f32.mrb[0].mxu0
      %2295 = vmatprep.mubr.f32.mxu0 0.0
      %2296 = vmatmul.mubr.f32.gmra.mrb[0].mxu0 %v2126
      %v2297 = vpop.f32.mrb[0].mxu0
      %v2298 = vadd.f32 %v2113, %v2297
      %v2299 = vpop.f32.mrb[0].mxu0
      %2300 = vmatprep.mubr.f32.mxu0 0.0
      %2301 = vmatmul.mubr.f32.gmra.mrb[0].mxu0 %v2129
      %v2302 = vpop.f32.mrb[0].mxu0
      %v2303 = vadd.f32 %v2113, %v2302
      %v2304 = vpop.f32.mrb[0].mxu0
      %2305 = vmatprep.mubr.f32.mxu0 0.0
      %2306 = vmatmul.mubr.f32.gmra.mrb[0].mxu0 %v2132
      %v2307 = vpop.f32.mrb[0].mxu0
      %v2308 = vadd.f32 %v2113, %v2307
      %v2309 = vpop.f32.mrb[0].mxu0
      %2310 = vmatprep.mubr.f32.mxu0 0.0
      %2311 = vmatmul.mubr.f32.gmra.mrb[0].mxu0 %v2135
      %v2312 = vpop.f32.mrb[0].mxu0
      %v2313 = vadd.f32 %v2113, %v2312
      %v2314 = vpop.f32.mrb[0].mxu0
      %2315 = vmatprep.mubr.f32.mxu0 0.0
      %2316 = vmatmul.mubr.f32.gmra.mrb[0].mxu0 %v2138
      %v2317 = vpop.f32.mrb[0].mxu0
      %v2318 = vadd.f32 %v2113, %v2317
      %v2319 = vpop.f32.mrb[0].mxu0
      %2320 = vmatprep.mubr.f32.mxu0 0.0
      %2321 = vmatmul.mubr.f32.gmra.mrb[0].mxu0 %v2141
      %v2322 = vpop.f32.mrb[0].mxu0
      %v2323 = vadd.f32 %v2113, %v2322
      %v2324 = vpop.f32.mrb[0].mxu0
      %2325 = vmatprep.mubr.f32.mxu0 0.0
      %2326 = vmatmul.mubr.f32.gmra.mrb[0].mxu0 %v2144
      %v2327 = vpop.f32.mrb[0].mxu0
      %v2328 = vadd.f32 %v2113, %v2327
      %v2329 = vpop.f32.mrb[0].mxu0
      %2330 = vmatprep.mubr.f32.mxu0 0.0
      %2331 = vmatmul.mubr.f32.gmra.mrb[0].mxu0 %v2147
      %v2332 = vpop.f32.mrb[0].mxu0
      %v2333 = vadd.f32 %v2113, %v2332
      %v2334 = vpop.f32.mrb[0].mxu0
      %2335 = vmatprep.mubr.f32.mxu0 0.0
      %2336 = vmatmul.mubr.f32.gmra.mrb[0].mxu0 %v2150
      %v2337 = vpop.f32.mrb[0].mxu0
      %v2338 = vadd.f32 %v2113, %v2337
      %v2339 = vpop.f32.mrb[0].mxu0
      %2340 = vmatprep.mubr.f32.mxu0 0.0
      %2341 = vmatmul.mubr.f32.gmra.mrb[0].mxu0 %v2153
      %v2342 = vpop.f32.mrb[0].mxu0
      %v2343 = vadd.f32 %v2113, %v2342
      %v2344 = vpop.f32.mrb[0].mxu0
      %2345 = vmatprep.mubr.f32.mxu0 0.0
      %2346 = vmatmul.mubr.f32.gmra.mrb[0].mxu0 %v2156
      %v2347 = vpop.f32.mrb[0].mxu0
      %v2348 = vadd.f32 %v2113, %v2347
      %v2349 = vpop.f32.mrb[0].mxu0
      %2350 = vmatprep.mubr.f32.mxu0 0.0
      %2351 = vmatmul.mubr.f32.gmra.mrb[0].mxu0 %v2159
      %v2352 = vpop.f32.mrb[0].mxu0
      %v2353 = vadd.f32 %v2113, %v2352
      %v2354 = vpop.f32.mrb[0].mxu0
      %2355 = vmatprep.mubr.f32.mxu0 0.0
      %2356 = vmatmul.mubr.f32.gmra.mrb[0].mxu0 %v2162
      %v2357 = vpop.f32.mrb[0].mxu0
      %v2358 = vadd.f32 %v2113, %v2357
      %v2359 = vpop.f32.mrb[0].mxu0
      %2360 = vmatprep.mubr.f32.mxu0 0.0
      %2361 = vmatmul.mubr.f32.gmra.mrb[0].mxu0 %v2165
      %v2362 = vpop.f32.mrb[0].mxu0
      %v2363 = vadd.f32 %v2113, %v2362
      %v2364 = vpop.f32.mrb[0].mxu0
      %2365 = vmatprep.mubr.f32.mxu0 0.0
      %2366 = vmatmul.mubr.f32.gmra.mrb[0].mxu0 %v2168
      %v2367 = vpop.f32.mrb[0].mxu0
      %v2368 = vadd.f32 %v2113, %v2367
      %v2369 = vpop.f32.mrb[0].mxu0
      %2370 = vmatprep.mubr.f32.mxu0 0.0
      %2371 = vmatmul.mubr.f32.gmra.mrb[0].mxu0 %v2171
      %v2372 = vpop.f32.mrb[0].mxu0
      %v2373 = vadd.f32 %v2113, %v2372
      %v2374 = vpop.f32.mrb[0].mxu0
      %2375 = vmatprep.mubr.f32.mxu0 0.0
      %2376 = vmatmul.mubr.f32.gmra.mrb[0].mxu0 %v2174
      %v2377 = vpop.f32.mrb[0].mxu0
      %v2378 = vadd.f32 %v2113, %v2377
      %v2379 = vpop.f32.mrb[0].mxu0
      %2380 = vmatprep.mubr.f32.mxu0 0.0
      %2381 = vmatmul.mubr.f32.gmra.mrb[0].mxu0 %v2177
      %v2382 = vpop.f32.mrb[0].mxu0
      %v2383 = vadd.f32 %v2113, %v2382
      %v2384 = vpop.f32.mrb[0].mxu0
      %2385 = vmatprep.mubr.f32.mxu0 0.0
      %2386 = vmatmul.mubr.f32.gmra.mrb[0].mxu0 %v2180
      %v2387 = vpop.f32.mrb[0].mxu0
      %v2388 = vadd.f32 %v2113, %v2387
      %v2389 = vpop.f32.mrb[0].mxu0
      %2390 = vmatprep.mubr.f32.mxu0 0.0
      %2391 = vmatmul.mubr.f32.gmra.mrb[0].mxu0 %v2183
      %v2392 = vpop.f32.mrb[0].mxu0
      %v2393 = vadd.f32 %v2113, %v2392
      %v2394 = vpop.f32.mrb[0].mxu0
      %2395 = vmatprep.mubr.f32.mxu0 0.0
      %2396 = vmatmul.mubr.f32.gmra.mrb[0].mxu0 %v2186
      %v2397 = vpop.f32.mrb[0].mxu0
      %v2398 = vadd.f32 %v2113, %v2397
      %v2399 = vpop.f32.mrb[0].mxu0
      %2400 = vmatprep.mubr.f32.mxu0 0.0
      %2401 = vmatmul.mubr.f32.gmra.mrb[0].mxu0 %v2189
      %v2402 = vpop.f32.mrb[0].mxu0
      %v2403 = vadd.f32 %v2113, %v2402
      %v2404 = vpop.f32.mrb[0].mxu0
      %2405 = vmatprep.mubr.f32.mxu0 0.0
      %2406 = vmatmul.mubr.f32.gmra.mrb[0].mxu0 %v2192
      %v2407 = vpop.f32.mrb[0].mxu0
      %v2408 = vadd.f32 %v2113, %v2407
      %v2409 = vpop.f32.mrb[0].mxu0
      %2410 = vmatprep.mubr.f32.mxu0 0.0
      %2411 = vmatmul.mubr.f32.gmra.mrb[0].mxu0 %v2195
      %v2412 = vpop.f32.mrb[0].mxu0
      %v2413 = vadd.f32 %v2113, %v2412
      %v2414 = vpop.f32.mrb[0].mxu0
      %2415 = vmatprep.mubr.f32.mxu0 0.0
      %2416 = vmatmul.mubr.f32.gmra.mrb[0].mxu0 %v2198
      %v2417 = vpop.f32.mrb[0].mxu0
      %v2418 = vadd.f32 %v2113, %v2417
      %v2419 = vpop.f32.mrb[0].mxu0
      %2420 = vmatprep.mubr.f32.mxu0 0.0
      %2421 = vmatmul.mubr.f32.gmra.mrb[0].mxu0 %v2201
      %v2422 = vpop.f32.mrb[0].mxu0
      %v2423 = vadd.f32 %v2113, %v2422
      %v2424 = vpop.f32.mrb[0].mxu0
      %2425 = vmatprep.mubr.f32.mxu0 0.0
      %2426 = vmatmul.mubr.f32.gmra.mrb[0].mxu0 %v2204
      %v2427 = vpop.f32.mrb[0].mxu0
      %v2428 = vadd.f32 %v2113, %v2427
      %v2429 = vpop.f32.mrb[0].mxu0
      %2430 = vmatprep.mubr.f32.mxu0 0.0
      %2431 = vmatmul.mubr.f32.gmra.mrb[0].mxu0 %v2207
      %v2432 = vpop.f32.mrb[0].mxu0
      %v2433 = vadd.f32 %v2113, %v2432
      %v2434 = vpop.f32.mrb[0].mxu0
      %2435 = vmatprep.mubr.f32.mxu0 0.0
      %2436 = vmatmul.mubr.f32.gmra.mrb[0].mxu0 %v2210
      %v2437 = vpop.f32.mrb[0].mxu0
      %v2438 = vadd.f32 %v2113, %v2437
      %v2439 = vpop.f32.mrb[0].mxu0
      %2440 = vdwg.mxu0
      %2441 = vst.msk [vmem:[%s289] sm:$0xff] %vm438, %v2283
      %2442 = vst.msk [vmem:[%s289 + $0x8] sm:$0xff] %vm438, %v2288
      %2443 = vst.msk [vmem:[%s289 + $0x10] sm:$0xff] %vm438, %v2293
      %2444 = vst.msk [vmem:[%s289 + $0x18] sm:$0xff] %vm438, %v2298
      %2445 = vst.msk [vmem:[%s289 + $0x20] sm:$0xff] %vm438, %v2303
      %2446 = vst.msk [vmem:[%s289 + $0x28] sm:$0xff] %vm438, %v2308
      %2447 = vst.msk [vmem:[%s289 + $0x30] sm:$0xff] %vm438, %v2313
      %2448 = vst.msk [vmem:[%s289 + $0x38] sm:$0xff] %vm438, %v2318
      %2449 = vst.msk [vmem:[%s289 + $0x40] sm:$0xff] %vm438, %v2323
      %2450 = vst.msk [vmem:[%s289 + $0x48] sm:$0xff] %vm438, %v2328
      %2451 = vst.msk [vmem:[%s289 + $0x50] sm:$0xff] %vm438, %v2333
      %2452 = vst.msk [vmem:[%s289 + $0x58] sm:$0xff] %vm438, %v2338
      %2453 = vst.msk [vmem:[%s289 + $0x60] sm:$0xff] %vm438, %v2343
      %2454 = vst.msk [vmem:[%s289 + $0x68] sm:$0xff] %vm438, %v2348
      %2455 = vst.msk [vmem:[%s289 + $0x70] sm:$0xff] %vm438, %v2353
      %2456 = vst.msk [vmem:[%s289 + $0x78] sm:$0xff] %vm438, %v2358
      %2457 = vst.msk [vmem:[%s289 + $0x80] sm:$0xff] %vm438, %v2363
      %2458 = vst.msk [vmem:[%s289 + $0x88] sm:$0xff] %vm438, %v2368
      %2459 = vst.msk [vmem:[%s289 + $0x90] sm:$0xff] %vm438, %v2373
      %2460 = vst.msk [vmem:[%s289 + $0x98] sm:$0xff] %vm438, %v2378
      %2461 = vst.msk [vmem:[%s289 + $0xa0] sm:$0xff] %vm438, %v2383
      %2462 = vst.msk [vmem:[%s289 + $0xa8] sm:$0xff] %vm438, %v2388
      %2463 = vst.msk [vmem:[%s289 + $0xb0] sm:$0xff] %vm438, %v2393
      %2464 = vst.msk [vmem:[%s289 + $0xb8] sm:$0xff] %vm438, %v2398
      %2465 = vst.msk [vmem:[%s289 + $0xc0] sm:$0xff] %vm438, %v2403
      %2466 = vst.msk [vmem:[%s289 + $0xc8] sm:$0xff] %vm438, %v2408
      %2467 = vst.msk [vmem:[%s289 + $0xd0] sm:$0xff] %vm438, %v2413
      %2468 = vst.msk [vmem:[%s289 + $0xd8] sm:$0xff] %vm438, %v2418
      %2469 = vst.msk [vmem:[%s289 + $0xe0] sm:$0xff] %vm438, %v2423
      %2470 = vst.msk [vmem:[%s289 + $0xe8] sm:$0xff] %vm438, %v2428
      %2471 = vst.msk [vmem:[%s289 + $0xf0] sm:$0xff] %vm438, %v2433
      %2472 = vst.msk [vmem:[%s289 + $0xf8] sm:$0xff] %vm438, %v2438
      %v2473 = vsel %vm438, %v2283, 0.0
      %v2474 = vsel %vm438, %v2288, 0.0
      %v2475 = vadd.f32 %v2473, %v2474
      %v2476 = vsel %vm438, %v2293, 0.0
      %v2477 = vadd.f32 %v2475, %v2476
      %v2478 = vsel %vm438, %v2298, 0.0
      %v2479 = vadd.f32 %v2477, %v2478
      %v2480 = vsel %vm438, %v2303, 0.0
      %v2481 = vadd.f32 %v2479, %v2480
      %v2482 = vsel %vm438, %v2308, 0.0
      %v2483 = vadd.f32 %v2481, %v2482
      %v2484 = vsel %vm438, %v2313, 0.0
      %v2485 = vadd.f32 %v2483, %v2484
      %v2486 = vsel %vm438, %v2318, 0.0
      %v2487 = vadd.f32 %v2485, %v2486
      %v2488 = vsel %vm438, %v2323, 0.0
      %v2489 = vadd.f32 %v2487, %v2488
      %v2490 = vsel %vm438, %v2328, 0.0
      %v2491 = vadd.f32 %v2489, %v2490
      %v2492 = vsel %vm438, %v2333, 0.0
      %v2493 = vadd.f32 %v2491, %v2492
      %v2494 = vsel %vm438, %v2338, 0.0
      %v2495 = vadd.f32 %v2493, %v2494
      %v2496 = vsel %vm438, %v2343, 0.0
      %v2497 = vadd.f32 %v2495, %v2496
      %v2498 = vsel %vm438, %v2348, 0.0
      %v2499 = vadd.f32 %v2497, %v2498
      %v2500 = vsel %vm438, %v2353, 0.0
      %v2501 = vadd.f32 %v2499, %v2500
      %v2502 = vsel %vm438, %v2358, 0.0
      %v2503 = vadd.f32 %v2501, %v2502
      %v2504 = vsel %vm438, %v2363, 0.0
      %v2505 = vadd.f32 %v2503, %v2504
      %v2506 = vsel %vm438, %v2368, 0.0
      %v2507 = vadd.f32 %v2505, %v2506
      %v2508 = vsel %vm438, %v2373, 0.0
      %v2509 = vadd.f32 %v2507, %v2508
      %v2510 = vsel %vm438, %v2378, 0.0
      %v2511 = vadd.f32 %v2509, %v2510
      %v2512 = vsel %vm438, %v2383, 0.0
      %v2513 = vadd.f32 %v2511, %v2512
      %v2514 = vsel %vm438, %v2388, 0.0
      %v2515 = vadd.f32 %v2513, %v2514
      %v2516 = vsel %vm438, %v2393, 0.0
      %v2517 = vadd.f32 %v2515, %v2516
      %v2518 = vsel %vm438, %v2398, 0.0
      %v2519 = vadd.f32 %v2517, %v2518
      %v2520 = vsel %vm438, %v2403, 0.0
      %v2521 = vadd.f32 %v2519, %v2520
      %v2522 = vsel %vm438, %v2408, 0.0
      %v2523 = vadd.f32 %v2521, %v2522
      %v2524 = vsel %vm438, %v2413, 0.0
      %v2525 = vadd.f32 %v2523, %v2524
      %v2526 = vsel %vm438, %v2418, 0.0
      %v2527 = vadd.f32 %v2525, %v2526
      %v2528 = vsel %vm438, %v2423, 0.0
      %v2529 = vadd.f32 %v2527, %v2528
      %v2530 = vsel %vm438, %v2428, 0.0
      %v2531 = vadd.f32 %v2529, %v2530
      %v2532 = vsel %vm438, %v2433, 0.0
      %v2533 = vadd.f32 %v2531, %v2532
      %v2534 = vsel %vm438, %v2438, 0.0
      %v2535 = vadd.f32 %v2533, %v2534
      %v2536 = vrot.slane %v2535, 4
      %v2537 = vadd.f32 %v2535, %v2536
      %v2538 = vrot.slane %v2537, 2
      %v2539 = vadd.f32 %v2537, %v2538
      %v2540 = vrot.slane %v2539, 1
      %v2541 = vadd.f32 %v2539, %v2540
      %vm2542 = vcmask 24576
      %2543 = vst.msk [vmem:[%s292] sm:$0x1] %vm2542, %v2541
      %v2544 = vmul.f32 %v2283, %v2283
      %v2545 = vmul.f32 %v2288, %v2288
      %v2546 = vmul.f32 %v2293, %v2293
      %v2547 = vmul.f32 %v2298, %v2298
      %v2548 = vmul.f32 %v2303, %v2303
      %v2549 = vmul.f32 %v2308, %v2308
      %v2550 = vmul.f32 %v2313, %v2313
      %v2551 = vmul.f32 %v2318, %v2318
      %v2552 = vmul.f32 %v2323, %v2323
      %v2553 = vmul.f32 %v2328, %v2328
      %v2554 = vmul.f32 %v2333, %v2333
      %v2555 = vmul.f32 %v2338, %v2338
      %v2556 = vmul.f32 %v2343, %v2343
      %v2557 = vmul.f32 %v2348, %v2348
      %v2558 = vmul.f32 %v2353, %v2353
      %v2559 = vmul.f32 %v2358, %v2358
      %v2560 = vmul.f32 %v2363, %v2363
      %v2561 = vmul.f32 %v2368, %v2368
      %v2562 = vmul.f32 %v2373, %v2373
      %v2563 = vmul.f32 %v2378, %v2378
      %v2564 = vmul.f32 %v2383, %v2383
      %v2565 = vmul.f32 %v2388, %v2388
      %v2566 = vmul.f32 %v2393, %v2393
      %v2567 = vmul.f32 %v2398, %v2398
      %v2568 = vmul.f32 %v2403, %v2403
      %v2569 = vmul.f32 %v2408, %v2408
      %v2570 = vmul.f32 %v2413, %v2413
      %v2571 = vmul.f32 %v2418, %v2418
      %v2572 = vmul.f32 %v2423, %v2423
      %v2573 = vmul.f32 %v2428, %v2428
      %v2574 = vmul.f32 %v2433, %v2433
      %v2575 = vmul.f32 %v2438, %v2438
      %v2576 = vsel %vm438, %v2544, 0.0
      %v2577 = vsel %vm438, %v2545, 0.0
      %v2578 = vadd.f32 %v2576, %v2577
      %v2579 = vsel %vm438, %v2546, 0.0
      %v2580 = vadd.f32 %v2578, %v2579
      %v2581 = vsel %vm438, %v2547, 0.0
      %v2582 = vadd.f32 %v2580, %v2581
      %v2583 = vsel %vm438, %v2548, 0.0
      %v2584 = vadd.f32 %v2582, %v2583
      %v2585 = vsel %vm438, %v2549, 0.0
      %v2586 = vadd.f32 %v2584, %v2585
      %v2587 = vsel %vm438, %v2550, 0.0
      %v2588 = vadd.f32 %v2586, %v2587
      %v2589 = vsel %vm438, %v2551, 0.0
      %v2590 = vadd.f32 %v2588, %v2589
      %v2591 = vsel %vm438, %v2552, 0.0
      %v2592 = vadd.f32 %v2590, %v2591
      %v2593 = vsel %vm438, %v2553, 0.0
      %v2594 = vadd.f32 %v2592, %v2593
      %v2595 = vsel %vm438, %v2554, 0.0
      %v2596 = vadd.f32 %v2594, %v2595
      %v2597 = vsel %vm438, %v2555, 0.0
      %v2598 = vadd.f32 %v2596, %v2597
      %v2599 = vsel %vm438, %v2556, 0.0
      %v2600 = vadd.f32 %v2598, %v2599
      %v2601 = vsel %vm438, %v2557, 0.0
      %v2602 = vadd.f32 %v2600, %v2601
      %v2603 = vsel %vm438, %v2558, 0.0
      %v2604 = vadd.f32 %v2602, %v2603
      %v2605 = vsel %vm438, %v2559, 0.0
      %v2606 = vadd.f32 %v2604, %v2605
      %v2607 = vsel %vm438, %v2560, 0.0
      %v2608 = vadd.f32 %v2606, %v2607
      %v2609 = vsel %vm438, %v2561, 0.0
      %v2610 = vadd.f32 %v2608, %v2609
      %v2611 = vsel %vm438, %v2562, 0.0
      %v2612 = vadd.f32 %v2610, %v2611
      %v2613 = vsel %vm438, %v2563, 0.0
      %v2614 = vadd.f32 %v2612, %v2613
      %v2615 = vsel %vm438, %v2564, 0.0
      %v2616 = vadd.f32 %v2614, %v2615
      %v2617 = vsel %vm438, %v2565, 0.0
      %v2618 = vadd.f32 %v2616, %v2617
      %v2619 = vsel %vm438, %v2566, 0.0
      %v2620 = vadd.f32 %v2618, %v2619
      %v2621 = vsel %vm438, %v2567, 0.0
      %v2622 = vadd.f32 %v2620, %v2621
      %v2623 = vsel %vm438, %v2568, 0.0
      %v2624 = vadd.f32 %v2622, %v2623
      %v2625 = vsel %vm438, %v2569, 0.0
      %v2626 = vadd.f32 %v2624, %v2625
      %v2627 = vsel %vm438, %v2570, 0.0
      %v2628 = vadd.f32 %v2626, %v2627
      %v2629 = vsel %vm438, %v2571, 0.0
      %v2630 = vadd.f32 %v2628, %v2629
      %v2631 = vsel %vm438, %v2572, 0.0
      %v2632 = vadd.f32 %v2630, %v2631
      %v2633 = vsel %vm438, %v2573, 0.0
      %v2634 = vadd.f32 %v2632, %v2633
      %v2635 = vsel %vm438, %v2574, 0.0
      %v2636 = vadd.f32 %v2634, %v2635
      %v2637 = vsel %vm438, %v2575, 0.0
      %v2638 = vadd.f32 %v2636, %v2637
      %v2639 = vrot.slane %v2638, 4
      %v2640 = vadd.f32 %v2638, %v2639
      %v2641 = vrot.slane %v2640, 2
      %v2642 = vadd.f32 %v2640, %v2641
      %v2643 = vrot.slane %v2642, 1
      %v2644 = vadd.f32 %v2642, %v2643
      %2645 = vst.msk [vmem:[%s295] sm:$0x1] %vm2542, %v2644
      %p2646 = scmp.lt.s32.totalorder %s19, 1
      %s2647 = scalar_select %p2646, %s19, 1
      %s2648 = smul.addr %s2647, 32
      %s2649 = smul.addr %s2648, 8
      %s2650 = scalar_lea.vmem %s5, %s2649
      %p2651 = scmp.lt.s32.totalorder %s19, 1
      %s2652 = scalar_select %p2651, %s19, 1
      %s2653 = scalar_lea.vmem %s6, %s2652
      %p2654 = scmp.lt.s32.totalorder %s19, 1
      %s2655 = scalar_select %p2654, %s19, 1
      %s2656 = scalar_lea.vmem %s7, %s2655
      // Predicated region
      $region41: #{up_block_forward.6} parent=39 // pred_check
        %p2657 = pneg %p147
      $region42: #{up_block_forward.6} parent=39 // pred_check_branch
        %2659 = sbr.rel (%p2657) target = $region44
      $region43: #{up_block_forward.6} parent=39 // pred_region
        _
      $region44: #{up_block_forward.6} parent=39 // pred_fallthru
        _
      // Predicated region
      $region45: #{up_block_forward.6} parent=39 // pred_check
        %p2660 = pneg %p173
      $region46: #{up_block_forward.6} parent=39 // pred_check_branch
        %2662 = sbr.rel (%p2660) target = $region48
      $region47: #{up_block_forward.6} parent=39 // pred_region
        _
      $region48: #{up_block_forward.6} parent=39 // pred_fallthru
        _
      // Predicated region
      $region49: #{up_block_forward.6} parent=39 // pred_check
        %p2663 = pneg %p199
      $region50: #{up_block_forward.6} parent=39 // pred_check_branch
        %2665 = sbr.rel (%p2663) target = $region52
      $region51: #{up_block_forward.6} parent=39 // pred_region
        _
      $region52: #{up_block_forward.6} parent=39 // pred_fallthru
        _
    $region40: #{up_block_forward.6} parent=5 // pred_fallthru
      _
    %p2666 = scmp.le.s32.totalorder 2, %s14
    // Predicated region
    $region53: #{up_block_forward.6} parent=5 // pred_check
      %p2667 = pneg %p2666
    $region54: #{up_block_forward.6} parent=5 // pred_check_branch
      %2669 = sbr.rel (%p2667) target = $region56
    $region55: #{up_block_forward.6} parent=5 // pred_region
      %s2670 = ssub.s32 %s14, 2
      // Predicated region
      $region57: #{up_block_forward.6} parent=55 // pred_check
        %p2671 = pneg %p153
      $region58: #{up_block_forward.6} parent=55 // pred_check_branch
        %2673 = sbr.rel (%p2671) target = $region60
      $region59: #{up_block_forward.6} parent=55 // pred_region
        %p2674 = scmp.lt.s32.totalorder %s20, 1
        %s2675 = scalar_select %p2674, %s20, 1
        %s2676 = smul.addr %s2675, 32
        %s2677 = smul.addr %s2676, 8
        %s2678 = scalar_lea.vmem %s5, %s2677
      $region60: #{up_block_forward.6} parent=55 // pred_fallthru
        _
      // Predicated region
      $region61: #{up_block_forward.6} parent=55 // pred_check
        %p2679 = pneg %p179
      $region62: #{up_block_forward.6} parent=55 // pred_check_branch
        %2681 = sbr.rel (%p2679) target = $region64
      $region63: #{up_block_forward.6} parent=55 // pred_region
        %p2682 = scmp.lt.s32.totalorder %s20, 1
        %s2683 = scalar_select %p2682, %s20, 1
        %s2684 = scalar_lea.vmem %s6, %s2683
      $region64: #{up_block_forward.6} parent=55 // pred_fallthru
        _
      // Predicated region
      $region65: #{up_block_forward.6} parent=55 // pred_check
        %p2685 = pneg %p205
      $region66: #{up_block_forward.6} parent=55 // pred_check_branch
        %2687 = sbr.rel (%p2685) target = $region68
      $region67: #{up_block_forward.6} parent=55 // pred_region
        %p2688 = scmp.lt.s32.totalorder %s20, 1
        %s2689 = scalar_select %p2688, %s20, 1
        %s2690 = scalar_lea.vmem %s7, %s2689
      $region68: #{up_block_forward.6} parent=55 // pred_fallthru
        _
    $region56: #{up_block_forward.6} parent=5 // pred_fallthru
      _
  $region6: #{up_block_forward.6} parent=0 // loop_footer
    %s18 = sadd.s32 1, %s14
  $region7: #{up_block_forward.6} parent=0 // loop_footer_branch
    %13 = sbr.rel target = $region3
  $region8: #{up_block_forward.6} parent=0 // loop_exit
    _

</llo_original>
